<compile_context>
chip_gen: v7x
topology: tpu7x:2x2x1
jax: 0.10.0
libtpu: 0.0.40
codegen_flags: <defaults>
</compile_context>

<pallas_src>
import jax
import jax.numpy as jnp
from jax import lax
from jax.experimental import pallas as pl
from jax.experimental.pallas import tpu as pltpu

# small shapes consistent with the module: seq=8, embed=32, heads=4, batch=2
S, E, H = 8, 32, 4
DH = E // H
FLAT = S * E          # 256
HID = 2 * FLAT        # 512
EPS = 1e-5


def transformer_block_kernel(
    x_ref, t_ref,
    w_mod, b_mod,        # fused [ws1 | wh1 | ws2 | wh2] : (E, 4E), (1, 4E)  (+1 folded into bs*)
    w_qk, b_qk,          # fused [wq/sqrt(DH) | wk]      : (E, 2E), (1, 2E)
    w_vo, b_vo,          # per-head folded  wv_h @ wo_h  : (E, H*E), (1, H*E)
    bo,                  # attention output bias         : (1, E)
    w1, b1, w2, b2,      # MLP                           : (FLAT,HID),(1,HID),(HID,FLAT),(1,FLAT)
    o_ref,               # (Bblk, FLAT) lane-dense output
):
    x3 = x_ref[...]                        # (Bblk, S, E)
    t = t_ref[...]                         # (Bblk, E)
    bblk = x3.shape[0]
    m = bblk * S

    def layer_norm(h):                     # LN over embed dim, no affine
        mean = jnp.mean(h, axis=-1, keepdims=True)
        var = jnp.mean(jnp.square(h - mean), axis=-1, keepdims=True)
        return (h - mean) * lax.rsqrt(var + EPS)      # rsqrt -> EUP

    # ---- both TDLN modulations from a single fused matmul on t (hoisted) ----
    mod = jnp.dot(t, w_mod[...], preferred_element_type=jnp.float32) + b_mod[...]
    scale1 = mod[:, 0 * E:1 * E][:, None, :]       # (Bblk, 1, E); already 1+scale
    shift1 = mod[:, 1 * E:2 * E][:, None, :]
    scale2 = mod[:, 2 * E:3 * E][:, None, :]       # already 1+scale
    shift2 = mod[:, 3 * E:4 * E][:, None, :]

    # ---- TDLN 1 ----
    h1 = (layer_norm(x3) * scale1 + shift1).reshape(m, E)          # (M, E)

    # ---- multi-head self-attention ----
    # fused Q|K projection (Q already scaled by 1/sqrt(DH) host-side)
    qk = jnp.dot(h1, w_qk[...], preferred_element_type=jnp.float32) + b_qk[...]   # (M, 2E)
    # per-head V projection with Wo folded in host-side -> (M, H*E), MXU-friendly N=128
    vo = jnp.dot(h1, w_vo[...], preferred_element_type=jnp.float32) + b_vo[...]   # (M, H*E)

    attn = jnp.zeros((bblk, S, E), jnp.float32)
    for hd in range(H):                                # static unroll, H = 4
        qh = qk[:, hd * DH:(hd + 1) * DH].reshape(bblk, S, DH)
        kh = qk[:, E + hd * DH:E + (hd + 1) * DH].reshape(bblk, S, DH)
        vh = vo[:, hd * E:(hd + 1) * E].reshape(bblk, S, E)        # already @ Wo_h
        scores = jnp.einsum('bqd,bkd->bqk', qh, kh,
                            preferred_element_type=jnp.float32)    # scale pre-folded
        mmax = jnp.max(scores, axis=-1, keepdims=True)
        p = jnp.exp(scores - mmax)
        p = p * pl.reciprocal(jnp.sum(p, axis=-1, keepdims=True))  # exact (1e-4 parity)
        attn = attn + jnp.einsum('bqk,bke->bqe', p, vh,
                                 preferred_element_type=jnp.float32)
    attn = attn + bo[...]

    x1 = x3 + attn                         # residual 1 (skip), (Bblk, S, E)

    # ---- TDLN 2 ----
    h2 = layer_norm(x1) * scale2 + shift2

    # ---- MLP on the flattened (S*E) representation ----
    # NOTE: the two (Bblk,S,E)->(Bblk,256) reshapes are real lane relayouts; the
    # x1 one is unavoidable for the lane-dense residual/store, the h2 one feeds
    # the K=256 MLP matmul (multi-dim-contraction dot_general is not lowered by
    # Mosaic, so the explicit flatten is kept).
    h2f = h2.reshape(bblk, FLAT)
    hid = jnp.dot(h2f, w1[...], preferred_element_type=jnp.float32) + b1[...]
    hid = jnp.maximum(hid, 0.0)                               # ReLU
    out = jnp.dot(hid, w2[...], preferred_element_type=jnp.float32) + b2[...]

    # residual 2 (skip2) + lane-dense (Bblk, 256) store (full-width vst)
    o_ref[...] = out + x1.reshape(bblk, FLAT)


def _pick_block_batch(B, max_blk=256):
    """Largest valid batch block.

    Valid = divisor of B that is a multiple of 8 (sublane rule for the (bblk,E)
    / (bblk,FLAT) blocks) OR equal to B (full extent).  Prefer blocks that leave
    >= 2 grid steps so both v7x TensorCores get work under "parallel"; cap at
    max_blk so VMEM stays well inside v7x's 64 MiB / v5e's 16 MiB scoped budget.
    """
    cands = [d for d in range(1, B + 1) if B % d == 0 and (d % 8 == 0 or d == B)]
    capped = [d for d in cands if d <= max_blk] or [min(cands)]
    two_step = [d for d in capped if B // d >= 2]
    return max(two_step) if two_step else max(capped)


def pack_params(p):
    """One-time host-side weight packing + algebraic folding (call once)."""
    inv_sqrt_dh = 1.0 / (DH ** 0.5)
    # TDLN modulation: [ws1 | wh1 | ws2 | wh2]; +1 folded into the scale biases
    w_mod = jnp.concatenate([p["ws1"], p["wh1"], p["ws2"], p["wh2"]], axis=1)
    b_mod = jnp.concatenate([p["bs1"] + 1.0, p["bh1"],
                             p["bs2"] + 1.0, p["bh2"]], axis=1)
    # Q|K with 1/sqrt(DH) folded into Q
    w_qk = jnp.concatenate([p["wq"] * inv_sqrt_dh, p["wk"]], axis=1)
    b_qk = jnp.concatenate([p["bq"] * inv_sqrt_dh, p["bk"]], axis=1)
    # per-head V projection with Wo folded in:  v'_h = h @ (wv_h @ wo_h) + bv_h @ wo_h
    wvo, bvo = [], []
    for hd in range(H):
        wo_h = p["wo"][hd * DH:(hd + 1) * DH, :]               # (DH, E)
        wvo.append(p["wv"][:, hd * DH:(hd + 1) * DH] @ wo_h)   # (E, E)
        bvo.append(p["bv"][:, hd * DH:(hd + 1) * DH] @ wo_h)   # (1, E)
    w_vo = jnp.concatenate(wvo, axis=1)                        # (E, H*E)
    b_vo = jnp.concatenate(bvo, axis=1)                        # (1, H*E)
    return dict(w_mod=w_mod, b_mod=b_mod, w_qk=w_qk, b_qk=b_qk,
                w_vo=w_vo, b_vo=b_vo, bo=p["bo"],
                w1=p["w1"], b1=p["b1"], w2=p["w2"], b2=p["b2"])


_WEIGHT_ORDER = ("w_mod", "b_mod", "w_qk", "b_qk", "w_vo", "b_vo", "bo",
                 "w1", "b1", "w2", "b2")


def transformer_block(x, t, packed, block_batch=None):
    B = x.shape[0]
    bblk = _pick_block_batch(B) if block_batch is None else block_batch
    assert B % bblk == 0 and (bblk % 8 == 0 or bblk == B), (
        f"block_batch={bblk} must divide B={B} and be a multiple of 8 or == B")

    weights = [packed[k] for k in _WEIGHT_ORDER]

    def build(single_buffer_weights):
        # Constant-index weights gain nothing from double-buffering; single-buffer
        # them to halve their VMEM footprint (headroom for larger Bblk on v7x).
        wkw = ({"pipeline_mode": pl.Buffered(1)}
               if single_buffer_weights and hasattr(pl, "Buffered") else {})
        in_specs = (
            [pl.BlockSpec((bblk, S, E), lambda b: (b, 0, 0)),   # x : block of rows
             pl.BlockSpec((bblk, E), lambda b: (b, 0))]         # t : block of rows
            + [pl.BlockSpec(w.shape, lambda b: (0, 0), **wkw) for w in weights]
        )
        return pl.pallas_call(
            transformer_block_kernel,
            out_shape=jax.ShapeDtypeStruct((B, FLAT), jnp.float32),   # lane-dense
            grid_spec=pltpu.PrefetchScalarGridSpec(
                num_scalar_prefetch=0,
                grid=(B // bblk,),
                in_specs=in_specs,
                out_specs=pl.BlockSpec((bblk, FLAT), lambda b: (b, 0)),
            ),
            compiler_params=pltpu.CompilerParams(
                dimension_semantics=("parallel",),
                vmem_limit_bytes=32 * 1024 * 1024),   # safe on v5e/v6e/v7x
        )

    try:
        out_flat = build(True)(x, t, *weights)
    except Exception:
        # pipeline_mode=pl.Buffered(1) not supported on this jax/Mosaic version;
        # fall back to default double-buffered weights (correctness identical).
        out_flat = build(False)(x, t, *weights)
    return out_flat.reshape(B, S, E)


# ---------------- deterministic parameter init + pure-JAX reference -----------

def init_params(key):
    names_and_shapes = [
        ("ws1", (E, E)), ("wh1", (E, E)),
        ("wq", (E, E)), ("wk", (E, E)), ("wv", (E, E)), ("wo", (E, E)),
        ("ws2", (E, E)), ("wh2", (E, E)),
        ("w1", (FLAT, HID)), ("w2", (HID, FLAT)),
    ]
    bias_shapes = {
        "bs1": (1, E), "bh1": (1, E),
        "bq": (1, E), "bk": (1, E), "bv": (1, E), "bo": (1, E),
        "bs2": (1, E), "bh2": (1, E),
        "b1": (1, HID), "b2": (1, FLAT),
    }
    keys = jax.random.split(key, len(names_and_shapes) + len(bias_shapes))
    params = {}
    i = 0
    for name, shape in names_and_shapes:
        fan_in = shape[0]
        params[name] = (jax.random.normal(keys[i], shape, jnp.float32)
                        / jnp.sqrt(jnp.float32(fan_in)))
        i += 1
    for name, shape in bias_shapes.items():
        params[name] = 0.01 * jax.random.normal(keys[i], shape, jnp.float32)
        i += 1
    return params


def reference(x, t, p):
    def tdln(h, ws, bs, wh, bh):
        scale = t @ ws + bs          # (B, E)
        shift = t @ wh + bh
        mean = h.mean(-1, keepdims=True)
        var = ((h - mean) ** 2).mean(-1, keepdims=True)
        hn = (h - mean) / jnp.sqrt(var + EPS)
        return hn * (1.0 + scale[:, None, :]) + shift[:, None, :]

    B = x.shape[0]
    skip = x
    h = tdln(x, p["ws1"], p["bs1"], p["wh1"], p["bh1"])
    q = (h @ p["wq"] + p["bq"]).reshape(B, S, H, DH)
    k = (h @ p["wk"] + p["bk"]).reshape(B, S, H, DH)
    v = (h @ p["wv"] + p["bv"]).reshape(B, S, H, DH)
    scores = jnp.einsum("bqhd,bkhd->bhqk", q, k) / jnp.sqrt(jnp.float32(DH))
    attn = jax.nn.softmax(scores, axis=-1)
    o = jnp.einsum("bhqk,bkhd->bqhd", attn, v).reshape(B, S, E)
    o = o @ p["wo"] + p["bo"]
    x1 = o + skip
    skip2 = x1
    h2 = tdln(x1, p["ws2"], p["bs2"], p["wh2"], p["bh2"])
    flat = h2.reshape(B, FLAT)
    hid = jnp.maximum(flat @ p["w1"] + p["b1"], 0.0)
    out = (hid @ p["w2"] + p["b2"]).reshape(B, S, E)
    return out + skip2


if __name__ == "__main__":
    key = jax.random.PRNGKey(0)
    kx, kt, kp = jax.random.split(key, 3)
    B = 2
    x = jax.random.normal(kx, (B, S, E), jnp.float32)
    t = jax.random.normal(kt, (B, E), jnp.float32)
    params = init_params(kp)
    packed = pack_params(params)        # one-time host-side packing/folding

    out = jax.block_until_ready(transformer_block(x, t, packed))

    ref = reference(x, t, params)
    assert out.shape == (B, S, E)
    assert jnp.allclose(out, ref, rtol=1e-4, atol=1e-4), (
        f"max abs err = {jnp.max(jnp.abs(out - ref))}")

    print("KERNEL_OK")
</pallas_src>

<mosaic_0001>
module attributes {stable_mosaic.version = 11 : i64} {
  func.func @transformer_block_kernel(%arg0: i32, %arg1: memref<2x8x32xf32, #tpu.memory_space<vmem>>, %arg2: memref<2x32xf32, #tpu.memory_space<vmem>>, %arg3: memref<32x128xf32, #tpu.memory_space<vmem>>, %arg4: memref<1x128xf32, #tpu.memory_space<vmem>>, %arg5: memref<32x64xf32, #tpu.memory_space<vmem>>, %arg6: memref<1x64xf32, #tpu.memory_space<vmem>>, %arg7: memref<32x128xf32, #tpu.memory_space<vmem>>, %arg8: memref<1x128xf32, #tpu.memory_space<vmem>>, %arg9: memref<1x32xf32, #tpu.memory_space<vmem>>, %arg10: memref<256x512xf32, #tpu.memory_space<vmem>>, %arg11: memref<1x512xf32, #tpu.memory_space<vmem>>, %arg12: memref<512x256xf32, #tpu.memory_space<vmem>>, %arg13: memref<1x256xf32, #tpu.memory_space<vmem>>, %arg14: memref<2x256xf32, #tpu.memory_space<vmem>>) attributes {dimension_semantics = [#tpu.dimension_semantics<parallel>], iteration_bounds = array<i64: 1>, scalar_prefetch = 0 : i64, scratch_operands = 0 : i64, tpu.core_type = #tpu.core_type<tc>, window_params = [{transform_indices = @transform_0, window_bounds = array<i64: 2, 8, 32>}, {transform_indices = @transform_1, window_bounds = array<i64: 2, 32>}, {pipeline_mode = #tpu.pipeline_mode<synchronous>, transform_indices = @transform_2, window_bounds = array<i64: 32, 128>}, {pipeline_mode = #tpu.pipeline_mode<synchronous>, transform_indices = @transform_3, window_bounds = array<i64: 1, 128>}, {pipeline_mode = #tpu.pipeline_mode<synchronous>, transform_indices = @transform_4, window_bounds = array<i64: 32, 64>}, {pipeline_mode = #tpu.pipeline_mode<synchronous>, transform_indices = @transform_5, window_bounds = array<i64: 1, 64>}, {pipeline_mode = #tpu.pipeline_mode<synchronous>, transform_indices = @transform_6, window_bounds = array<i64: 32, 128>}, {pipeline_mode = #tpu.pipeline_mode<synchronous>, transform_indices = @transform_7, window_bounds = array<i64: 1, 128>}, {pipeline_mode = #tpu.pipeline_mode<synchronous>, transform_indices = @transform_8, window_bounds = array<i64: 1, 32>}, {pipeline_mode = #tpu.pipeline_mode<synchronous>, transform_indices = @transform_9, window_bounds = array<i64: 256, 512>}, {pipeline_mode = #tpu.pipeline_mode<synchronous>, transform_indices = @transform_10, window_bounds = array<i64: 1, 512>}, {pipeline_mode = #tpu.pipeline_mode<synchronous>, transform_indices = @transform_11, window_bounds = array<i64: 512, 256>}, {pipeline_mode = #tpu.pipeline_mode<synchronous>, transform_indices = @transform_12, window_bounds = array<i64: 1, 256>}, {transform_indices = @transform_13, window_bounds = array<i64: 2, 256>}]} {
    %c0 = arith.constant 0 : index
    %c0_0 = arith.constant 0 : index
    %c0_1 = arith.constant 0 : index
    %0 = vector.load %arg1[%c0, %c0_0, %c0_1] : memref<2x8x32xf32, #tpu.memory_space<vmem>>, vector<2x8x32xf32>
    %c0_2 = arith.constant 0 : index
    %c0_3 = arith.constant 0 : index
    %1 = vector.load %arg2[%c0_2, %c0_3] : memref<2x32xf32, #tpu.memory_space<vmem>>, vector<2x32xf32>
    %c0_4 = arith.constant 0 : index
    %c0_5 = arith.constant 0 : index
    %2 = vector.load %arg3[%c0_4, %c0_5] : memref<32x128xf32, #tpu.memory_space<vmem>>, vector<32x128xf32>
    %cst = arith.constant dense<0.000000e+00> : vector<2x128xf32>
    %3 = tpu.matmul %1, %2, %cst {dimension_numbers = #tpu.dot_dimension_numbers<[1], [0], [0], [1], [0, 0, 1, 1], [], []>} : vector<2x32xf32>, vector<32x128xf32>, vector<2x128xf32> -> vector<2x128xf32>
    %c0_6 = arith.constant 0 : index
    %c0_7 = arith.constant 0 : index
    %4 = vector.load %arg4[%c0_6, %c0_7] : memref<1x128xf32, #tpu.memory_space<vmem>>, vector<1x128xf32>
    %5 = vector.broadcast %4 : vector<1x128xf32> to vector<2x128xf32>
    %6 = arith.addf %3, %5 : vector<2x128xf32>
    %7 = vector.extract_strided_slice %6 {offsets = [0, 0], sizes = [2, 32], strides = [1, 1]} : vector<2x128xf32> to vector<2x32xf32>
    %8 = vector.shape_cast %7 : vector<2x32xf32> to vector<2x1x32xf32>
    %9 = vector.extract_strided_slice %6 {offsets = [0, 32], sizes = [2, 32], strides = [1, 1]} : vector<2x128xf32> to vector<2x32xf32>
    %10 = vector.shape_cast %9 : vector<2x32xf32> to vector<2x1x32xf32>
    %11 = vector.extract_strided_slice %6 {offsets = [0, 64], sizes = [2, 32], strides = [1, 1]} : vector<2x128xf32> to vector<2x32xf32>
    %12 = vector.shape_cast %11 : vector<2x32xf32> to vector<2x1x32xf32>
    %13 = vector.extract_strided_slice %6 {offsets = [0, 96], sizes = [2, 32], strides = [1, 1]} : vector<2x128xf32> to vector<2x32xf32>
    %14 = vector.shape_cast %13 : vector<2x32xf32> to vector<2x1x32xf32>
    %cst_8 = arith.constant dense<0.000000e+00> : vector<2x8xf32>
    %15 = vector.multi_reduction <add>, %0, %cst_8 [2] : vector<2x8x32xf32> to vector<2x8xf32>
    %16 = vector.shape_cast %15 : vector<2x8xf32> to vector<2x8x1xf32>
    %cst_9 = arith.constant 3.200000e+01 : f32
    %17 = vector.broadcast %cst_9 : f32 to vector<2x8x1xf32>
    %18 = arith.divf %16, %17 : vector<2x8x1xf32>
    %19 = vector.broadcast %18 : vector<2x8x1xf32> to vector<2x8x32xf32>
    %20 = arith.subf %0, %19 : vector<2x8x32xf32>
    %21 = arith.mulf %20, %20 : vector<2x8x32xf32>
    %cst_10 = arith.constant dense<0.000000e+00> : vector<2x8xf32>
    %22 = vector.multi_reduction <add>, %21, %cst_10 [2] : vector<2x8x32xf32> to vector<2x8xf32>
    %23 = vector.shape_cast %22 : vector<2x8xf32> to vector<2x8x1xf32>
    %cst_11 = arith.constant 3.200000e+01 : f32
    %24 = vector.broadcast %cst_11 : f32 to vector<2x8x1xf32>
    %25 = arith.divf %23, %24 : vector<2x8x1xf32>
    %26 = vector.broadcast %18 : vector<2x8x1xf32> to vector<2x8x32xf32>
    %27 = arith.subf %0, %26 : vector<2x8x32xf32>
    %cst_12 = arith.constant 9.99999974E-6 : f32
    %28 = vector.broadcast %cst_12 : f32 to vector<2x8x1xf32>
    %29 = arith.addf %25, %28 : vector<2x8x1xf32>
    %30 = math.rsqrt %29 : vector<2x8x1xf32>
    %31 = vector.broadcast %30 : vector<2x8x1xf32> to vector<2x8x32xf32>
    %32 = arith.mulf %27, %31 : vector<2x8x32xf32>
    %33 = vector.broadcast %8 : vector<2x1x32xf32> to vector<2x8x32xf32>
    %34 = arith.mulf %32, %33 : vector<2x8x32xf32>
    %35 = vector.broadcast %10 : vector<2x1x32xf32> to vector<2x8x32xf32>
    %36 = arith.addf %34, %35 : vector<2x8x32xf32>
    %37 = vector.shape_cast %36 : vector<2x8x32xf32> to vector<16x32xf32>
    %c0_13 = arith.constant 0 : index
    %c0_14 = arith.constant 0 : index
    %38 = vector.load %arg5[%c0_13, %c0_14] : memref<32x64xf32, #tpu.memory_space<vmem>>, vector<32x64xf32>
    %cst_15 = arith.constant dense<0.000000e+00> : vector<16x64xf32>
    %39 = tpu.matmul %37, %38, %cst_15 {dimension_numbers = #tpu.dot_dimension_numbers<[1], [0], [0], [1], [0, 0, 1, 1], [], []>} : vector<16x32xf32>, vector<32x64xf32>, vector<16x64xf32> -> vector<16x64xf32>
    %c0_16 = arith.constant 0 : index
    %c0_17 = arith.constant 0 : index
    %40 = vector.load %arg6[%c0_16, %c0_17] : memref<1x64xf32, #tpu.memory_space<vmem>>, vector<1x64xf32>
    %41 = vector.broadcast %40 : vector<1x64xf32> to vector<16x64xf32>
    %42 = arith.addf %39, %41 : vector<16x64xf32>
    %c0_18 = arith.constant 0 : index
    %c0_19 = arith.constant 0 : index
    %43 = vector.load %arg7[%c0_18, %c0_19] : memref<32x128xf32, #tpu.memory_space<vmem>>, vector<32x128xf32>
    %cst_20 = arith.constant dense<0.000000e+00> : vector<16x128xf32>
    %44 = tpu.matmul %37, %43, %cst_20 {dimension_numbers = #tpu.dot_dimension_numbers<[1], [0], [0], [1], [0, 0, 1, 1], [], []>} : vector<16x32xf32>, vector<32x128xf32>, vector<16x128xf32> -> vector<16x128xf32>
    %c0_21 = arith.constant 0 : index
    %c0_22 = arith.constant 0 : index
    %45 = vector.load %arg8[%c0_21, %c0_22] : memref<1x128xf32, #tpu.memory_space<vmem>>, vector<1x128xf32>
    %46 = vector.broadcast %45 : vector<1x128xf32> to vector<16x128xf32>
    %47 = arith.addf %44, %46 : vector<16x128xf32>
    %cst_23 = arith.constant 0.000000e+00 : f32
    %48 = vector.broadcast %cst_23 : f32 to vector<2x8x32xf32>
    %49 = vector.extract_strided_slice %42 {offsets = [0, 0], sizes = [16, 8], strides = [1, 1]} : vector<16x64xf32> to vector<16x8xf32>
    %50 = vector.shape_cast %49 : vector<16x8xf32> to vector<2x8x8xf32>
    %51 = vector.extract_strided_slice %42 {offsets = [0, 32], sizes = [16, 8], strides = [1, 1]} : vector<16x64xf32> to vector<16x8xf32>
    %52 = vector.shape_cast %51 : vector<16x8xf32> to vector<2x8x8xf32>
    %53 = vector.extract_strided_slice %47 {offsets = [0, 0], sizes = [16, 32], strides = [1, 1]} : vector<16x128xf32> to vector<16x32xf32>
    %54 = vector.shape_cast %53 : vector<16x32xf32> to vector<2x8x32xf32>
    "tpu.trace_start"() <{level = 10 : i32, message = "bqd,bkd->bqk"}> : () -> ()
    %cst_24 = arith.constant dense<0.000000e+00> : vector<2x8x8xf32>
    %55 = tpu.matmul %50, %52, %cst_24 {dimension_numbers = #tpu.dot_dimension_numbers<[2], [2], [1], [1], [0, 0, 0, 1, 1, 1], [0], [0]>} : vector<2x8x8xf32>, vector<2x8x8xf32>, vector<2x8x8xf32> -> vector<2x8x8xf32>
    "tpu.trace_stop"() : () -> ()
    %cst_25 = arith.constant dense<0xFF800000> : vector<2x8xf32>
    %56 = vector.multi_reduction <maximumf>, %55, %cst_25 [2] : vector<2x8x8xf32> to vector<2x8xf32>
    %57 = vector.shape_cast %56 : vector<2x8xf32> to vector<2x8x1xf32>
    %58 = vector.broadcast %57 : vector<2x8x1xf32> to vector<2x8x8xf32>
    %59 = arith.subf %55, %58 : vector<2x8x8xf32>
    %60 = math.exp %59 : vector<2x8x8xf32>
    %cst_26 = arith.constant dense<0.000000e+00> : vector<2x8xf32>
    %61 = vector.multi_reduction <add>, %60, %cst_26 [2] : vector<2x8x8xf32> to vector<2x8xf32>
    %62 = vector.shape_cast %61 : vector<2x8xf32> to vector<2x8x1xf32>
    %63 = tpu.reciprocal %62 : vector<2x8x1xf32> -> vector<2x8x1xf32>
    %64 = vector.broadcast %63 : vector<2x8x1xf32> to vector<2x8x8xf32>
    %65 = arith.mulf %60, %64 : vector<2x8x8xf32>
    "tpu.trace_start"() <{level = 10 : i32, message = "bqk,bke->bqe"}> : () -> ()
    %cst_27 = arith.constant dense<0.000000e+00> : vector<2x8x32xf32>
    %66 = tpu.matmul %65, %54, %cst_27 {dimension_numbers = #tpu.dot_dimension_numbers<[2], [1], [1], [2], [0, 0, 0, 1, 1, 2], [0], [0]>} : vector<2x8x8xf32>, vector<2x8x32xf32>, vector<2x8x32xf32> -> vector<2x8x32xf32>
    "tpu.trace_stop"() : () -> ()
    %67 = arith.addf %48, %66 : vector<2x8x32xf32>
    %68 = vector.extract_strided_slice %42 {offsets = [0, 8], sizes = [16, 8], strides = [1, 1]} : vector<16x64xf32> to vector<16x8xf32>
    %69 = vector.shape_cast %68 : vector<16x8xf32> to vector<2x8x8xf32>
    %70 = vector.extract_strided_slice %42 {offsets = [0, 40], sizes = [16, 8], strides = [1, 1]} : vector<16x64xf32> to vector<16x8xf32>
    %71 = vector.shape_cast %70 : vector<16x8xf32> to vector<2x8x8xf32>
    %72 = vector.extract_strided_slice %47 {offsets = [0, 32], sizes = [16, 32], strides = [1, 1]} : vector<16x128xf32> to vector<16x32xf32>
    %73 = vector.shape_cast %72 : vector<16x32xf32> to vector<2x8x32xf32>
    "tpu.trace_start"() <{level = 10 : i32, message = "bqd,bkd->bqk"}> : () -> ()
    %cst_28 = arith.constant dense<0.000000e+00> : vector<2x8x8xf32>
    %74 = tpu.matmul %69, %71, %cst_28 {dimension_numbers = #tpu.dot_dimension_numbers<[2], [2], [1], [1], [0, 0, 0, 1, 1, 1], [0], [0]>} : vector<2x8x8xf32>, vector<2x8x8xf32>, vector<2x8x8xf32> -> vector<2x8x8xf32>
    "tpu.trace_stop"() : () -> ()
    %cst_29 = arith.constant dense<0xFF800000> : vector<2x8xf32>
    %75 = vector.multi_reduction <maximumf>, %74, %cst_29 [2] : vector<2x8x8xf32> to vector<2x8xf32>
    %76 = vector.shape_cast %75 : vector<2x8xf32> to vector<2x8x1xf32>
    %77 = vector.broadcast %76 : vector<2x8x1xf32> to vector<2x8x8xf32>
    %78 = arith.subf %74, %77 : vector<2x8x8xf32>
    %79 = math.exp %78 : vector<2x8x8xf32>
    %cst_30 = arith.constant dense<0.000000e+00> : vector<2x8xf32>
    %80 = vector.multi_reduction <add>, %79, %cst_30 [2] : vector<2x8x8xf32> to vector<2x8xf32>
    %81 = vector.shape_cast %80 : vector<2x8xf32> to vector<2x8x1xf32>
    %82 = tpu.reciprocal %81 : vector<2x8x1xf32> -> vector<2x8x1xf32>
    %83 = vector.broadcast %82 : vector<2x8x1xf32> to vector<2x8x8xf32>
    %84 = arith.mulf %79, %83 : vector<2x8x8xf32>
    "tpu.trace_start"() <{level = 10 : i32, message = "bqk,bke->bqe"}> : () -> ()
    %cst_31 = arith.constant dense<0.000000e+00> : vector<2x8x32xf32>
    %85 = tpu.matmul %84, %73, %cst_31 {dimension_numbers = #tpu.dot_dimension_numbers<[2], [1], [1], [2], [0, 0, 0, 1, 1, 2], [0], [0]>} : vector<2x8x8xf32>, vector<2x8x32xf32>, vector<2x8x32xf32> -> vector<2x8x32xf32>
    "tpu.trace_stop"() : () -> ()
    %86 = arith.addf %67, %85 : vector<2x8x32xf32>
    %87 = vector.extract_strided_slice %42 {offsets = [0, 16], sizes = [16, 8], strides = [1, 1]} : vector<16x64xf32> to vector<16x8xf32>
    %88 = vector.shape_cast %87 : vector<16x8xf32> to vector<2x8x8xf32>
    %89 = vector.extract_strided_slice %42 {offsets = [0, 48], sizes = [16, 8], strides = [1, 1]} : vector<16x64xf32> to vector<16x8xf32>
    %90 = vector.shape_cast %89 : vector<16x8xf32> to vector<2x8x8xf32>
    %91 = vector.extract_strided_slice %47 {offsets = [0, 64], sizes = [16, 32], strides = [1, 1]} : vector<16x128xf32> to vector<16x32xf32>
    %92 = vector.shape_cast %91 : vector<16x32xf32> to vector<2x8x32xf32>
    "tpu.trace_start"() <{level = 10 : i32, message = "bqd,bkd->bqk"}> : () -> ()
    %cst_32 = arith.constant dense<0.000000e+00> : vector<2x8x8xf32>
    %93 = tpu.matmul %88, %90, %cst_32 {dimension_numbers = #tpu.dot_dimension_numbers<[2], [2], [1], [1], [0, 0, 0, 1, 1, 1], [0], [0]>} : vector<2x8x8xf32>, vector<2x8x8xf32>, vector<2x8x8xf32> -> vector<2x8x8xf32>
    "tpu.trace_stop"() : () -> ()
    %cst_33 = arith.constant dense<0xFF800000> : vector<2x8xf32>
    %94 = vector.multi_reduction <maximumf>, %93, %cst_33 [2] : vector<2x8x8xf32> to vector<2x8xf32>
    %95 = vector.shape_cast %94 : vector<2x8xf32> to vector<2x8x1xf32>
    %96 = vector.broadcast %95 : vector<2x8x1xf32> to vector<2x8x8xf32>
    %97 = arith.subf %93, %96 : vector<2x8x8xf32>
    %98 = math.exp %97 : vector<2x8x8xf32>
    %cst_34 = arith.constant dense<0.000000e+00> : vector<2x8xf32>
    %99 = vector.multi_reduction <add>, %98, %cst_34 [2] : vector<2x8x8xf32> to vector<2x8xf32>
    %100 = vector.shape_cast %99 : vector<2x8xf32> to vector<2x8x1xf32>
    %101 = tpu.reciprocal %100 : vector<2x8x1xf32> -> vector<2x8x1xf32>
    %102 = vector.broadcast %101 : vector<2x8x1xf32> to vector<2x8x8xf32>
    %103 = arith.mulf %98, %102 : vector<2x8x8xf32>
    "tpu.trace_start"() <{level = 10 : i32, message = "bqk,bke->bqe"}> : () -> ()
    %cst_35 = arith.constant dense<0.000000e+00> : vector<2x8x32xf32>
    %104 = tpu.matmul %103, %92, %cst_35 {dimension_numbers = #tpu.dot_dimension_numbers<[2], [1], [1], [2], [0, 0, 0, 1, 1, 2], [0], [0]>} : vector<2x8x8xf32>, vector<2x8x32xf32>, vector<2x8x32xf32> -> vector<2x8x32xf32>
    "tpu.trace_stop"() : () -> ()
    %105 = arith.addf %86, %104 : vector<2x8x32xf32>
    %106 = vector.extract_strided_slice %42 {offsets = [0, 24], sizes = [16, 8], strides = [1, 1]} : vector<16x64xf32> to vector<16x8xf32>
    %107 = vector.shape_cast %106 : vector<16x8xf32> to vector<2x8x8xf32>
    %108 = vector.extract_strided_slice %42 {offsets = [0, 56], sizes = [16, 8], strides = [1, 1]} : vector<16x64xf32> to vector<16x8xf32>
    %109 = vector.shape_cast %108 : vector<16x8xf32> to vector<2x8x8xf32>
    %110 = vector.extract_strided_slice %47 {offsets = [0, 96], sizes = [16, 32], strides = [1, 1]} : vector<16x128xf32> to vector<16x32xf32>
    %111 = vector.shape_cast %110 : vector<16x32xf32> to vector<2x8x32xf32>
    "tpu.trace_start"() <{level = 10 : i32, message = "bqd,bkd->bqk"}> : () -> ()
    %cst_36 = arith.constant dense<0.000000e+00> : vector<2x8x8xf32>
    %112 = tpu.matmul %107, %109, %cst_36 {dimension_numbers = #tpu.dot_dimension_numbers<[2], [2], [1], [1], [0, 0, 0, 1, 1, 1], [0], [0]>} : vector<2x8x8xf32>, vector<2x8x8xf32>, vector<2x8x8xf32> -> vector<2x8x8xf32>
    "tpu.trace_stop"() : () -> ()
    %cst_37 = arith.constant dense<0xFF800000> : vector<2x8xf32>
    %113 = vector.multi_reduction <maximumf>, %112, %cst_37 [2] : vector<2x8x8xf32> to vector<2x8xf32>
    %114 = vector.shape_cast %113 : vector<2x8xf32> to vector<2x8x1xf32>
    %115 = vector.broadcast %114 : vector<2x8x1xf32> to vector<2x8x8xf32>
    %116 = arith.subf %112, %115 : vector<2x8x8xf32>
    %117 = math.exp %116 : vector<2x8x8xf32>
    %cst_38 = arith.constant dense<0.000000e+00> : vector<2x8xf32>
    %118 = vector.multi_reduction <add>, %117, %cst_38 [2] : vector<2x8x8xf32> to vector<2x8xf32>
    %119 = vector.shape_cast %118 : vector<2x8xf32> to vector<2x8x1xf32>
    %120 = tpu.reciprocal %119 : vector<2x8x1xf32> -> vector<2x8x1xf32>
    %121 = vector.broadcast %120 : vector<2x8x1xf32> to vector<2x8x8xf32>
    %122 = arith.mulf %117, %121 : vector<2x8x8xf32>
    "tpu.trace_start"() <{level = 10 : i32, message = "bqk,bke->bqe"}> : () -> ()
    %cst_39 = arith.constant dense<0.000000e+00> : vector<2x8x32xf32>
    %123 = tpu.matmul %122, %111, %cst_39 {dimension_numbers = #tpu.dot_dimension_numbers<[2], [1], [1], [2], [0, 0, 0, 1, 1, 2], [0], [0]>} : vector<2x8x8xf32>, vector<2x8x32xf32>, vector<2x8x32xf32> -> vector<2x8x32xf32>
    "tpu.trace_stop"() : () -> ()
    %124 = arith.addf %105, %123 : vector<2x8x32xf32>
    %c0_40 = arith.constant 0 : index
    %c0_41 = arith.constant 0 : index
    %125 = vector.load %arg9[%c0_40, %c0_41] : memref<1x32xf32, #tpu.memory_space<vmem>>, vector<1x32xf32>
    %126 = vector.shape_cast %125 : vector<1x32xf32> to vector<1x1x32xf32>
    %127 = vector.broadcast %126 : vector<1x1x32xf32> to vector<2x8x32xf32>
    %128 = arith.addf %124, %127 : vector<2x8x32xf32>
    %129 = arith.addf %0, %128 : vector<2x8x32xf32>
    %cst_42 = arith.constant dense<0.000000e+00> : vector<2x8xf32>
    %130 = vector.multi_reduction <add>, %129, %cst_42 [2] : vector<2x8x32xf32> to vector<2x8xf32>
    %131 = vector.shape_cast %130 : vector<2x8xf32> to vector<2x8x1xf32>
    %cst_43 = arith.constant 3.200000e+01 : f32
    %132 = vector.broadcast %cst_43 : f32 to vector<2x8x1xf32>
    %133 = arith.divf %131, %132 : vector<2x8x1xf32>
    %134 = vector.broadcast %133 : vector<2x8x1xf32> to vector<2x8x32xf32>
    %135 = arith.subf %129, %134 : vector<2x8x32xf32>
    %136 = arith.mulf %135, %135 : vector<2x8x32xf32>
    %cst_44 = arith.constant dense<0.000000e+00> : vector<2x8xf32>
    %137 = vector.multi_reduction <add>, %136, %cst_44 [2] : vector<2x8x32xf32> to vector<2x8xf32>
    %138 = vector.shape_cast %137 : vector<2x8xf32> to vector<2x8x1xf32>
    %cst_45 = arith.constant 3.200000e+01 : f32
    %139 = vector.broadcast %cst_45 : f32 to vector<2x8x1xf32>
    %140 = arith.divf %138, %139 : vector<2x8x1xf32>
    %141 = vector.broadcast %133 : vector<2x8x1xf32> to vector<2x8x32xf32>
    %142 = arith.subf %129, %141 : vector<2x8x32xf32>
    %cst_46 = arith.constant 9.99999974E-6 : f32
    %143 = vector.broadcast %cst_46 : f32 to vector<2x8x1xf32>
    %144 = arith.addf %140, %143 : vector<2x8x1xf32>
    %145 = math.rsqrt %144 : vector<2x8x1xf32>
    %146 = vector.broadcast %145 : vector<2x8x1xf32> to vector<2x8x32xf32>
    %147 = arith.mulf %142, %146 : vector<2x8x32xf32>
    %148 = vector.broadcast %12 : vector<2x1x32xf32> to vector<2x8x32xf32>
    %149 = arith.mulf %147, %148 : vector<2x8x32xf32>
    %150 = vector.broadcast %14 : vector<2x1x32xf32> to vector<2x8x32xf32>
    %151 = arith.addf %149, %150 : vector<2x8x32xf32>
    %152 = vector.shape_cast %151 : vector<2x8x32xf32> to vector<2x256xf32>
    %c0_47 = arith.constant 0 : index
    %c0_48 = arith.constant 0 : index
    %153 = vector.load %arg10[%c0_47, %c0_48] : memref<256x512xf32, #tpu.memory_space<vmem>>, vector<256x512xf32>
    %cst_49 = arith.constant dense<0.000000e+00> : vector<2x512xf32>
    %154 = tpu.matmul %152, %153, %cst_49 {dimension_numbers = #tpu.dot_dimension_numbers<[1], [0], [0], [1], [0, 0, 1, 1], [], []>} : vector<2x256xf32>, vector<256x512xf32>, vector<2x512xf32> -> vector<2x512xf32>
    %c0_50 = arith.constant 0 : index
    %c0_51 = arith.constant 0 : index
    %155 = vector.load %arg11[%c0_50, %c0_51] : memref<1x512xf32, #tpu.memory_space<vmem>>, vector<1x512xf32>
    %156 = vector.broadcast %155 : vector<1x512xf32> to vector<2x512xf32>
    %157 = arith.addf %154, %156 : vector<2x512xf32>
    %cst_52 = arith.constant 0.000000e+00 : f32
    %158 = vector.broadcast %cst_52 : f32 to vector<2x512xf32>
    %159 = arith.maximumf %157, %158 : vector<2x512xf32>
    %c0_53 = arith.constant 0 : index
    %c0_54 = arith.constant 0 : index
    %160 = vector.load %arg12[%c0_53, %c0_54] : memref<512x256xf32, #tpu.memory_space<vmem>>, vector<512x256xf32>
    %cst_55 = arith.constant dense<0.000000e+00> : vector<2x256xf32>
    %161 = tpu.matmul %159, %160, %cst_55 {dimension_numbers = #tpu.dot_dimension_numbers<[1], [0], [0], [1], [0, 0, 1, 1], [], []>} : vector<2x512xf32>, vector<512x256xf32>, vector<2x256xf32> -> vector<2x256xf32>
    %c0_56 = arith.constant 0 : index
    %c0_57 = arith.constant 0 : index
    %162 = vector.load %arg13[%c0_56, %c0_57] : memref<1x256xf32, #tpu.memory_space<vmem>>, vector<1x256xf32>
    %163 = vector.broadcast %162 : vector<1x256xf32> to vector<2x256xf32>
    %164 = arith.addf %161, %163 : vector<2x256xf32>
    %165 = vector.shape_cast %129 : vector<2x8x32xf32> to vector<2x256xf32>
    %166 = arith.addf %164, %165 : vector<2x256xf32>
    %c0_58 = arith.constant 0 : index
    %c0_59 = arith.constant 0 : index
    %167 = vector.load %arg14[%c0_58, %c0_59] : memref<2x256xf32, #tpu.memory_space<vmem>>, vector<2x256xf32>
    tpu.vector_store %arg14[%c0_58, %c0_59], %166 {strides = array<i32>} : memref<2x256xf32, #tpu.memory_space<vmem>>, vector<2x256xf32>,
    return
  }
  func.func @transform_0(%arg0: i32) -> (i32, i32, i32) {
    %c0_i32 = arith.constant 0 : i32
    %c0_i32_0 = arith.constant 0 : i32
    %c0_i32_1 = arith.constant 0 : i32
    return %arg0, %c0_i32, %c0_i32_0 : i32, i32, i32
  }
  func.func @transform_1(%arg0: i32) -> (i32, i32) {
    %c0_i32 = arith.constant 0 : i32
    %c0_i32_0 = arith.constant 0 : i32
    return %arg0, %c0_i32 : i32, i32
  }
  func.func @transform_2(%arg0: i32) -> (i32, i32) {
    %c0_i32 = arith.constant 0 : i32
    %c0_i32_0 = arith.constant 0 : i32
    %c0_i32_1 = arith.constant 0 : i32
    return %c0_i32, %c0_i32_0 : i32, i32
  }
  func.func @transform_3(%arg0: i32) -> (i32, i32) {
    %c0_i32 = arith.constant 0 : i32
    %c0_i32_0 = arith.constant 0 : i32
    %c0_i32_1 = arith.constant 0 : i32
    return %c0_i32, %c0_i32_0 : i32, i32
  }
  func.func @transform_4(%arg0: i32) -> (i32, i32) {
    %c0_i32 = arith.constant 0 : i32
    %c0_i32_0 = arith.constant 0 : i32
    %c0_i32_1 = arith.constant 0 : i32
    return %c0_i32, %c0_i32_0 : i32, i32
  }
  func.func @transform_5(%arg0: i32) -> (i32, i32) {
    %c0_i32 = arith.constant 0 : i32
    %c0_i32_0 = arith.constant 0 : i32
    %c0_i32_1 = arith.constant 0 : i32
    return %c0_i32, %c0_i32_0 : i32, i32
  }
  func.func @transform_6(%arg0: i32) -> (i32, i32) {
    %c0_i32 = arith.constant 0 : i32
    %c0_i32_0 = arith.constant 0 : i32
    %c0_i32_1 = arith.constant 0 : i32
    return %c0_i32, %c0_i32_0 : i32, i32
  }
  func.func @transform_7(%arg0: i32) -> (i32, i32) {
    %c0_i32 = arith.constant 0 : i32
    %c0_i32_0 = arith.constant 0 : i32
    %c0_i32_1 = arith.constant 0 : i32
    return %c0_i32, %c0_i32_0 : i32, i32
  }
  func.func @transform_8(%arg0: i32) -> (i32, i32) {
    %c0_i32 = arith.constant 0 : i32
    %c0_i32_0 = arith.constant 0 : i32
    %c0_i32_1 = arith.constant 0 : i32
    return %c0_i32, %c0_i32_0 : i32, i32
  }
  func.func @transform_9(%arg0: i32) -> (i32, i32) {
    %c0_i32 = arith.constant 0 : i32
    %c0_i32_0 = arith.constant 0 : i32
    %c0_i32_1 = arith.constant 0 : i32
    return %c0_i32, %c0_i32_0 : i32, i32
  }
  func.func @transform_10(%arg0: i32) -> (i32, i32) {
    %c0_i32 = arith.constant 0 : i32
    %c0_i32_0 = arith.constant 0 : i32
    %c0_i32_1 = arith.constant 0 : i32
    return %c0_i32, %c0_i32_0 : i32, i32
  }
  func.func @transform_11(%arg0: i32) -> (i32, i32) {
    %c0_i32 = arith.constant 0 : i32
    %c0_i32_0 = arith.constant 0 : i32
    %c0_i32_1 = arith.constant 0 : i32
    return %c0_i32, %c0_i32_0 : i32, i32
  }
  func.func @transform_12(%arg0: i32) -> (i32, i32) {
    %c0_i32 = arith.constant 0 : i32
    %c0_i32_0 = arith.constant 0 : i32
    %c0_i32_1 = arith.constant 0 : i32
    return %c0_i32, %c0_i32_0 : i32, i32
  }
  func.func @transform_13(%arg0: i32) -> (i32, i32) {
    %c0_i32 = arith.constant 0 : i32
    %c0_i32_0 = arith.constant 0 : i32
    return %arg0, %c0_i32 : i32, i32
  }
}

module attributes {stable_mosaic.version = 11 : i64} {
  func.func @transformer_block_kernel(%arg0: i32, %arg1: memref<2x8x32xf32, #tpu.memory_space<vmem>>, %arg2: memref<2x32xf32, #tpu.memory_space<vmem>>, %arg3: memref<32x128xf32, #tpu.memory_space<vmem>>, %arg4: memref<1x128xf32, #tpu.memory_space<vmem>>, %arg5: memref<32x64xf32, #tpu.memory_space<vmem>>, %arg6: memref<1x64xf32, #tpu.memory_space<vmem>>, %arg7: memref<32x128xf32, #tpu.memory_space<vmem>>, %arg8: memref<1x128xf32, #tpu.memory_space<vmem>>, %arg9: memref<1x32xf32, #tpu.memory_space<vmem>>, %arg10: memref<256x512xf32, #tpu.memory_space<vmem>>, %arg11: memref<1x512xf32, #tpu.memory_space<vmem>>, %arg12: memref<512x256xf32, #tpu.memory_space<vmem>>, %arg13: memref<1x256xf32, #tpu.memory_space<vmem>>, %arg14: memref<2x256xf32, #tpu.memory_space<vmem>>) attributes {dimension_semantics = [#tpu.dimension_semantics<parallel>], iteration_bounds = array<i64: 1>, scalar_prefetch = 0 : i64, scratch_operands = 0 : i64, tpu.core_type = #tpu.core_type<tc>, window_params = [{transform_indices = @transform_0, window_bounds = array<i64: 2, 8, 32>}, {transform_indices = @transform_1, window_bounds = array<i64: 2, 32>}, {pipeline_mode = #tpu.pipeline_mode<synchronous>, transform_indices = @transform_2, window_bounds = array<i64: 32, 128>}, {pipeline_mode = #tpu.pipeline_mode<synchronous>, transform_indices = @transform_3, window_bounds = array<i64: 1, 128>}, {pipeline_mode = #tpu.pipeline_mode<synchronous>, transform_indices = @transform_4, window_bounds = array<i64: 32, 64>}, {pipeline_mode = #tpu.pipeline_mode<synchronous>, transform_indices = @transform_5, window_bounds = array<i64: 1, 64>}, {pipeline_mode = #tpu.pipeline_mode<synchronous>, transform_indices = @transform_6, window_bounds = array<i64: 32, 128>}, {pipeline_mode = #tpu.pipeline_mode<synchronous>, transform_indices = @transform_7, window_bounds = array<i64: 1, 128>}, {pipeline_mode = #tpu.pipeline_mode<synchronous>, transform_indices = @transform_8, window_bounds = array<i64: 1, 32>}, {pipeline_mode = #tpu.pipeline_mode<synchronous>, transform_indices = @transform_9, window_bounds = array<i64: 256, 512>}, {pipeline_mode = #tpu.pipeline_mode<synchronous>, transform_indices = @transform_10, window_bounds = array<i64: 1, 512>}, {pipeline_mode = #tpu.pipeline_mode<synchronous>, transform_indices = @transform_11, window_bounds = array<i64: 512, 256>}, {pipeline_mode = #tpu.pipeline_mode<synchronous>, transform_indices = @transform_12, window_bounds = array<i64: 1, 256>}, {transform_indices = @transform_13, window_bounds = array<i64: 2, 256>}]} {
    %c0 = arith.constant 0 : index
    %c0_0 = arith.constant 0 : index
    %c0_1 = arith.constant 0 : index
    %0 = vector.load %arg1[%c0, %c0_0, %c0_1] : memref<2x8x32xf32, #tpu.memory_space<vmem>>, vector<2x8x32xf32>
    %c0_2 = arith.constant 0 : index
    %c0_3 = arith.constant 0 : index
    %1 = vector.load %arg2[%c0_2, %c0_3] : memref<2x32xf32, #tpu.memory_space<vmem>>, vector<2x32xf32>
    %c0_4 = arith.constant 0 : index
    %c0_5 = arith.constant 0 : index
    %2 = vector.load %arg3[%c0_4, %c0_5] : memref<32x128xf32, #tpu.memory_space<vmem>>, vector<32x128xf32>
    %cst = arith.constant dense<0.000000e+00> : vector<2x128xf32>
    %3 = tpu.matmul %1, %2, %cst {dimension_numbers = #tpu.dot_dimension_numbers<[1], [0], [0], [1], [0, 0, 1, 1], [], []>} : vector<2x32xf32>, vector<32x128xf32>, vector<2x128xf32> -> vector<2x128xf32>
    %c0_6 = arith.constant 0 : index
    %c0_7 = arith.constant 0 : index
    %4 = vector.load %arg4[%c0_6, %c0_7] : memref<1x128xf32, #tpu.memory_space<vmem>>, vector<1x128xf32>
    %5 = vector.broadcast %4 : vector<1x128xf32> to vector<2x128xf32>
    %6 = arith.addf %3, %5 : vector<2x128xf32>
    %7 = vector.extract_strided_slice %6 {offsets = [0, 0], sizes = [2, 32], strides = [1, 1]} : vector<2x128xf32> to vector<2x32xf32>
    %8 = vector.shape_cast %7 : vector<2x32xf32> to vector<2x1x32xf32>
    %9 = vector.extract_strided_slice %6 {offsets = [0, 32], sizes = [2, 32], strides = [1, 1]} : vector<2x128xf32> to vector<2x32xf32>
    %10 = vector.shape_cast %9 : vector<2x32xf32> to vector<2x1x32xf32>
    %11 = vector.extract_strided_slice %6 {offsets = [0, 64], sizes = [2, 32], strides = [1, 1]} : vector<2x128xf32> to vector<2x32xf32>
    %12 = vector.shape_cast %11 : vector<2x32xf32> to vector<2x1x32xf32>
    %13 = vector.extract_strided_slice %6 {offsets = [0, 96], sizes = [2, 32], strides = [1, 1]} : vector<2x128xf32> to vector<2x32xf32>
    %14 = vector.shape_cast %13 : vector<2x32xf32> to vector<2x1x32xf32>
    %cst_8 = arith.constant dense<0.000000e+00> : vector<2x8xf32>
    %15 = vector.multi_reduction <add>, %0, %cst_8 [2] : vector<2x8x32xf32> to vector<2x8xf32>
    %16 = vector.shape_cast %15 : vector<2x8xf32> to vector<2x8x1xf32>
    %cst_9 = arith.constant 3.200000e+01 : f32
    %17 = vector.broadcast %cst_9 : f32 to vector<2x8x1xf32>
    %18 = arith.divf %16, %17 : vector<2x8x1xf32>
    %19 = vector.broadcast %18 : vector<2x8x1xf32> to vector<2x8x32xf32>
    %20 = arith.subf %0, %19 : vector<2x8x32xf32>
    %21 = arith.mulf %20, %20 : vector<2x8x32xf32>
    %cst_10 = arith.constant dense<0.000000e+00> : vector<2x8xf32>
    %22 = vector.multi_reduction <add>, %21, %cst_10 [2] : vector<2x8x32xf32> to vector<2x8xf32>
    %23 = vector.shape_cast %22 : vector<2x8xf32> to vector<2x8x1xf32>
    %cst_11 = arith.constant 3.200000e+01 : f32
    %24 = vector.broadcast %cst_11 : f32 to vector<2x8x1xf32>
    %25 = arith.divf %23, %24 : vector<2x8x1xf32>
    %26 = vector.broadcast %18 : vector<2x8x1xf32> to vector<2x8x32xf32>
    %27 = arith.subf %0, %26 : vector<2x8x32xf32>
    %cst_12 = arith.constant 9.99999974E-6 : f32
    %28 = vector.broadcast %cst_12 : f32 to vector<2x8x1xf32>
    %29 = arith.addf %25, %28 : vector<2x8x1xf32>
    %30 = math.rsqrt %29 : vector<2x8x1xf32>
    %31 = vector.broadcast %30 : vector<2x8x1xf32> to vector<2x8x32xf32>
    %32 = arith.mulf %27, %31 : vector<2x8x32xf32>
    %33 = vector.broadcast %8 : vector<2x1x32xf32> to vector<2x8x32xf32>
    %34 = arith.mulf %32, %33 : vector<2x8x32xf32>
    %35 = vector.broadcast %10 : vector<2x1x32xf32> to vector<2x8x32xf32>
    %36 = arith.addf %34, %35 : vector<2x8x32xf32>
    %37 = vector.shape_cast %36 : vector<2x8x32xf32> to vector<16x32xf32>
    %c0_13 = arith.constant 0 : index
    %c0_14 = arith.constant 0 : index
    %38 = vector.load %arg5[%c0_13, %c0_14] : memref<32x64xf32, #tpu.memory_space<vmem>>, vector<32x64xf32>
    %cst_15 = arith.constant dense<0.000000e+00> : vector<16x64xf32>
    %39 = tpu.matmul %37, %38, %cst_15 {dimension_numbers = #tpu.dot_dimension_numbers<[1], [0], [0], [1], [0, 0, 1, 1], [], []>} : vector<16x32xf32>, vector<32x64xf32>, vector<16x64xf32> -> vector<16x64xf32>
    %c0_16 = arith.constant 0 : index
    %c0_17 = arith.constant 0 : index
    %40 = vector.load %arg6[%c0_16, %c0_17] : memref<1x64xf32, #tpu.memory_space<vmem>>, vector<1x64xf32>
    %41 = vector.broadcast %40 : vector<1x64xf32> to vector<16x64xf32>
    %42 = arith.addf %39, %41 : vector<16x64xf32>
    %c0_18 = arith.constant 0 : index
    %c0_19 = arith.constant 0 : index
    %43 = vector.load %arg7[%c0_18, %c0_19] : memref<32x128xf32, #tpu.memory_space<vmem>>, vector<32x128xf32>
    %cst_20 = arith.constant dense<0.000000e+00> : vector<16x128xf32>
    %44 = tpu.matmul %37, %43, %cst_20 {dimension_numbers = #tpu.dot_dimension_numbers<[1], [0], [0], [1], [0, 0, 1, 1], [], []>} : vector<16x32xf32>, vector<32x128xf32>, vector<16x128xf32> -> vector<16x128xf32>
    %c0_21 = arith.constant 0 : index
    %c0_22 = arith.constant 0 : index
    %45 = vector.load %arg8[%c0_21, %c0_22] : memref<1x128xf32, #tpu.memory_space<vmem>>, vector<1x128xf32>
    %46 = vector.broadcast %45 : vector<1x128xf32> to vector<16x128xf32>
    %47 = arith.addf %44, %46 : vector<16x128xf32>
    %cst_23 = arith.constant 0.000000e+00 : f32
    %48 = vector.broadcast %cst_23 : f32 to vector<2x8x32xf32>
    %49 = vector.extract_strided_slice %42 {offsets = [0, 0], sizes = [16, 8], strides = [1, 1]} : vector<16x64xf32> to vector<16x8xf32>
    %50 = vector.shape_cast %49 : vector<16x8xf32> to vector<2x8x8xf32>
    %51 = vector.extract_strided_slice %42 {offsets = [0, 32], sizes = [16, 8], strides = [1, 1]} : vector<16x64xf32> to vector<16x8xf32>
    %52 = vector.shape_cast %51 : vector<16x8xf32> to vector<2x8x8xf32>
    %53 = vector.extract_strided_slice %47 {offsets = [0, 0], sizes = [16, 32], strides = [1, 1]} : vector<16x128xf32> to vector<16x32xf32>
    %54 = vector.shape_cast %53 : vector<16x32xf32> to vector<2x8x32xf32>
    "tpu.trace_start"() <{level = 10 : i32, message = "bqd,bkd->bqk"}> : () -> ()
    %cst_24 = arith.constant dense<0.000000e+00> : vector<2x8x8xf32>
    %55 = tpu.matmul %50, %52, %cst_24 {dimension_numbers = #tpu.dot_dimension_numbers<[2], [2], [1], [1], [0, 0, 0, 1, 1, 1], [0], [0]>} : vector<2x8x8xf32>, vector<2x8x8xf32>, vector<2x8x8xf32> -> vector<2x8x8xf32>
    "tpu.trace_stop"() : () -> ()
    %cst_25 = arith.constant dense<0xFF800000> : vector<2x8xf32>
    %56 = vector.multi_reduction <maximumf>, %55, %cst_25 [2] : vector<2x8x8xf32> to vector<2x8xf32>
    %57 = vector.shape_cast %56 : vector<2x8xf32> to vector<2x8x1xf32>
    %58 = vector.broadcast %57 : vector<2x8x1xf32> to vector<2x8x8xf32>
    %59 = arith.subf %55, %58 : vector<2x8x8xf32>
    %60 = math.exp %59 : vector<2x8x8xf32>
    %cst_26 = arith.constant dense<0.000000e+00> : vector<2x8xf32>
    %61 = vector.multi_reduction <add>, %60, %cst_26 [2] : vector<2x8x8xf32> to vector<2x8xf32>
    %62 = vector.shape_cast %61 : vector<2x8xf32> to vector<2x8x1xf32>
    %63 = tpu.reciprocal %62 : vector<2x8x1xf32> -> vector<2x8x1xf32>
    %64 = vector.broadcast %63 : vector<2x8x1xf32> to vector<2x8x8xf32>
    %65 = arith.mulf %60, %64 : vector<2x8x8xf32>
    "tpu.trace_start"() <{level = 10 : i32, message = "bqk,bke->bqe"}> : () -> ()
    %cst_27 = arith.constant dense<0.000000e+00> : vector<2x8x32xf32>
    %66 = tpu.matmul %65, %54, %cst_27 {dimension_numbers = #tpu.dot_dimension_numbers<[2], [1], [1], [2], [0, 0, 0, 1, 1, 2], [0], [0]>} : vector<2x8x8xf32>, vector<2x8x32xf32>, vector<2x8x32xf32> -> vector<2x8x32xf32>
    "tpu.trace_stop"() : () -> ()
    %67 = arith.addf %48, %66 : vector<2x8x32xf32>
    %68 = vector.extract_strided_slice %42 {offsets = [0, 8], sizes = [16, 8], strides = [1, 1]} : vector<16x64xf32> to vector<16x8xf32>
    %69 = vector.shape_cast %68 : vector<16x8xf32> to vector<2x8x8xf32>
    %70 = vector.extract_strided_slice %42 {offsets = [0, 40], sizes = [16, 8], strides = [1, 1]} : vector<16x64xf32> to vector<16x8xf32>
    %71 = vector.shape_cast %70 : vector<16x8xf32> to vector<2x8x8xf32>
    %72 = vector.extract_strided_slice %47 {offsets = [0, 32], sizes = [16, 32], strides = [1, 1]} : vector<16x128xf32> to vector<16x32xf32>
    %73 = vector.shape_cast %72 : vector<16x32xf32> to vector<2x8x32xf32>
    "tpu.trace_start"() <{level = 10 : i32, message = "bqd,bkd->bqk"}> : () -> ()
    %cst_28 = arith.constant dense<0.000000e+00> : vector<2x8x8xf32>
    %74 = tpu.matmul %69, %71, %cst_28 {dimension_numbers = #tpu.dot_dimension_numbers<[2], [2], [1], [1], [0, 0, 0, 1, 1, 1], [0], [0]>} : vector<2x8x8xf32>, vector<2x8x8xf32>, vector<2x8x8xf32> -> vector<2x8x8xf32>
    "tpu.trace_stop"() : () -> ()
    %cst_29 = arith.constant dense<0xFF800000> : vector<2x8xf32>
    %75 = vector.multi_reduction <maximumf>, %74, %cst_29 [2] : vector<2x8x8xf32> to vector<2x8xf32>
    %76 = vector.shape_cast %75 : vector<2x8xf32> to vector<2x8x1xf32>
    %77 = vector.broadcast %76 : vector<2x8x1xf32> to vector<2x8x8xf32>
    %78 = arith.subf %74, %77 : vector<2x8x8xf32>
    %79 = math.exp %78 : vector<2x8x8xf32>
    %cst_30 = arith.constant dense<0.000000e+00> : vector<2x8xf32>
    %80 = vector.multi_reduction <add>, %79, %cst_30 [2] : vector<2x8x8xf32> to vector<2x8xf32>
    %81 = vector.shape_cast %80 : vector<2x8xf32> to vector<2x8x1xf32>
    %82 = tpu.reciprocal %81 : vector<2x8x1xf32> -> vector<2x8x1xf32>
    %83 = vector.broadcast %82 : vector<2x8x1xf32> to vector<2x8x8xf32>
    %84 = arith.mulf %79, %83 : vector<2x8x8xf32>
    "tpu.trace_start"() <{level = 10 : i32, message = "bqk,bke->bqe"}> : () -> ()
    %cst_31 = arith.constant dense<0.000000e+00> : vector<2x8x32xf32>
    %85 = tpu.matmul %84, %73, %cst_31 {dimension_numbers = #tpu.dot_dimension_numbers<[2], [1], [1], [2], [0, 0, 0, 1, 1, 2], [0], [0]>} : vector<2x8x8xf32>, vector<2x8x32xf32>, vector<2x8x32xf32> -> vector<2x8x32xf32>
    "tpu.trace_stop"() : () -> ()
    %86 = arith.addf %67, %85 : vector<2x8x32xf32>
    %87 = vector.extract_strided_slice %42 {offsets = [0, 16], sizes = [16, 8], strides = [1, 1]} : vector<16x64xf32> to vector<16x8xf32>
    %88 = vector.shape_cast %87 : vector<16x8xf32> to vector<2x8x8xf32>
    %89 = vector.extract_strided_slice %42 {offsets = [0, 48], sizes = [16, 8], strides = [1, 1]} : vector<16x64xf32> to vector<16x8xf32>
    %90 = vector.shape_cast %89 : vector<16x8xf32> to vector<2x8x8xf32>
    %91 = vector.extract_strided_slice %47 {offsets = [0, 64], sizes = [16, 32], strides = [1, 1]} : vector<16x128xf32> to vector<16x32xf32>
    %92 = vector.shape_cast %91 : vector<16x32xf32> to vector<2x8x32xf32>
    "tpu.trace_start"() <{level = 10 : i32, message = "bqd,bkd->bqk"}> : () -> ()
    %cst_32 = arith.constant dense<0.000000e+00> : vector<2x8x8xf32>
    %93 = tpu.matmul %88, %90, %cst_32 {dimension_numbers = #tpu.dot_dimension_numbers<[2], [2], [1], [1], [0, 0, 0, 1, 1, 1], [0], [0]>} : vector<2x8x8xf32>, vector<2x8x8xf32>, vector<2x8x8xf32> -> vector<2x8x8xf32>
    "tpu.trace_stop"() : () -> ()
    %cst_33 = arith.constant dense<0xFF800000> : vector<2x8xf32>
    %94 = vector.multi_reduction <maximumf>, %93, %cst_33 [2] : vector<2x8x8xf32> to vector<2x8xf32>
    %95 = vector.shape_cast %94 : vector<2x8xf32> to vector<2x8x1xf32>
    %96 = vector.broadcast %95 : vector<2x8x1xf32> to vector<2x8x8xf32>
    %97 = arith.subf %93, %96 : vector<2x8x8xf32>
    %98 = math.exp %97 : vector<2x8x8xf32>
    %cst_34 = arith.constant dense<0.000000e+00> : vector<2x8xf32>
    %99 = vector.multi_reduction <add>, %98, %cst_34 [2] : vector<2x8x8xf32> to vector<2x8xf32>
    %100 = vector.shape_cast %99 : vector<2x8xf32> to vector<2x8x1xf32>
    %101 = tpu.reciprocal %100 : vector<2x8x1xf32> -> vector<2x8x1xf32>
    %102 = vector.broadcast %101 : vector<2x8x1xf32> to vector<2x8x8xf32>
    %103 = arith.mulf %98, %102 : vector<2x8x8xf32>
    "tpu.trace_start"() <{level = 10 : i32, message = "bqk,bke->bqe"}> : () -> ()
    %cst_35 = arith.constant dense<0.000000e+00> : vector<2x8x32xf32>
    %104 = tpu.matmul %103, %92, %cst_35 {dimension_numbers = #tpu.dot_dimension_numbers<[2], [1], [1], [2], [0, 0, 0, 1, 1, 2], [0], [0]>} : vector<2x8x8xf32>, vector<2x8x32xf32>, vector<2x8x32xf32> -> vector<2x8x32xf32>
    "tpu.trace_stop"() : () -> ()
    %105 = arith.addf %86, %104 : vector<2x8x32xf32>
    %106 = vector.extract_strided_slice %42 {offsets = [0, 24], sizes = [16, 8], strides = [1, 1]} : vector<16x64xf32> to vector<16x8xf32>
    %107 = vector.shape_cast %106 : vector<16x8xf32> to vector<2x8x8xf32>
    %108 = vector.extract_strided_slice %42 {offsets = [0, 56], sizes = [16, 8], strides = [1, 1]} : vector<16x64xf32> to vector<16x8xf32>
    %109 = vector.shape_cast %108 : vector<16x8xf32> to vector<2x8x8xf32>
    %110 = vector.extract_strided_slice %47 {offsets = [0, 96], sizes = [16, 32], strides = [1, 1]} : vector<16x128xf32> to vector<16x32xf32>
    %111 = vector.shape_cast %110 : vector<16x32xf32> to vector<2x8x32xf32>
    "tpu.trace_start"() <{level = 10 : i32, message = "bqd,bkd->bqk"}> : () -> ()
    %cst_36 = arith.constant dense<0.000000e+00> : vector<2x8x8xf32>
    %112 = tpu.matmul %107, %109, %cst_36 {dimension_numbers = #tpu.dot_dimension_numbers<[2], [2], [1], [1], [0, 0, 0, 1, 1, 1], [0], [0]>} : vector<2x8x8xf32>, vector<2x8x8xf32>, vector<2x8x8xf32> -> vector<2x8x8xf32>
    "tpu.trace_stop"() : () -> ()
    %cst_37 = arith.constant dense<0xFF800000> : vector<2x8xf32>
    %113 = vector.multi_reduction <maximumf>, %112, %cst_37 [2] : vector<2x8x8xf32> to vector<2x8xf32>
    %114 = vector.shape_cast %113 : vector<2x8xf32> to vector<2x8x1xf32>
    %115 = vector.broadcast %114 : vector<2x8x1xf32> to vector<2x8x8xf32>
    %116 = arith.subf %112, %115 : vector<2x8x8xf32>
    %117 = math.exp %116 : vector<2x8x8xf32>
    %cst_38 = arith.constant dense<0.000000e+00> : vector<2x8xf32>
    %118 = vector.multi_reduction <add>, %117, %cst_38 [2] : vector<2x8x8xf32> to vector<2x8xf32>
    %119 = vector.shape_cast %118 : vector<2x8xf32> to vector<2x8x1xf32>
    %120 = tpu.reciprocal %119 : vector<2x8x1xf32> -> vector<2x8x1xf32>
    %121 = vector.broadcast %120 : vector<2x8x1xf32> to vector<2x8x8xf32>
    %122 = arith.mulf %117, %121 : vector<2x8x8xf32>
    "tpu.trace_start"() <{level = 10 : i32, message = "bqk,bke->bqe"}> : () -> ()
    %cst_39 = arith.constant dense<0.000000e+00> : vector<2x8x32xf32>
    %123 = tpu.matmul %122, %111, %cst_39 {dimension_numbers = #tpu.dot_dimension_numbers<[2], [1], [1], [2], [0, 0, 0, 1, 1, 2], [0], [0]>} : vector<2x8x8xf32>, vector<2x8x32xf32>, vector<2x8x32xf32> -> vector<2x8x32xf32>
    "tpu.trace_stop"() : () -> ()
    %124 = arith.addf %105, %123 : vector<2x8x32xf32>
    %c0_40 = arith.constant 0 : index
    %c0_41 = arith.constant 0 : index
    %125 = vector.load %arg9[%c0_40, %c0_41] : memref<1x32xf32, #tpu.memory_space<vmem>>, vector<1x32xf32>
    %126 = vector.shape_cast %125 : vector<1x32xf32> to vector<1x1x32xf32>
    %127 = vector.broadcast %126 : vector<1x1x32xf32> to vector<2x8x32xf32>
    %128 = arith.addf %124, %127 : vector<2x8x32xf32>
    %129 = arith.addf %0, %128 : vector<2x8x32xf32>
    %cst_42 = arith.constant dense<0.000000e+00> : vector<2x8xf32>
    %130 = vector.multi_reduction <add>, %129, %cst_42 [2] : vector<2x8x32xf32> to vector<2x8xf32>
    %131 = vector.shape_cast %130 : vector<2x8xf32> to vector<2x8x1xf32>
    %cst_43 = arith.constant 3.200000e+01 : f32
    %132 = vector.broadcast %cst_43 : f32 to vector<2x8x1xf32>
    %133 = arith.divf %131, %132 : vector<2x8x1xf32>
    %134 = vector.broadcast %133 : vector<2x8x1xf32> to vector<2x8x32xf32>
    %135 = arith.subf %129, %134 : vector<2x8x32xf32>
    %136 = arith.mulf %135, %135 : vector<2x8x32xf32>
    %cst_44 = arith.constant dense<0.000000e+00> : vector<2x8xf32>
    %137 = vector.multi_reduction <add>, %136, %cst_44 [2] : vector<2x8x32xf32> to vector<2x8xf32>
    %138 = vector.shape_cast %137 : vector<2x8xf32> to vector<2x8x1xf32>
    %cst_45 = arith.constant 3.200000e+01 : f32
    %139 = vector.broadcast %cst_45 : f32 to vector<2x8x1xf32>
    %140 = arith.divf %138, %139 : vector<2x8x1xf32>
    %141 = vector.broadcast %133 : vector<2x8x1xf32> to vector<2x8x32xf32>
    %142 = arith.subf %129, %141 : vector<2x8x32xf32>
    %cst_46 = arith.constant 9.99999974E-6 : f32
    %143 = vector.broadcast %cst_46 : f32 to vector<2x8x1xf32>
    %144 = arith.addf %140, %143 : vector<2x8x1xf32>
    %145 = math.rsqrt %144 : vector<2x8x1xf32>
    %146 = vector.broadcast %145 : vector<2x8x1xf32> to vector<2x8x32xf32>
    %147 = arith.mulf %142, %146 : vector<2x8x32xf32>
    %148 = vector.broadcast %12 : vector<2x1x32xf32> to vector<2x8x32xf32>
    %149 = arith.mulf %147, %148 : vector<2x8x32xf32>
    %150 = vector.broadcast %14 : vector<2x1x32xf32> to vector<2x8x32xf32>
    %151 = arith.addf %149, %150 : vector<2x8x32xf32>
    %152 = vector.shape_cast %151 : vector<2x8x32xf32> to vector<2x256xf32>
    %c0_47 = arith.constant 0 : index
    %c0_48 = arith.constant 0 : index
    %153 = vector.load %arg10[%c0_47, %c0_48] : memref<256x512xf32, #tpu.memory_space<vmem>>, vector<256x512xf32>
    %cst_49 = arith.constant dense<0.000000e+00> : vector<2x512xf32>
    %154 = tpu.matmul %152, %153, %cst_49 {dimension_numbers = #tpu.dot_dimension_numbers<[1], [0], [0], [1], [0, 0, 1, 1], [], []>} : vector<2x256xf32>, vector<256x512xf32>, vector<2x512xf32> -> vector<2x512xf32>
    %c0_50 = arith.constant 0 : index
    %c0_51 = arith.constant 0 : index
    %155 = vector.load %arg11[%c0_50, %c0_51] : memref<1x512xf32, #tpu.memory_space<vmem>>, vector<1x512xf32>
    %156 = vector.broadcast %155 : vector<1x512xf32> to vector<2x512xf32>
    %157 = arith.addf %154, %156 : vector<2x512xf32>
    %cst_52 = arith.constant 0.000000e+00 : f32
    %158 = vector.broadcast %cst_52 : f32 to vector<2x512xf32>
    %159 = arith.maximumf %157, %158 : vector<2x512xf32>
    %c0_53 = arith.constant 0 : index
    %c0_54 = arith.constant 0 : index
    %160 = vector.load %arg12[%c0_53, %c0_54] : memref<512x256xf32, #tpu.memory_space<vmem>>, vector<512x256xf32>
    %cst_55 = arith.constant dense<0.000000e+00> : vector<2x256xf32>
    %161 = tpu.matmul %159, %160, %cst_55 {dimension_numbers = #tpu.dot_dimension_numbers<[1], [0], [0], [1], [0, 0, 1, 1], [], []>} : vector<2x512xf32>, vector<512x256xf32>, vector<2x256xf32> -> vector<2x256xf32>
    %c0_56 = arith.constant 0 : index
    %c0_57 = arith.constant 0 : index
    %162 = vector.load %arg13[%c0_56, %c0_57] : memref<1x256xf32, #tpu.memory_space<vmem>>, vector<1x256xf32>
    %163 = vector.broadcast %162 : vector<1x256xf32> to vector<2x256xf32>
    %164 = arith.addf %161, %163 : vector<2x256xf32>
    %165 = vector.shape_cast %129 : vector<2x8x32xf32> to vector<2x256xf32>
    %166 = arith.addf %164, %165 : vector<2x256xf32>
    %c0_58 = arith.constant 0 : index
    %c0_59 = arith.constant 0 : index
    %167 = vector.load %arg14[%c0_58, %c0_59] : memref<2x256xf32, #tpu.memory_space<vmem>>, vector<2x256xf32>
    tpu.vector_store %arg14[%c0_58, %c0_59], %166 {strides = array<i32>} : memref<2x256xf32, #tpu.memory_space<vmem>>, vector<2x256xf32>,
    return
  }
  func.func @transform_0(%arg0: i32) -> (i32, i32, i32) {
    %c0_i32 = arith.constant 0 : i32
    %c0_i32_0 = arith.constant 0 : i32
    %c0_i32_1 = arith.constant 0 : i32
    return %arg0, %c0_i32, %c0_i32_0 : i32, i32, i32
  }
  func.func @transform_1(%arg0: i32) -> (i32, i32) {
    %c0_i32 = arith.constant 0 : i32
    %c0_i32_0 = arith.constant 0 : i32
    return %arg0, %c0_i32 : i32, i32
  }
  func.func @transform_2(%arg0: i32) -> (i32, i32) {
    %c0_i32 = arith.constant 0 : i32
    %c0_i32_0 = arith.constant 0 : i32
    %c0_i32_1 = arith.constant 0 : i32
    return %c0_i32, %c0_i32_0 : i32, i32
  }
  func.func @transform_3(%arg0: i32) -> (i32, i32) {
    %c0_i32 = arith.constant 0 : i32
    %c0_i32_0 = arith.constant 0 : i32
    %c0_i32_1 = arith.constant 0 : i32
    return %c0_i32, %c0_i32_0 : i32, i32
  }
  func.func @transform_4(%arg0: i32) -> (i32, i32) {
    %c0_i32 = arith.constant 0 : i32
    %c0_i32_0 = arith.constant 0 : i32
    %c0_i32_1 = arith.constant 0 : i32
    return %c0_i32, %c0_i32_0 : i32, i32
  }
  func.func @transform_5(%arg0: i32) -> (i32, i32) {
    %c0_i32 = arith.constant 0 : i32
    %c0_i32_0 = arith.constant 0 : i32
    %c0_i32_1 = arith.constant 0 : i32
    return %c0_i32, %c0_i32_0 : i32, i32
  }
  func.func @transform_6(%arg0: i32) -> (i32, i32) {
    %c0_i32 = arith.constant 0 : i32
    %c0_i32_0 = arith.constant 0 : i32
    %c0_i32_1 = arith.constant 0 : i32
    return %c0_i32, %c0_i32_0 : i32, i32
  }
  func.func @transform_7(%arg0: i32) -> (i32, i32) {
    %c0_i32 = arith.constant 0 : i32
    %c0_i32_0 = arith.constant 0 : i32
    %c0_i32_1 = arith.constant 0 : i32
    return %c0_i32, %c0_i32_0 : i32, i32
  }
  func.func @transform_8(%arg0: i32) -> (i32, i32) {
    %c0_i32 = arith.constant 0 : i32
    %c0_i32_0 = arith.constant 0 : i32
    %c0_i32_1 = arith.constant 0 : i32
    return %c0_i32, %c0_i32_0 : i32, i32
  }
  func.func @transform_9(%arg0: i32) -> (i32, i32) {
    %c0_i32 = arith.constant 0 : i32
    %c0_i32_0 = arith.constant 0 : i32
    %c0_i32_1 = arith.constant 0 : i32
    return %c0_i32, %c0_i32_0 : i32, i32
  }
  func.func @transform_10(%arg0: i32) -> (i32, i32) {
    %c0_i32 = arith.constant 0 : i32
    %c0_i32_0 = arith.constant 0 : i32
    %c0_i32_1 = arith.constant 0 : i32
    return %c0_i32, %c0_i32_0 : i32, i32
  }
  func.func @transform_11(%arg0: i32) -> (i32, i32) {
    %c0_i32 = arith.constant 0 : i32
    %c0_i32_0 = arith.constant 0 : i32
    %c0_i32_1 = arith.constant 0 : i32
    return %c0_i32, %c0_i32_0 : i32, i32
  }
  func.func @transform_12(%arg0: i32) -> (i32, i32) {
    %c0_i32 = arith.constant 0 : i32
    %c0_i32_0 = arith.constant 0 : i32
    %c0_i32_1 = arith.constant 0 : i32
    return %c0_i32, %c0_i32_0 : i32, i32
  }
  func.func @transform_13(%arg0: i32) -> (i32, i32) {
    %c0_i32 = arith.constant 0 : i32
    %c0_i32_0 = arith.constant 0 : i32
    return %arg0, %c0_i32 : i32, i32
  }
}

</mosaic_0001>

<llo_original>
// kernel: tpu_custom_call.1
$region0: #{tpu_custom_call.1}
  #allocation0 [shape = 'u32[]', space=smem, size = 0x4, offset = 0x4, fixed_abs, tag = 'smem constant byte address 0x4 - core index']
  #allocation1 [shape = 'u32[144,128]{1,0:T(1,128)}', space=vmem, size = 0x12000, scoped, tag = 'internal scratch']
  %s0 = inlined_call_operand.hbm [shape: f32[2,8,32], index: 0, kind: input, shape index: {}]
  %s1 = inlined_call_operand.vmem [shape: f32[2,32], index: 1, kind: input, shape index: {}]
  %s2 = inlined_call_operand.hbm [shape: f32[32,128], index: 2, kind: input, shape index: {}]
  %s3 = inlined_call_operand.vmem [shape: f32[1,128], index: 3, kind: input, shape index: {}]
  %s4 = inlined_call_operand.hbm [shape: f32[32,64], index: 4, kind: input, shape index: {}]
  %s5 = inlined_call_operand.vmem [shape: f32[1,64], index: 5, kind: input, shape index: {}]
  %s6 = inlined_call_operand.hbm [shape: f32[32,128], index: 6, kind: input, shape index: {}]
  %s7 = inlined_call_operand.vmem [shape: f32[1,128], index: 7, kind: input, shape index: {}]
  %s8 = inlined_call_operand.vmem [shape: f32[1,32], index: 8, kind: input, shape index: {}]
  %s9 = inlined_call_operand.hbm [shape: f32[256,512], index: 9, kind: input, shape index: {}]
  %s10 = inlined_call_operand.vmem [shape: f32[1,512], index: 10, kind: input, shape index: {}]
  %s11 = inlined_call_operand.hbm [shape: f32[512,256], index: 11, kind: input, shape index: {}]
  %s12 = inlined_call_operand.vmem [shape: f32[1,256], index: 12, kind: input, shape index: {}]
  %s13 = inlined_call_operand.hbm [shape: f32[2,256], index: 13, kind: output, shape index: {}]
  %s14 = sld [smem:[#allocation0]]
  $region86: #{tpu_custom_call.1} parent=0
    _
  %s16 = ssub.s32 1, %s14
  %s17 = scalar_select 0, %s16, %s14
  $region1: #{tpu_custom_call.1} parent=0
    #allocation2 [shape = 'u8[8192]{0}', space=vmem, size = 0x2000, scoped, tag = 'input window, operand 0, single buffered']
    #allocation3 [shape = 's32[1]{0}', space=sflag, size = 0x4, scoped, tag = 'scoped memory for tpu_custom_call.1']
    #allocation4 [shape = 's32[1]{0}', space=sflag, size = 0x4, scoped, tag = 'scoped memory for tpu_custom_call.1']
    #allocation5 [shape = 'u8[16384]{0}', space=vmem, size = 0x4000, scoped, tag = 'input window, operand 2, single buffered']
    #allocation6 [shape = 's32[1]{0}', space=sflag, size = 0x4, scoped, tag = 'scoped memory for tpu_custom_call.1']
    #allocation7 [shape = 'u8[16384]{0}', space=vmem, size = 0x4000, scoped, tag = 'input window, operand 4, single buffered']
    #allocation8 [shape = 'u8[16384]{0}', space=vmem, size = 0x4000, scoped, tag = 'input window, operand 6, single buffered']
    #allocation9 [shape = 's32[1]{0}', space=sflag, size = 0x4, scoped, tag = 'scoped memory for tpu_custom_call.1']
    #allocation10 [shape = 'u8[524288]{0}', space=vmem, size = 0x80000, scoped, tag = 'input window, operand 9, single buffered']
    #allocation11 [shape = 'u8[524288]{0}', space=vmem, size = 0x80000, scoped, tag = 'input window, operand 11, single buffered']
    #allocation12 [shape = 's32[1]{0}', space=sflag, size = 0x4, scoped, tag = 'scoped memory for tpu_custom_call.1']
    #allocation13 [shape = 'u8[2048]{0}', space=vmem, size = 0x800, scoped, tag = 'output window, operand 0, single buffered']
    %18 = vsyncpa [#allocation3], 0
    %19 = vsyncpa [#allocation6], 0
    %20 = vsyncpa [#allocation9], 0
    %21 = vsyncpa [#allocation12], 0
    %22 = vsyncpa [#allocation4], 0
    // Predicated region
    $region2: #{tpu_custom_call.1} parent=1 // pred_check
      _
    $region3: #{tpu_custom_call.1} parent=1 // pred_check_branch
      %24 = sbr.rel (0) target = $region5
    $region4: #{tpu_custom_call.1} parent=1 // pred_region
      %s26 = ssub.s32 256, 256
      %27 = vsyncadd [#allocation3], %s26
      %s28 = sshll.u32 [#allocation2], 4
      %s29 = int_to_ptr.vmem [resolvable:$true] %s28
      %34 = dma.hbm_to_vmem [thread:$0]  %s0, 256, %s29, [#allocation3], 128, 128, 8
    $region5: #{tpu_custom_call.1} parent=1 // pred_fallthru
      _
    // Predicated region
    $region6: #{tpu_custom_call.1} parent=1 // pred_check
      _
    $region7: #{tpu_custom_call.1} parent=1 // pred_check_branch
      %36 = sbr.rel (0) target = $region9
    $region8: #{tpu_custom_call.1} parent=1 // pred_region
      _
    $region9: #{tpu_custom_call.1} parent=1 // pred_fallthru
      _
    // Predicated region
    $region10: #{tpu_custom_call.1} parent=1 // pred_check
      _
    $region11: #{tpu_custom_call.1} parent=1 // pred_check_branch
      %38 = sbr.rel (0) target = $region13
    $region12: #{tpu_custom_call.1} parent=1 // pred_region
      %s40 = ssub.s32 512, 512
      %41 = vsyncadd [#allocation6], %s40
      %s42 = sshll.u32 [#allocation5], 4
      %s43 = int_to_ptr.vmem [resolvable:$true] %s42
      %48 = dma.hbm_to_vmem [thread:$0]  %s2, 512, %s43, [#allocation6], 128, 128, 8
    $region13: #{tpu_custom_call.1} parent=1 // pred_fallthru
      _
    // Predicated region
    $region14: #{tpu_custom_call.1} parent=1 // pred_check
      _
    $region15: #{tpu_custom_call.1} parent=1 // pred_check_branch
      %50 = sbr.rel (0) target = $region17
    $region16: #{tpu_custom_call.1} parent=1 // pred_region
      _
    $region17: #{tpu_custom_call.1} parent=1 // pred_fallthru
      _
    // Predicated region
    $region18: #{tpu_custom_call.1} parent=1 // pred_check
      _
    $region19: #{tpu_custom_call.1} parent=1 // pred_check_branch
      %52 = sbr.rel (0) target = $region21
    $region20: #{tpu_custom_call.1} parent=1 // pred_region
      %s54 = ssub.s32 512, 512
      %55 = vsyncadd [#allocation6], %s54
      %s56 = sshll.u32 [#allocation7], 4
      %s57 = int_to_ptr.vmem [resolvable:$true] %s56
      %62 = dma.hbm_to_vmem [thread:$0]  %s4, 512, %s57, [#allocation6], 128, 128, 8
    $region21: #{tpu_custom_call.1} parent=1 // pred_fallthru
      _
    // Predicated region
    $region22: #{tpu_custom_call.1} parent=1 // pred_check
      _
    $region23: #{tpu_custom_call.1} parent=1 // pred_check_branch
      %64 = sbr.rel (0) target = $region25
    $region24: #{tpu_custom_call.1} parent=1 // pred_region
      _
    $region25: #{tpu_custom_call.1} parent=1 // pred_fallthru
      _
    // Predicated region
    $region26: #{tpu_custom_call.1} parent=1 // pred_check
      _
    $region27: #{tpu_custom_call.1} parent=1 // pred_check_branch
      %66 = sbr.rel (0) target = $region29
    $region28: #{tpu_custom_call.1} parent=1 // pred_region
      %s68 = ssub.s32 512, 512
      %69 = vsyncadd [#allocation9], %s68
      %s70 = sshll.u32 [#allocation8], 4
      %s71 = int_to_ptr.vmem [resolvable:$true] %s70
      %76 = dma.hbm_to_vmem [thread:$0]  %s6, 512, %s71, [#allocation9], 128, 128, 8
    $region29: #{tpu_custom_call.1} parent=1 // pred_fallthru
      _
    // Predicated region
    $region30: #{tpu_custom_call.1} parent=1 // pred_check
      _
    $region31: #{tpu_custom_call.1} parent=1 // pred_check_branch
      %78 = sbr.rel (0) target = $region33
    $region32: #{tpu_custom_call.1} parent=1 // pred_region
      _
    $region33: #{tpu_custom_call.1} parent=1 // pred_fallthru
      _
    // Predicated region
    $region34: #{tpu_custom_call.1} parent=1 // pred_check
      _
    $region35: #{tpu_custom_call.1} parent=1 // pred_check_branch
      %80 = sbr.rel (0) target = $region37
    $region36: #{tpu_custom_call.1} parent=1 // pred_region
      _
    $region37: #{tpu_custom_call.1} parent=1 // pred_fallthru
      _
    // Predicated region
    $region38: #{tpu_custom_call.1} parent=1 // pred_check
      _
    $region39: #{tpu_custom_call.1} parent=1 // pred_check_branch
      %82 = sbr.rel (0) target = $region41
    $region40: #{tpu_custom_call.1} parent=1 // pred_region
      %s84 = ssub.s32 16384, 16384
      %85 = vsyncadd [#allocation9], %s84
      %s86 = sshll.u32 [#allocation10], 4
      %s87 = int_to_ptr.vmem [resolvable:$true] %s86
      %92 = dma.hbm_to_vmem [thread:$0]  %s9, 16384, %s87, [#allocation9], 512, 512, 32
    $region41: #{tpu_custom_call.1} parent=1 // pred_fallthru
      _
    // Predicated region
    $region42: #{tpu_custom_call.1} parent=1 // pred_check
      _
    $region43: #{tpu_custom_call.1} parent=1 // pred_check_branch
      %94 = sbr.rel (0) target = $region45
    $region44: #{tpu_custom_call.1} parent=1 // pred_region
      _
    $region45: #{tpu_custom_call.1} parent=1 // pred_fallthru
      _
    // Predicated region
    $region46: #{tpu_custom_call.1} parent=1 // pred_check
      _
    $region47: #{tpu_custom_call.1} parent=1 // pred_check_branch
      %96 = sbr.rel (0) target = $region49
    $region48: #{tpu_custom_call.1} parent=1 // pred_region
      %s98 = ssub.s32 16384, 16384
      %99 = vsyncadd [#allocation12], %s98
      %s100 = sshll.u32 [#allocation11], 4
      %s101 = int_to_ptr.vmem [resolvable:$true] %s100
      %106 = dma.hbm_to_vmem [thread:$0]  %s11, 16384, %s101, [#allocation12], 256, 256, 16
    $region49: #{tpu_custom_call.1} parent=1 // pred_fallthru
      _
    // Predicated region
    $region50: #{tpu_custom_call.1} parent=1 // pred_check
      _
    $region51: #{tpu_custom_call.1} parent=1 // pred_check_branch
      %108 = sbr.rel (0) target = $region53
    $region52: #{tpu_custom_call.1} parent=1 // pred_region
      _
    $region53: #{tpu_custom_call.1} parent=1 // pred_fallthru
      _
    // Predicated region
    $region54: #{tpu_custom_call.1} parent=1 // pred_check
      _
    $region55: #{tpu_custom_call.1} parent=1 // pred_check_branch
      %110 = sbr.rel (0) target = $region57
    $region56: #{tpu_custom_call.1} parent=1 // pred_region
      %111 = dma.done [#allocation3], 256
    $region57: #{tpu_custom_call.1} parent=1 // pred_fallthru
      _
    // Predicated region
    $region58: #{tpu_custom_call.1} parent=1 // pred_check
      _
    $region59: #{tpu_custom_call.1} parent=1 // pred_check_branch
      %113 = sbr.rel (0) target = $region61
    $region60: #{tpu_custom_call.1} parent=1 // pred_region
      %114 = dma.done [#allocation6], 512
    $region61: #{tpu_custom_call.1} parent=1 // pred_fallthru
      _
    // Predicated region
    $region62: #{tpu_custom_call.1} parent=1 // pred_check
      _
    $region63: #{tpu_custom_call.1} parent=1 // pred_check_branch
      %116 = sbr.rel (0) target = $region65
    $region64: #{tpu_custom_call.1} parent=1 // pred_region
      %117 = dma.done [#allocation6], 512
    $region65: #{tpu_custom_call.1} parent=1 // pred_fallthru
      _
    // Predicated region
    $region66: #{tpu_custom_call.1} parent=1 // pred_check
      _
    $region67: #{tpu_custom_call.1} parent=1 // pred_check_branch
      %119 = sbr.rel (0) target = $region69
    $region68: #{tpu_custom_call.1} parent=1 // pred_region
      %120 = dma.done [#allocation9], 512
    $region69: #{tpu_custom_call.1} parent=1 // pred_fallthru
      _
    // Predicated region
    $region70: #{tpu_custom_call.1} parent=1 // pred_check
      _
    $region71: #{tpu_custom_call.1} parent=1 // pred_check_branch
      %122 = sbr.rel (0) target = $region73
    $region72: #{tpu_custom_call.1} parent=1 // pred_region
      %123 = dma.done [#allocation9], 16384
    $region73: #{tpu_custom_call.1} parent=1 // pred_fallthru
      _
    // Predicated region
    $region74: #{tpu_custom_call.1} parent=1 // pred_check
      _
    $region75: #{tpu_custom_call.1} parent=1 // pred_check_branch
      %125 = sbr.rel (0) target = $region77
    $region76: #{tpu_custom_call.1} parent=1 // pred_region
      %126 = dma.done [#allocation12], 16384
    $region77: #{tpu_custom_call.1} parent=1 // pred_fallthru
      _
    %v127 = vld [vmem:[#allocation2] sm:$0xff]
    %v128 = vld [vmem:[#allocation2 + $0x8] sm:$0xff]
    %v129 = vld [vmem:[%s1] sm:$0x3]
    %v130 = vld [vmem:[#allocation5] sm:$0xff]
    %v131 = vld [vmem:[#allocation5 + $0x8] sm:$0xff]
    %v132 = vld [vmem:[#allocation5 + $0x10] sm:$0xff]
    %v133 = vld [vmem:[#allocation5 + $0x18] sm:$0xff]
    %v134 = vld [vmem:[%s3] sm:$0x1]
    %v136 = vlaneseq
    %v137 = vshrl.u32 %v136, 7
    %v138 = vsub.s32 0, %v137
    %v139 = vrot.slane %v134, %v138
    %vm141 = vcmask 261120
    %v143 = vsel %vm141, %v129, 0
    %145 = vmatprep.subr.mxu0 0.0
    %146 = vmatpush1.msra.mxu0 %v130
    %147 = vmatprep.subr.mxu0 0.0
    %148 = vmatpush1.msra.mxu0 %v131
    %149 = vmatprep.subr.mxu0 0.0
    %150 = vmatpush1.msra.mxu0 %v132
    %151 = vmatprep.subr.mxu0 0.0
    %152 = vmatpush1.msra.mxu0 %v133
    %153 = vmatprep.subr.mxu0 0.0
    %154 = vmatpush1.msra.mxu0 0.0
    %155 = vmatprep.subr.mxu0 0.0
    %156 = vmatpush1.msra.mxu0 0.0
    %157 = vmatprep.subr.mxu0 0.0
    %158 = vmatpush1.msra.mxu0 0.0
    %159 = vmatprep.subr.mxu0 0.0
    %160 = vmatpush1.msra.mxu0 0.0
    %161 = vmatprep.subr.mxu0 0.0
    %162 = vmatpush1.msra.mxu0 0.0
    %163 = vmatprep.subr.mxu0 0.0
    %164 = vmatpush1.msra.mxu0 0.0
    %165 = vmatprep.subr.mxu0 0.0
    %166 = vmatpush1.msra.mxu0 0.0
    %167 = vmatprep.subr.mxu0 0.0
    %168 = vmatpush1.msra.mxu0 0.0
    %169 = vmatprep.subr.mxu0 0.0
    %170 = vmatpush1.msra.mxu0 0.0
    %171 = vmatprep.subr.mxu0 0.0
    %172 = vmatpush1.msra.mxu0 0.0
    %173 = vmatprep.subr.mxu0 0.0
    %174 = vmatpush1.msra.mxu0 0.0
    %175 = vmatprep.subr.mxu0 0.0
    %176 = vmatpush1.msra.mxu0 0.0
    %177 = vmatprep.subr.mxu0 0.0
    %178 = vmatpush1.msra.mxu0 0.0
    %179 = vmatprep.subr.mxu0 0.0
    %180 = vmatpush1.msra.mxu0 0.0
    %181 = vmatprep.subr.mxu0 0.0
    %182 = vmatpush1.msra.mxu0 0.0
    %183 = vmatprep.subr.mxu0 0.0
    %184 = vmatpush1.msra.mxu0 0.0
    %185 = vmatprep.subr.mxu0 0.0
    %186 = vmatpush1.msra.mxu0 0.0
    %187 = vmatprep.subr.mxu0 0.0
    %188 = vmatpush1.msra.mxu0 0.0
    %189 = vmatprep.subr.mxu0 0.0
    %190 = vmatpush1.msra.mxu0 0.0
    %191 = vmatprep.subr.mxu0 0.0
    %192 = vmatpush1.msra.mxu0 0.0
    %193 = vmatprep.subr.mxu0 0.0
    %194 = vmatpush1.msra.mxu0 0.0
    %195 = vmatprep.subr.mxu0 0.0
    %196 = vmatpush1.msra.mxu0 0.0
    %197 = vmatprep.subr.mxu0 0.0
    %198 = vmatpush1.msra.mxu0 0.0
    %199 = vmatprep.subr.mxu0 0.0
    %200 = vmatpush1.msra.mxu0 0.0
    %201 = vmatprep.subr.mxu0 0.0
    %202 = vmatpush1.msra.mxu0 0.0
    %203 = vmatprep.subr.mxu0 0.0
    %204 = vmatpush1.msra.mxu0 0.0
    %205 = vmatprep.subr.mxu0 0.0
    %206 = vmatpush1.msra.mxu0 0.0
    %207 = vmatprep.subr.mxu0 0.0
    %208 = vmatpush1.msra.mxu0 0.0
    %209 = vmatprep.mubr.f32.mxu0 0.0
    %210 = vmatmul.mubr.f32.gmra.mrb[0].mxu0 %v143
    %v211 = vpop.f32.mrb[0].mxu0
    %v212 = vadd.f32 %v139, %v211
    %v213 = vpop.f32.mrb[0].mxu0
    %214 = vdwg.mxu0
    %v217 = vunpack.c.l.s4 1966171168
    %v218 = vunpack.c.0.s8 %v217
    %v219 = vlaneseq
    %v220 = vshrl.u32 %v219, 7
    %v221 = vsub.s32 %v218, %v220
    %v222 = vrot.slane %v212, %v221
    %v223 = vcombine.high %v222, %v222
    %v225 = vunpack.c.l.s4 1966171168
    %v226 = vunpack.c.0.s8 %v225
    %v227 = vlaneseq
    %v228 = vshrl.u32 %v227, 7
    %v229 = vsub.s32 %v226, %v228
    %v230 = vrot.slane %v222, %v229
    %v232 = vunpack.c.l.s4 1966171168
    %v233 = vunpack.c.0.s8 %v232
    %v234 = vlaneseq
    %v235 = vshrl.u32 %v234, 7
    %v236 = vsub.s32 %v233, %v235
    %v237 = vrot.slane %v223, %v236
    %v238 = vsel %vm141, %v127, 0.0
    %239 = vadd.xlane.f32.xlu0 %v238
    %v240 = vpop.xlane.xlu0 %239
    %v241 = vsel %vm141, %v128, 0.0
    %242 = vadd.xlane.f32.xlu0 %v241
    %v243 = vpop.xlane.xlu0 %242
    %v244 = vrcp.pop 32.0
    %v245 = vmul.f32 %v240, %v244
    %v246 = vmul.f32 %v243, %v244
    %v247 = vsub.f32 %v127, %v245
    %v248 = vsub.f32 %v128, %v246
    %v249 = vmul.f32 %v247, %v247
    %v250 = vmul.f32 %v248, %v248
    %v251 = vsel %vm141, %v249, 0.0
    %252 = vadd.xlane.f32.xlu0 %v251
    %v253 = vpop.xlane.xlu0 %252
    %v254 = vsel %vm141, %v250, 0.0
    %255 = vadd.xlane.f32.xlu0 %v254
    %v256 = vpop.xlane.xlu0 %255
    %v257 = vmul.f32 %v253, %v244
    %v258 = vmul.f32 %v256, %v244
    %v259 = vadd.f32 %v257, 1e-05
    %v260 = vadd.f32 %v258, 1e-05
    %v261 = vrsqrt.pop %v259
    %v262 = vrsqrt.pop %v260
    %v263 = vmul.f32 %v247, %v261
    %v264 = vmul.f32 %v248, %v262
    %v265 = vlaneseq
    %v266 = vshrl.u32 %v265, 7
    %v267 = vsub.s32 0, %v266
    %v268 = vrot.slane %v230, %v267
    %v269 = vlaneseq
    %v270 = vshrl.u32 %v269, 7
    %v271 = vsub.s32 0, %v270
    %v272 = vrot.slane %v237, %v271
    %v275 = vmul.f32 %v263, %v268
    %v276 = vmul.f32 %v264, %v272
    %277 = vrot.lane.b32.xlu0 %v268, 96
    %v278 = vpop.permute.xlu0 %277
    %279 = vrot.lane.b32.xlu0 %v272, 96
    %v280 = vpop.permute.xlu0 %279
    %v283 = vadd.f32 %v275, %v278
    %v284 = vadd.f32 %v276, %v280
    %v285 = vld [vmem:[#allocation7] sm:$0xff]
    %v286 = vld [vmem:[#allocation7 + $0x8] sm:$0xff]
    %v287 = vld [vmem:[#allocation7 + $0x10] sm:$0xff]
    %v288 = vld [vmem:[#allocation7 + $0x18] sm:$0xff]
    %v289 = vld [vmem:[%s5] sm:$0x1]
    %v291 = vlaneseq
    %v292 = vshrl.u32 %v291, 7
    %v293 = vsub.s32 0, %v292
    %v294 = vrot.slane %v289, %v293
    %v297 = vsel %vm141, %v283, 0
    %v300 = vsel %vm141, %v284, 0
    %302 = vmatprep.subr.mxu0 0.0
    %303 = vmatpush1.msra.mxu0 %v285
    %304 = vmatprep.subr.mxu0 0.0
    %305 = vmatpush1.msra.mxu0 %v286
    %306 = vmatprep.subr.mxu0 0.0
    %307 = vmatpush1.msra.mxu0 %v287
    %308 = vmatprep.subr.mxu0 0.0
    %309 = vmatpush1.msra.mxu0 %v288
    %310 = vmatprep.subr.mxu0 0.0
    %311 = vmatpush1.msra.mxu0 0.0
    %312 = vmatprep.subr.mxu0 0.0
    %313 = vmatpush1.msra.mxu0 0.0
    %314 = vmatprep.subr.mxu0 0.0
    %315 = vmatpush1.msra.mxu0 0.0
    %316 = vmatprep.subr.mxu0 0.0
    %317 = vmatpush1.msra.mxu0 0.0
    %318 = vmatprep.subr.mxu0 0.0
    %319 = vmatpush1.msra.mxu0 0.0
    %320 = vmatprep.subr.mxu0 0.0
    %321 = vmatpush1.msra.mxu0 0.0
    %322 = vmatprep.subr.mxu0 0.0
    %323 = vmatpush1.msra.mxu0 0.0
    %324 = vmatprep.subr.mxu0 0.0
    %325 = vmatpush1.msra.mxu0 0.0
    %326 = vmatprep.subr.mxu0 0.0
    %327 = vmatpush1.msra.mxu0 0.0
    %328 = vmatprep.subr.mxu0 0.0
    %329 = vmatpush1.msra.mxu0 0.0
    %330 = vmatprep.subr.mxu0 0.0
    %331 = vmatpush1.msra.mxu0 0.0
    %332 = vmatprep.subr.mxu0 0.0
    %333 = vmatpush1.msra.mxu0 0.0
    %334 = vmatprep.subr.mxu0 0.0
    %335 = vmatpush1.msra.mxu0 0.0
    %336 = vmatprep.subr.mxu0 0.0
    %337 = vmatpush1.msra.mxu0 0.0
    %338 = vmatprep.subr.mxu0 0.0
    %339 = vmatpush1.msra.mxu0 0.0
    %340 = vmatprep.subr.mxu0 0.0
    %341 = vmatpush1.msra.mxu0 0.0
    %342 = vmatprep.subr.mxu0 0.0
    %343 = vmatpush1.msra.mxu0 0.0
    %344 = vmatprep.subr.mxu0 0.0
    %345 = vmatpush1.msra.mxu0 0.0
    %346 = vmatprep.subr.mxu0 0.0
    %347 = vmatpush1.msra.mxu0 0.0
    %348 = vmatprep.subr.mxu0 0.0
    %349 = vmatpush1.msra.mxu0 0.0
    %350 = vmatprep.subr.mxu0 0.0
    %351 = vmatpush1.msra.mxu0 0.0
    %352 = vmatprep.subr.mxu0 0.0
    %353 = vmatpush1.msra.mxu0 0.0
    %354 = vmatprep.subr.mxu0 0.0
    %355 = vmatpush1.msra.mxu0 0.0
    %356 = vmatprep.subr.mxu0 0.0
    %357 = vmatpush1.msra.mxu0 0.0
    %358 = vmatprep.subr.mxu0 0.0
    %359 = vmatpush1.msra.mxu0 0.0
    %360 = vmatprep.subr.mxu0 0.0
    %361 = vmatpush1.msra.mxu0 0.0
    %362 = vmatprep.subr.mxu0 0.0
    %363 = vmatpush1.msra.mxu0 0.0
    %364 = vmatprep.subr.mxu0 0.0
    %365 = vmatpush1.msra.mxu0 0.0
    %366 = vmatprep.mubr.f32.mxu0 0.0
    %367 = vmatmul.mubr.f32.gmra.mrb[0].mxu0 %v297
    %v368 = vpop.f32.mrb[0].mxu0
    %v369 = vadd.f32 %v294, %v368
    %v370 = vpop.f32.mrb[0].mxu0
    %371 = vmatprep.mubr.f32.mxu0 0.0
    %372 = vmatmul.mubr.f32.gmra.mrb[0].mxu0 %v300
    %v373 = vpop.f32.mrb[0].mxu0
    %v374 = vadd.f32 %v294, %v373
    %v375 = vpop.f32.mrb[0].mxu0
    %376 = vdwg.mxu0
    %v377 = vld [vmem:[#allocation8] sm:$0xff]
    %v378 = vld [vmem:[#allocation8 + $0x8] sm:$0xff]
    %v379 = vld [vmem:[#allocation8 + $0x10] sm:$0xff]
    %v380 = vld [vmem:[#allocation8 + $0x18] sm:$0xff]
    %v381 = vld [vmem:[%s7] sm:$0x1]
    %v383 = vlaneseq
    %v384 = vshrl.u32 %v383, 7
    %v385 = vsub.s32 0, %v384
    %v386 = vrot.slane %v381, %v385
    %388 = vmatprep.subr.mxu0 0.0
    %389 = vmatpush1.msra.mxu0 %v377
    %390 = vmatprep.subr.mxu0 0.0
    %391 = vmatpush1.msra.mxu0 %v378
    %392 = vmatprep.subr.mxu0 0.0
    %393 = vmatpush1.msra.mxu0 %v379
    %394 = vmatprep.subr.mxu0 0.0
    %395 = vmatpush1.msra.mxu0 %v380
    %396 = vmatprep.subr.mxu0 0.0
    %397 = vmatpush1.msra.mxu0 0.0
    %398 = vmatprep.subr.mxu0 0.0
    %399 = vmatpush1.msra.mxu0 0.0
    %400 = vmatprep.subr.mxu0 0.0
    %401 = vmatpush1.msra.mxu0 0.0
    %402 = vmatprep.subr.mxu0 0.0
    %403 = vmatpush1.msra.mxu0 0.0
    %404 = vmatprep.subr.mxu0 0.0
    %405 = vmatpush1.msra.mxu0 0.0
    %406 = vmatprep.subr.mxu0 0.0
    %407 = vmatpush1.msra.mxu0 0.0
    %408 = vmatprep.subr.mxu0 0.0
    %409 = vmatpush1.msra.mxu0 0.0
    %410 = vmatprep.subr.mxu0 0.0
    %411 = vmatpush1.msra.mxu0 0.0
    %412 = vmatprep.subr.mxu0 0.0
    %413 = vmatpush1.msra.mxu0 0.0
    %414 = vmatprep.subr.mxu0 0.0
    %415 = vmatpush1.msra.mxu0 0.0
    %416 = vmatprep.subr.mxu0 0.0
    %417 = vmatpush1.msra.mxu0 0.0
    %418 = vmatprep.subr.mxu0 0.0
    %419 = vmatpush1.msra.mxu0 0.0
    %420 = vmatprep.subr.mxu0 0.0
    %421 = vmatpush1.msra.mxu0 0.0
    %422 = vmatprep.subr.mxu0 0.0
    %423 = vmatpush1.msra.mxu0 0.0
    %424 = vmatprep.subr.mxu0 0.0
    %425 = vmatpush1.msra.mxu0 0.0
    %426 = vmatprep.subr.mxu0 0.0
    %427 = vmatpush1.msra.mxu0 0.0
    %428 = vmatprep.subr.mxu0 0.0
    %429 = vmatpush1.msra.mxu0 0.0
    %430 = vmatprep.subr.mxu0 0.0
    %431 = vmatpush1.msra.mxu0 0.0
    %432 = vmatprep.subr.mxu0 0.0
    %433 = vmatpush1.msra.mxu0 0.0
    %434 = vmatprep.subr.mxu0 0.0
    %435 = vmatpush1.msra.mxu0 0.0
    %436 = vmatprep.subr.mxu0 0.0
    %437 = vmatpush1.msra.mxu0 0.0
    %438 = vmatprep.subr.mxu0 0.0
    %439 = vmatpush1.msra.mxu0 0.0
    %440 = vmatprep.subr.mxu0 0.0
    %441 = vmatpush1.msra.mxu0 0.0
    %442 = vmatprep.subr.mxu0 0.0
    %443 = vmatpush1.msra.mxu0 0.0
    %444 = vmatprep.subr.mxu0 0.0
    %445 = vmatpush1.msra.mxu0 0.0
    %446 = vmatprep.subr.mxu0 0.0
    %447 = vmatpush1.msra.mxu0 0.0
    %448 = vmatprep.subr.mxu0 0.0
    %449 = vmatpush1.msra.mxu0 0.0
    %450 = vmatprep.subr.mxu0 0.0
    %451 = vmatpush1.msra.mxu0 0.0
    %452 = vmatprep.mubr.f32.mxu0 0.0
    %453 = vmatmul.mubr.f32.gmra.mrb[0].mxu0 %v297
    %v454 = vpop.f32.mrb[0].mxu0
    %v455 = vadd.f32 %v386, %v454
    %v456 = vpop.f32.mrb[0].mxu0
    %457 = vmatprep.mubr.f32.mxu0 0.0
    %458 = vmatmul.mubr.f32.gmra.mrb[0].mxu0 %v300
    %v459 = vpop.f32.mrb[0].mxu0
    %v460 = vadd.f32 %v386, %v459
    %v461 = vpop.f32.mrb[0].mxu0
    %462 = vdwg.mxu0
    %464 = vrot.lane.b32.xlu0 %v369, 96
    %v465 = vpop.permute.xlu0 %464
    %vm466 = vcmask 64512
    %v467 = vsel %vm466, %v369, 0
    %v469 = vsel %vm466, %v465, 0
    %471 = vmatprep.subr.mxu0 0.0
    %472 = vmatpush1.xpose.msra.mxu0 %v469
    %473 = vmatprep.subr.mxu0 0.0
    %474 = vmatpush1.xpose.msra.mxu0 0.0
    %475 = vmatprep.subr.mxu0 0.0
    %476 = vmatpush1.xpose.msra.mxu0 0.0
    %477 = vmatprep.subr.mxu0 0.0
    %478 = vmatpush1.xpose.msra.mxu0 0.0
    %479 = vmatprep.subr.mxu0 0.0
    %480 = vmatpush1.xpose.msra.mxu0 0.0
    %481 = vmatprep.subr.mxu0 0.0
    %482 = vmatpush1.xpose.msra.mxu0 0.0
    %483 = vmatprep.subr.mxu0 0.0
    %484 = vmatpush1.xpose.msra.mxu0 0.0
    %485 = vmatprep.subr.mxu0 0.0
    %486 = vmatpush1.xpose.msra.mxu0 0.0
    %487 = vmatprep.subr.mxu0 0.0
    %488 = vmatpush1.xpose.msra.mxu0 0.0
    %489 = vmatprep.subr.mxu0 0.0
    %490 = vmatpush1.xpose.msra.mxu0 0.0
    %491 = vmatprep.subr.mxu0 0.0
    %492 = vmatpush1.xpose.msra.mxu0 0.0
    %493 = vmatprep.subr.mxu0 0.0
    %494 = vmatpush1.xpose.msra.mxu0 0.0
    %495 = vmatprep.subr.mxu0 0.0
    %496 = vmatpush1.xpose.msra.mxu0 0.0
    %497 = vmatprep.subr.mxu0 0.0
    %498 = vmatpush1.xpose.msra.mxu0 0.0
    %499 = vmatprep.subr.mxu0 0.0
    %500 = vmatpush1.xpose.msra.mxu0 0.0
    %501 = vmatprep.subr.mxu0 0.0
    %502 = vmatpush1.xpose.msra.mxu0 0.0
    %503 = vmatprep.subr.mxu0 0.0
    %504 = vmatpush1.xpose.msra.mxu0 0.0
    %505 = vmatprep.subr.mxu0 0.0
    %506 = vmatpush1.xpose.msra.mxu0 0.0
    %507 = vmatprep.subr.mxu0 0.0
    %508 = vmatpush1.xpose.msra.mxu0 0.0
    %509 = vmatprep.subr.mxu0 0.0
    %510 = vmatpush1.xpose.msra.mxu0 0.0
    %511 = vmatprep.subr.mxu0 0.0
    %512 = vmatpush1.xpose.msra.mxu0 0.0
    %513 = vmatprep.subr.mxu0 0.0
    %514 = vmatpush1.xpose.msra.mxu0 0.0
    %515 = vmatprep.subr.mxu0 0.0
    %516 = vmatpush1.xpose.msra.mxu0 0.0
    %517 = vmatprep.subr.mxu0 0.0
    %518 = vmatpush1.xpose.msra.mxu0 0.0
    %519 = vmatprep.subr.mxu0 0.0
    %520 = vmatpush1.xpose.msra.mxu0 0.0
    %521 = vmatprep.subr.mxu0 0.0
    %522 = vmatpush1.xpose.msra.mxu0 0.0
    %523 = vmatprep.subr.mxu0 0.0
    %524 = vmatpush1.xpose.msra.mxu0 0.0
    %525 = vmatprep.subr.mxu0 0.0
    %526 = vmatpush1.xpose.msra.mxu0 0.0
    %527 = vmatprep.subr.mxu0 0.0
    %528 = vmatpush1.xpose.msra.mxu0 0.0
    %529 = vmatprep.subr.mxu0 0.0
    %530 = vmatpush1.xpose.msra.mxu0 0.0
    %531 = vmatprep.subr.mxu0 0.0
    %532 = vmatpush1.xpose.msra.mxu0 0.0
    %533 = vmatprep.subr.mxu0 0.0
    %534 = vmatpush1.xpose.msra.mxu0 0.0
    %535 = vmatprep.mubr.f32.mxu0 0.0
    %536 = vmatmul.mubr.f32.gmra.mrb[0].mxu0 %v467
    %v537 = vpop.f32.mrb[0].mxu0
    %v538 = vadd.f32 0.0, %v537
    %v539 = vpop.f32.mrb[0].mxu0
    %540 = vdwg.mxu0
    %542 = vrot.lane.b32.xlu0 %v374, 96
    %v543 = vpop.permute.xlu0 %542
    %v544 = vsel %vm466, %v374, 0
    %v546 = vsel %vm466, %v543, 0
    %548 = vmatprep.subr.mxu0 0.0
    %549 = vmatpush1.xpose.msra.mxu0 %v546
    %550 = vmatprep.subr.mxu0 0.0
    %551 = vmatpush1.xpose.msra.mxu0 0.0
    %552 = vmatprep.subr.mxu0 0.0
    %553 = vmatpush1.xpose.msra.mxu0 0.0
    %554 = vmatprep.subr.mxu0 0.0
    %555 = vmatpush1.xpose.msra.mxu0 0.0
    %556 = vmatprep.subr.mxu0 0.0
    %557 = vmatpush1.xpose.msra.mxu0 0.0
    %558 = vmatprep.subr.mxu0 0.0
    %559 = vmatpush1.xpose.msra.mxu0 0.0
    %560 = vmatprep.subr.mxu0 0.0
    %561 = vmatpush1.xpose.msra.mxu0 0.0
    %562 = vmatprep.subr.mxu0 0.0
    %563 = vmatpush1.xpose.msra.mxu0 0.0
    %564 = vmatprep.subr.mxu0 0.0
    %565 = vmatpush1.xpose.msra.mxu0 0.0
    %566 = vmatprep.subr.mxu0 0.0
    %567 = vmatpush1.xpose.msra.mxu0 0.0
    %568 = vmatprep.subr.mxu0 0.0
    %569 = vmatpush1.xpose.msra.mxu0 0.0
    %570 = vmatprep.subr.mxu0 0.0
    %571 = vmatpush1.xpose.msra.mxu0 0.0
    %572 = vmatprep.subr.mxu0 0.0
    %573 = vmatpush1.xpose.msra.mxu0 0.0
    %574 = vmatprep.subr.mxu0 0.0
    %575 = vmatpush1.xpose.msra.mxu0 0.0
    %576 = vmatprep.subr.mxu0 0.0
    %577 = vmatpush1.xpose.msra.mxu0 0.0
    %578 = vmatprep.subr.mxu0 0.0
    %579 = vmatpush1.xpose.msra.mxu0 0.0
    %580 = vmatprep.subr.mxu0 0.0
    %581 = vmatpush1.xpose.msra.mxu0 0.0
    %582 = vmatprep.subr.mxu0 0.0
    %583 = vmatpush1.xpose.msra.mxu0 0.0
    %584 = vmatprep.subr.mxu0 0.0
    %585 = vmatpush1.xpose.msra.mxu0 0.0
    %586 = vmatprep.subr.mxu0 0.0
    %587 = vmatpush1.xpose.msra.mxu0 0.0
    %588 = vmatprep.subr.mxu0 0.0
    %589 = vmatpush1.xpose.msra.mxu0 0.0
    %590 = vmatprep.subr.mxu0 0.0
    %591 = vmatpush1.xpose.msra.mxu0 0.0
    %592 = vmatprep.subr.mxu0 0.0
    %593 = vmatpush1.xpose.msra.mxu0 0.0
    %594 = vmatprep.subr.mxu0 0.0
    %595 = vmatpush1.xpose.msra.mxu0 0.0
    %596 = vmatprep.subr.mxu0 0.0
    %597 = vmatpush1.xpose.msra.mxu0 0.0
    %598 = vmatprep.subr.mxu0 0.0
    %599 = vmatpush1.xpose.msra.mxu0 0.0
    %600 = vmatprep.subr.mxu0 0.0
    %601 = vmatpush1.xpose.msra.mxu0 0.0
    %602 = vmatprep.subr.mxu0 0.0
    %603 = vmatpush1.xpose.msra.mxu0 0.0
    %604 = vmatprep.subr.mxu0 0.0
    %605 = vmatpush1.xpose.msra.mxu0 0.0
    %606 = vmatprep.subr.mxu0 0.0
    %607 = vmatpush1.xpose.msra.mxu0 0.0
    %608 = vmatprep.subr.mxu0 0.0
    %609 = vmatpush1.xpose.msra.mxu0 0.0
    %610 = vmatprep.subr.mxu0 0.0
    %611 = vmatpush1.xpose.msra.mxu0 0.0
    %612 = vmatprep.mubr.f32.mxu0 0.0
    %613 = vmatmul.mubr.f32.gmra.mrb[0].mxu0 %v544
    %v614 = vpop.f32.mrb[0].mxu0
    %v615 = vadd.f32 0.0, %v614
    %v616 = vpop.f32.mrb[0].mxu0
    %617 = vdwg.mxu0
    %v618 = vsel %vm466, %v538, -inf
    %619 = vmax.xlane.f32.xlu0 %v618
    %v620 = vpop.xlane.xlu0 %619
    %v621 = vsel %vm466, %v615, -inf
    %622 = vmax.xlane.f32.xlu0 %v621
    %v623 = vpop.xlane.xlu0 %622
    %v624 = vsub.f32 %v538, %v620
    %v625 = vsub.f32 %v615, %v623
    %v626 = vmul.f32 %v624, 1.442695
    %v627 = vpow.pop %v626
    %v628 = vmul.f32 %v625, 1.442695
    %v629 = vpow.pop %v628
    %v630 = vsel %vm466, %v627, 0.0
    %631 = vadd.xlane.f32.xlu0 %v630
    %v632 = vpop.xlane.xlu0 %631
    %v633 = vsel %vm466, %v629, 0.0
    %634 = vadd.xlane.f32.xlu0 %v633
    %v635 = vpop.xlane.xlu0 %634
    %v636 = vrcp.pop %v632
    %v637 = vrcp.pop %v635
    %v638 = vmul.f32 %v627, %v636
    %v639 = vmul.f32 %v629, %v637
    %640 = vrot.lane.b32.xlu0 %v369, 120
    %v641 = vpop.permute.xlu0 %640
    %642 = vrot.lane.b32.xlu0 %v369, 88
    %v643 = vpop.permute.xlu0 %642
    %v644 = vsel %vm466, %v641, 0
    %v646 = vsel %vm466, %v643, 0
    %648 = vmatprep.subr.mxu0 0.0
    %649 = vmatpush1.xpose.msra.mxu0 %v646
    %650 = vmatprep.subr.mxu0 0.0
    %651 = vmatpush1.xpose.msra.mxu0 0.0
    %652 = vmatprep.subr.mxu0 0.0
    %653 = vmatpush1.xpose.msra.mxu0 0.0
    %654 = vmatprep.subr.mxu0 0.0
    %655 = vmatpush1.xpose.msra.mxu0 0.0
    %656 = vmatprep.subr.mxu0 0.0
    %657 = vmatpush1.xpose.msra.mxu0 0.0
    %658 = vmatprep.subr.mxu0 0.0
    %659 = vmatpush1.xpose.msra.mxu0 0.0
    %660 = vmatprep.subr.mxu0 0.0
    %661 = vmatpush1.xpose.msra.mxu0 0.0
    %662 = vmatprep.subr.mxu0 0.0
    %663 = vmatpush1.xpose.msra.mxu0 0.0
    %664 = vmatprep.subr.mxu0 0.0
    %665 = vmatpush1.xpose.msra.mxu0 0.0
    %666 = vmatprep.subr.mxu0 0.0
    %667 = vmatpush1.xpose.msra.mxu0 0.0
    %668 = vmatprep.subr.mxu0 0.0
    %669 = vmatpush1.xpose.msra.mxu0 0.0
    %670 = vmatprep.subr.mxu0 0.0
    %671 = vmatpush1.xpose.msra.mxu0 0.0
    %672 = vmatprep.subr.mxu0 0.0
    %673 = vmatpush1.xpose.msra.mxu0 0.0
    %674 = vmatprep.subr.mxu0 0.0
    %675 = vmatpush1.xpose.msra.mxu0 0.0
    %676 = vmatprep.subr.mxu0 0.0
    %677 = vmatpush1.xpose.msra.mxu0 0.0
    %678 = vmatprep.subr.mxu0 0.0
    %679 = vmatpush1.xpose.msra.mxu0 0.0
    %680 = vmatprep.subr.mxu0 0.0
    %681 = vmatpush1.xpose.msra.mxu0 0.0
    %682 = vmatprep.subr.mxu0 0.0
    %683 = vmatpush1.xpose.msra.mxu0 0.0
    %684 = vmatprep.subr.mxu0 0.0
    %685 = vmatpush1.xpose.msra.mxu0 0.0
    %686 = vmatprep.subr.mxu0 0.0
    %687 = vmatpush1.xpose.msra.mxu0 0.0
    %688 = vmatprep.subr.mxu0 0.0
    %689 = vmatpush1.xpose.msra.mxu0 0.0
    %690 = vmatprep.subr.mxu0 0.0
    %691 = vmatpush1.xpose.msra.mxu0 0.0
    %692 = vmatprep.subr.mxu0 0.0
    %693 = vmatpush1.xpose.msra.mxu0 0.0
    %694 = vmatprep.subr.mxu0 0.0
    %695 = vmatpush1.xpose.msra.mxu0 0.0
    %696 = vmatprep.subr.mxu0 0.0
    %697 = vmatpush1.xpose.msra.mxu0 0.0
    %698 = vmatprep.subr.mxu0 0.0
    %699 = vmatpush1.xpose.msra.mxu0 0.0
    %700 = vmatprep.subr.mxu0 0.0
    %701 = vmatpush1.xpose.msra.mxu0 0.0
    %702 = vmatprep.subr.mxu0 0.0
    %703 = vmatpush1.xpose.msra.mxu0 0.0
    %704 = vmatprep.subr.mxu0 0.0
    %705 = vmatpush1.xpose.msra.mxu0 0.0
    %706 = vmatprep.subr.mxu0 0.0
    %707 = vmatpush1.xpose.msra.mxu0 0.0
    %708 = vmatprep.subr.mxu0 0.0
    %709 = vmatpush1.xpose.msra.mxu0 0.0
    %710 = vmatprep.subr.mxu0 0.0
    %711 = vmatpush1.xpose.msra.mxu0 0.0
    %712 = vmatprep.mubr.f32.mxu0 0.0
    %713 = vmatmul.mubr.f32.gmra.mrb[0].mxu0 %v644
    %v714 = vpop.f32.mrb[0].mxu0
    %v715 = vadd.f32 0.0, %v714
    %v716 = vpop.f32.mrb[0].mxu0
    %717 = vdwg.mxu0
    %718 = vrot.lane.b32.xlu0 %v374, 120
    %v719 = vpop.permute.xlu0 %718
    %720 = vrot.lane.b32.xlu0 %v374, 88
    %v721 = vpop.permute.xlu0 %720
    %v722 = vsel %vm466, %v719, 0
    %v724 = vsel %vm466, %v721, 0
    %726 = vmatprep.subr.mxu0 0.0
    %727 = vmatpush1.xpose.msra.mxu0 %v724
    %728 = vmatprep.subr.mxu0 0.0
    %729 = vmatpush1.xpose.msra.mxu0 0.0
    %730 = vmatprep.subr.mxu0 0.0
    %731 = vmatpush1.xpose.msra.mxu0 0.0
    %732 = vmatprep.subr.mxu0 0.0
    %733 = vmatpush1.xpose.msra.mxu0 0.0
    %734 = vmatprep.subr.mxu0 0.0
    %735 = vmatpush1.xpose.msra.mxu0 0.0
    %736 = vmatprep.subr.mxu0 0.0
    %737 = vmatpush1.xpose.msra.mxu0 0.0
    %738 = vmatprep.subr.mxu0 0.0
    %739 = vmatpush1.xpose.msra.mxu0 0.0
    %740 = vmatprep.subr.mxu0 0.0
    %741 = vmatpush1.xpose.msra.mxu0 0.0
    %742 = vmatprep.subr.mxu0 0.0
    %743 = vmatpush1.xpose.msra.mxu0 0.0
    %744 = vmatprep.subr.mxu0 0.0
    %745 = vmatpush1.xpose.msra.mxu0 0.0
    %746 = vmatprep.subr.mxu0 0.0
    %747 = vmatpush1.xpose.msra.mxu0 0.0
    %748 = vmatprep.subr.mxu0 0.0
    %749 = vmatpush1.xpose.msra.mxu0 0.0
    %750 = vmatprep.subr.mxu0 0.0
    %751 = vmatpush1.xpose.msra.mxu0 0.0
    %752 = vmatprep.subr.mxu0 0.0
    %753 = vmatpush1.xpose.msra.mxu0 0.0
    %754 = vmatprep.subr.mxu0 0.0
    %755 = vmatpush1.xpose.msra.mxu0 0.0
    %756 = vmatprep.subr.mxu0 0.0
    %757 = vmatpush1.xpose.msra.mxu0 0.0
    %758 = vmatprep.subr.mxu0 0.0
    %759 = vmatpush1.xpose.msra.mxu0 0.0
    %760 = vmatprep.subr.mxu0 0.0
    %761 = vmatpush1.xpose.msra.mxu0 0.0
    %762 = vmatprep.subr.mxu0 0.0
    %763 = vmatpush1.xpose.msra.mxu0 0.0
    %764 = vmatprep.subr.mxu0 0.0
    %765 = vmatpush1.xpose.msra.mxu0 0.0
    %766 = vmatprep.subr.mxu0 0.0
    %767 = vmatpush1.xpose.msra.mxu0 0.0
    %768 = vmatprep.subr.mxu0 0.0
    %769 = vmatpush1.xpose.msra.mxu0 0.0
    %770 = vmatprep.subr.mxu0 0.0
    %771 = vmatpush1.xpose.msra.mxu0 0.0
    %772 = vmatprep.subr.mxu0 0.0
    %773 = vmatpush1.xpose.msra.mxu0 0.0
    %774 = vmatprep.subr.mxu0 0.0
    %775 = vmatpush1.xpose.msra.mxu0 0.0
    %776 = vmatprep.subr.mxu0 0.0
    %777 = vmatpush1.xpose.msra.mxu0 0.0
    %778 = vmatprep.subr.mxu0 0.0
    %779 = vmatpush1.xpose.msra.mxu0 0.0
    %780 = vmatprep.subr.mxu0 0.0
    %781 = vmatpush1.xpose.msra.mxu0 0.0
    %782 = vmatprep.subr.mxu0 0.0
    %783 = vmatpush1.xpose.msra.mxu0 0.0
    %784 = vmatprep.subr.mxu0 0.0
    %785 = vmatpush1.xpose.msra.mxu0 0.0
    %786 = vmatprep.subr.mxu0 0.0
    %787 = vmatpush1.xpose.msra.mxu0 0.0
    %788 = vmatprep.subr.mxu0 0.0
    %789 = vmatpush1.xpose.msra.mxu0 0.0
    %790 = vmatprep.mubr.f32.mxu0 0.0
    %791 = vmatmul.mubr.f32.gmra.mrb[0].mxu0 %v722
    %v792 = vpop.f32.mrb[0].mxu0
    %v793 = vadd.f32 0.0, %v792
    %v794 = vpop.f32.mrb[0].mxu0
    %795 = vdwg.mxu0
    %v796 = vsel %vm466, %v715, -inf
    %797 = vmax.xlane.f32.xlu0 %v796
    %v798 = vpop.xlane.xlu0 %797
    %v799 = vsel %vm466, %v793, -inf
    %800 = vmax.xlane.f32.xlu0 %v799
    %v801 = vpop.xlane.xlu0 %800
    %v802 = vsub.f32 %v715, %v798
    %v803 = vsub.f32 %v793, %v801
    %v804 = vmul.f32 %v802, 1.442695
    %v805 = vpow.pop %v804
    %v806 = vmul.f32 %v803, 1.442695
    %v807 = vpow.pop %v806
    %v808 = vsel %vm466, %v805, 0.0
    %809 = vadd.xlane.f32.xlu0 %v808
    %v810 = vpop.xlane.xlu0 %809
    %v811 = vsel %vm466, %v807, 0.0
    %812 = vadd.xlane.f32.xlu0 %v811
    %v813 = vpop.xlane.xlu0 %812
    %v814 = vrcp.pop %v810
    %v815 = vrcp.pop %v813
    %v816 = vmul.f32 %v805, %v814
    %v817 = vmul.f32 %v807, %v815
    %819 = vrot.lane.b32.xlu0 %v455, 96
    %v820 = vpop.permute.xlu0 %819
    %v823 = vsel %vm466, %v816, 0
    %825 = vmatprep.subr.mxu0 0.0
    %826 = vmatpush1.msra.mxu0 %v820
    %827 = vmatprep.subr.mxu0 0.0
    %828 = vmatpush1.msra.mxu0 0.0
    %829 = vmatprep.subr.mxu0 0.0
    %830 = vmatpush1.msra.mxu0 0.0
    %831 = vmatprep.subr.mxu0 0.0
    %832 = vmatpush1.msra.mxu0 0.0
    %833 = vmatprep.subr.mxu0 0.0
    %834 = vmatpush1.msra.mxu0 0.0
    %835 = vmatprep.subr.mxu0 0.0
    %836 = vmatpush1.msra.mxu0 0.0
    %837 = vmatprep.subr.mxu0 0.0
    %838 = vmatpush1.msra.mxu0 0.0
    %839 = vmatprep.subr.mxu0 0.0
    %840 = vmatpush1.msra.mxu0 0.0
    %841 = vmatprep.subr.mxu0 0.0
    %842 = vmatpush1.msra.mxu0 0.0
    %843 = vmatprep.subr.mxu0 0.0
    %844 = vmatpush1.msra.mxu0 0.0
    %845 = vmatprep.subr.mxu0 0.0
    %846 = vmatpush1.msra.mxu0 0.0
    %847 = vmatprep.subr.mxu0 0.0
    %848 = vmatpush1.msra.mxu0 0.0
    %849 = vmatprep.subr.mxu0 0.0
    %850 = vmatpush1.msra.mxu0 0.0
    %851 = vmatprep.subr.mxu0 0.0
    %852 = vmatpush1.msra.mxu0 0.0
    %853 = vmatprep.subr.mxu0 0.0
    %854 = vmatpush1.msra.mxu0 0.0
    %855 = vmatprep.subr.mxu0 0.0
    %856 = vmatpush1.msra.mxu0 0.0
    %857 = vmatprep.subr.mxu0 0.0
    %858 = vmatpush1.msra.mxu0 0.0
    %859 = vmatprep.subr.mxu0 0.0
    %860 = vmatpush1.msra.mxu0 0.0
    %861 = vmatprep.subr.mxu0 0.0
    %862 = vmatpush1.msra.mxu0 0.0
    %863 = vmatprep.subr.mxu0 0.0
    %864 = vmatpush1.msra.mxu0 0.0
    %865 = vmatprep.subr.mxu0 0.0
    %866 = vmatpush1.msra.mxu0 0.0
    %867 = vmatprep.subr.mxu0 0.0
    %868 = vmatpush1.msra.mxu0 0.0
    %869 = vmatprep.subr.mxu0 0.0
    %870 = vmatpush1.msra.mxu0 0.0
    %871 = vmatprep.subr.mxu0 0.0
    %872 = vmatpush1.msra.mxu0 0.0
    %873 = vmatprep.subr.mxu0 0.0
    %874 = vmatpush1.msra.mxu0 0.0
    %875 = vmatprep.subr.mxu0 0.0
    %876 = vmatpush1.msra.mxu0 0.0
    %877 = vmatprep.subr.mxu0 0.0
    %878 = vmatpush1.msra.mxu0 0.0
    %879 = vmatprep.subr.mxu0 0.0
    %880 = vmatpush1.msra.mxu0 0.0
    %881 = vmatprep.subr.mxu0 0.0
    %882 = vmatpush1.msra.mxu0 0.0
    %883 = vmatprep.subr.mxu0 0.0
    %884 = vmatpush1.msra.mxu0 0.0
    %885 = vmatprep.subr.mxu0 0.0
    %886 = vmatpush1.msra.mxu0 0.0
    %887 = vmatprep.subr.mxu0 0.0
    %888 = vmatpush1.msra.mxu0 0.0
    %889 = vmatprep.mubr.f32.mxu0 0.0
    %890 = vmatmul.mubr.f32.gmra.mrb[0].mxu0 %v823
    %v891 = vpop.f32.mrb[0].mxu0
    %v892 = vadd.f32 0.0, %v891
    %v893 = vpop.f32.mrb[0].mxu0
    %894 = vdwg.mxu0
    %896 = vrot.lane.b32.xlu0 %v460, 96
    %v897 = vpop.permute.xlu0 %896
    %v900 = vsel %vm466, %v817, 0
    %902 = vmatprep.subr.mxu0 0.0
    %903 = vmatpush1.msra.mxu0 %v897
    %904 = vmatprep.subr.mxu0 0.0
    %905 = vmatpush1.msra.mxu0 0.0
    %906 = vmatprep.subr.mxu0 0.0
    %907 = vmatpush1.msra.mxu0 0.0
    %908 = vmatprep.subr.mxu0 0.0
    %909 = vmatpush1.msra.mxu0 0.0
    %910 = vmatprep.subr.mxu0 0.0
    %911 = vmatpush1.msra.mxu0 0.0
    %912 = vmatprep.subr.mxu0 0.0
    %913 = vmatpush1.msra.mxu0 0.0
    %914 = vmatprep.subr.mxu0 0.0
    %915 = vmatpush1.msra.mxu0 0.0
    %916 = vmatprep.subr.mxu0 0.0
    %917 = vmatpush1.msra.mxu0 0.0
    %918 = vmatprep.subr.mxu0 0.0
    %919 = vmatpush1.msra.mxu0 0.0
    %920 = vmatprep.subr.mxu0 0.0
    %921 = vmatpush1.msra.mxu0 0.0
    %922 = vmatprep.subr.mxu0 0.0
    %923 = vmatpush1.msra.mxu0 0.0
    %924 = vmatprep.subr.mxu0 0.0
    %925 = vmatpush1.msra.mxu0 0.0
    %926 = vmatprep.subr.mxu0 0.0
    %927 = vmatpush1.msra.mxu0 0.0
    %928 = vmatprep.subr.mxu0 0.0
    %929 = vmatpush1.msra.mxu0 0.0
    %930 = vmatprep.subr.mxu0 0.0
    %931 = vmatpush1.msra.mxu0 0.0
    %932 = vmatprep.subr.mxu0 0.0
    %933 = vmatpush1.msra.mxu0 0.0
    %934 = vmatprep.subr.mxu0 0.0
    %935 = vmatpush1.msra.mxu0 0.0
    %936 = vmatprep.subr.mxu0 0.0
    %937 = vmatpush1.msra.mxu0 0.0
    %938 = vmatprep.subr.mxu0 0.0
    %939 = vmatpush1.msra.mxu0 0.0
    %940 = vmatprep.subr.mxu0 0.0
    %941 = vmatpush1.msra.mxu0 0.0
    %942 = vmatprep.subr.mxu0 0.0
    %943 = vmatpush1.msra.mxu0 0.0
    %944 = vmatprep.subr.mxu0 0.0
    %945 = vmatpush1.msra.mxu0 0.0
    %946 = vmatprep.subr.mxu0 0.0
    %947 = vmatpush1.msra.mxu0 0.0
    %948 = vmatprep.subr.mxu0 0.0
    %949 = vmatpush1.msra.mxu0 0.0
    %950 = vmatprep.subr.mxu0 0.0
    %951 = vmatpush1.msra.mxu0 0.0
    %952 = vmatprep.subr.mxu0 0.0
    %953 = vmatpush1.msra.mxu0 0.0
    %954 = vmatprep.subr.mxu0 0.0
    %955 = vmatpush1.msra.mxu0 0.0
    %956 = vmatprep.subr.mxu0 0.0
    %957 = vmatpush1.msra.mxu0 0.0
    %958 = vmatprep.subr.mxu0 0.0
    %959 = vmatpush1.msra.mxu0 0.0
    %960 = vmatprep.subr.mxu0 0.0
    %961 = vmatpush1.msra.mxu0 0.0
    %962 = vmatprep.subr.mxu0 0.0
    %963 = vmatpush1.msra.mxu0 0.0
    %964 = vmatprep.subr.mxu0 0.0
    %965 = vmatpush1.msra.mxu0 0.0
    %966 = vmatprep.mubr.f32.mxu0 0.0
    %967 = vmatmul.mubr.f32.gmra.mrb[0].mxu0 %v900
    %v968 = vpop.f32.mrb[0].mxu0
    %v969 = vadd.f32 0.0, %v968
    %v970 = vpop.f32.mrb[0].mxu0
    %971 = vdwg.mxu0
    %v973 = vsel %vm466, %v638, 0
    %975 = vmatprep.subr.mxu0 0.0
    %976 = vmatpush1.msra.mxu0 %v455
    %977 = vmatprep.subr.mxu0 0.0
    %978 = vmatpush1.msra.mxu0 0.0
    %979 = vmatprep.subr.mxu0 0.0
    %980 = vmatpush1.msra.mxu0 0.0
    %981 = vmatprep.subr.mxu0 0.0
    %982 = vmatpush1.msra.mxu0 0.0
    %983 = vmatprep.subr.mxu0 0.0
    %984 = vmatpush1.msra.mxu0 0.0
    %985 = vmatprep.subr.mxu0 0.0
    %986 = vmatpush1.msra.mxu0 0.0
    %987 = vmatprep.subr.mxu0 0.0
    %988 = vmatpush1.msra.mxu0 0.0
    %989 = vmatprep.subr.mxu0 0.0
    %990 = vmatpush1.msra.mxu0 0.0
    %991 = vmatprep.subr.mxu0 0.0
    %992 = vmatpush1.msra.mxu0 0.0
    %993 = vmatprep.subr.mxu0 0.0
    %994 = vmatpush1.msra.mxu0 0.0
    %995 = vmatprep.subr.mxu0 0.0
    %996 = vmatpush1.msra.mxu0 0.0
    %997 = vmatprep.subr.mxu0 0.0
    %998 = vmatpush1.msra.mxu0 0.0
    %999 = vmatprep.subr.mxu0 0.0
    %1000 = vmatpush1.msra.mxu0 0.0
    %1001 = vmatprep.subr.mxu0 0.0
    %1002 = vmatpush1.msra.mxu0 0.0
    %1003 = vmatprep.subr.mxu0 0.0
    %1004 = vmatpush1.msra.mxu0 0.0
    %1005 = vmatprep.subr.mxu0 0.0
    %1006 = vmatpush1.msra.mxu0 0.0
    %1007 = vmatprep.subr.mxu0 0.0
    %1008 = vmatpush1.msra.mxu0 0.0
    %1009 = vmatprep.subr.mxu0 0.0
    %1010 = vmatpush1.msra.mxu0 0.0
    %1011 = vmatprep.subr.mxu0 0.0
    %1012 = vmatpush1.msra.mxu0 0.0
    %1013 = vmatprep.subr.mxu0 0.0
    %1014 = vmatpush1.msra.mxu0 0.0
    %1015 = vmatprep.subr.mxu0 0.0
    %1016 = vmatpush1.msra.mxu0 0.0
    %1017 = vmatprep.subr.mxu0 0.0
    %1018 = vmatpush1.msra.mxu0 0.0
    %1019 = vmatprep.subr.mxu0 0.0
    %1020 = vmatpush1.msra.mxu0 0.0
    %1021 = vmatprep.subr.mxu0 0.0
    %1022 = vmatpush1.msra.mxu0 0.0
    %1023 = vmatprep.subr.mxu0 0.0
    %1024 = vmatpush1.msra.mxu0 0.0
    %1025 = vmatprep.subr.mxu0 0.0
    %1026 = vmatpush1.msra.mxu0 0.0
    %1027 = vmatprep.subr.mxu0 0.0
    %1028 = vmatpush1.msra.mxu0 0.0
    %1029 = vmatprep.subr.mxu0 0.0
    %1030 = vmatpush1.msra.mxu0 0.0
    %1031 = vmatprep.subr.mxu0 0.0
    %1032 = vmatpush1.msra.mxu0 0.0
    %1033 = vmatprep.subr.mxu0 0.0
    %1034 = vmatpush1.msra.mxu0 0.0
    %1035 = vmatprep.subr.mxu0 0.0
    %1036 = vmatpush1.msra.mxu0 0.0
    %1037 = vmatprep.subr.mxu0 0.0
    %1038 = vmatpush1.msra.mxu0 0.0
    %1039 = vmatprep.mubr.f32.mxu0 0.0
    %1040 = vmatmul.mubr.f32.gmra.mrb[0].mxu0 %v973
    %v1041 = vpop.f32.mrb[0].mxu0
    %v1042 = vadd.f32 %v892, %v1041
    %v1043 = vpop.f32.mrb[0].mxu0
    %1044 = vdwg.mxu0
    %v1046 = vsel %vm466, %v639, 0
    %1048 = vmatprep.subr.mxu0 0.0
    %1049 = vmatpush1.msra.mxu0 %v460
    %1050 = vmatprep.subr.mxu0 0.0
    %1051 = vmatpush1.msra.mxu0 0.0
    %1052 = vmatprep.subr.mxu0 0.0
    %1053 = vmatpush1.msra.mxu0 0.0
    %1054 = vmatprep.subr.mxu0 0.0
    %1055 = vmatpush1.msra.mxu0 0.0
    %1056 = vmatprep.subr.mxu0 0.0
    %1057 = vmatpush1.msra.mxu0 0.0
    %1058 = vmatprep.subr.mxu0 0.0
    %1059 = vmatpush1.msra.mxu0 0.0
    %1060 = vmatprep.subr.mxu0 0.0
    %1061 = vmatpush1.msra.mxu0 0.0
    %1062 = vmatprep.subr.mxu0 0.0
    %1063 = vmatpush1.msra.mxu0 0.0
    %1064 = vmatprep.subr.mxu0 0.0
    %1065 = vmatpush1.msra.mxu0 0.0
    %1066 = vmatprep.subr.mxu0 0.0
    %1067 = vmatpush1.msra.mxu0 0.0
    %1068 = vmatprep.subr.mxu0 0.0
    %1069 = vmatpush1.msra.mxu0 0.0
    %1070 = vmatprep.subr.mxu0 0.0
    %1071 = vmatpush1.msra.mxu0 0.0
    %1072 = vmatprep.subr.mxu0 0.0
    %1073 = vmatpush1.msra.mxu0 0.0
    %1074 = vmatprep.subr.mxu0 0.0
    %1075 = vmatpush1.msra.mxu0 0.0
    %1076 = vmatprep.subr.mxu0 0.0
    %1077 = vmatpush1.msra.mxu0 0.0
    %1078 = vmatprep.subr.mxu0 0.0
    %1079 = vmatpush1.msra.mxu0 0.0
    %1080 = vmatprep.subr.mxu0 0.0
    %1081 = vmatpush1.msra.mxu0 0.0
    %1082 = vmatprep.subr.mxu0 0.0
    %1083 = vmatpush1.msra.mxu0 0.0
    %1084 = vmatprep.subr.mxu0 0.0
    %1085 = vmatpush1.msra.mxu0 0.0
    %1086 = vmatprep.subr.mxu0 0.0
    %1087 = vmatpush1.msra.mxu0 0.0
    %1088 = vmatprep.subr.mxu0 0.0
    %1089 = vmatpush1.msra.mxu0 0.0
    %1090 = vmatprep.subr.mxu0 0.0
    %1091 = vmatpush1.msra.mxu0 0.0
    %1092 = vmatprep.subr.mxu0 0.0
    %1093 = vmatpush1.msra.mxu0 0.0
    %1094 = vmatprep.subr.mxu0 0.0
    %1095 = vmatpush1.msra.mxu0 0.0
    %1096 = vmatprep.subr.mxu0 0.0
    %1097 = vmatpush1.msra.mxu0 0.0
    %1098 = vmatprep.subr.mxu0 0.0
    %1099 = vmatpush1.msra.mxu0 0.0
    %1100 = vmatprep.subr.mxu0 0.0
    %1101 = vmatpush1.msra.mxu0 0.0
    %1102 = vmatprep.subr.mxu0 0.0
    %1103 = vmatpush1.msra.mxu0 0.0
    %1104 = vmatprep.subr.mxu0 0.0
    %1105 = vmatpush1.msra.mxu0 0.0
    %1106 = vmatprep.subr.mxu0 0.0
    %1107 = vmatpush1.msra.mxu0 0.0
    %1108 = vmatprep.subr.mxu0 0.0
    %1109 = vmatpush1.msra.mxu0 0.0
    %1110 = vmatprep.subr.mxu0 0.0
    %1111 = vmatpush1.msra.mxu0 0.0
    %1112 = vmatprep.mubr.f32.mxu0 0.0
    %1113 = vmatmul.mubr.f32.gmra.mrb[0].mxu0 %v1046
    %v1114 = vpop.f32.mrb[0].mxu0
    %v1115 = vadd.f32 %v969, %v1114
    %v1116 = vpop.f32.mrb[0].mxu0
    %1117 = vdwg.mxu0
    %1118 = vrot.lane.b32.xlu0 %v369, 112
    %v1119 = vpop.permute.xlu0 %1118
    %1120 = vrot.lane.b32.xlu0 %v369, 80
    %v1121 = vpop.permute.xlu0 %1120
    %v1122 = vsel %vm466, %v1119, 0
    %v1124 = vsel %vm466, %v1121, 0
    %1126 = vmatprep.subr.mxu0 0.0
    %1127 = vmatpush1.xpose.msra.mxu0 %v1124
    %1128 = vmatprep.subr.mxu0 0.0
    %1129 = vmatpush1.xpose.msra.mxu0 0.0
    %1130 = vmatprep.subr.mxu0 0.0
    %1131 = vmatpush1.xpose.msra.mxu0 0.0
    %1132 = vmatprep.subr.mxu0 0.0
    %1133 = vmatpush1.xpose.msra.mxu0 0.0
    %1134 = vmatprep.subr.mxu0 0.0
    %1135 = vmatpush1.xpose.msra.mxu0 0.0
    %1136 = vmatprep.subr.mxu0 0.0
    %1137 = vmatpush1.xpose.msra.mxu0 0.0
    %1138 = vmatprep.subr.mxu0 0.0
    %1139 = vmatpush1.xpose.msra.mxu0 0.0
    %1140 = vmatprep.subr.mxu0 0.0
    %1141 = vmatpush1.xpose.msra.mxu0 0.0
    %1142 = vmatprep.subr.mxu0 0.0
    %1143 = vmatpush1.xpose.msra.mxu0 0.0
    %1144 = vmatprep.subr.mxu0 0.0
    %1145 = vmatpush1.xpose.msra.mxu0 0.0
    %1146 = vmatprep.subr.mxu0 0.0
    %1147 = vmatpush1.xpose.msra.mxu0 0.0
    %1148 = vmatprep.subr.mxu0 0.0
    %1149 = vmatpush1.xpose.msra.mxu0 0.0
    %1150 = vmatprep.subr.mxu0 0.0
    %1151 = vmatpush1.xpose.msra.mxu0 0.0
    %1152 = vmatprep.subr.mxu0 0.0
    %1153 = vmatpush1.xpose.msra.mxu0 0.0
    %1154 = vmatprep.subr.mxu0 0.0
    %1155 = vmatpush1.xpose.msra.mxu0 0.0
    %1156 = vmatprep.subr.mxu0 0.0
    %1157 = vmatpush1.xpose.msra.mxu0 0.0
    %1158 = vmatprep.subr.mxu0 0.0
    %1159 = vmatpush1.xpose.msra.mxu0 0.0
    %1160 = vmatprep.subr.mxu0 0.0
    %1161 = vmatpush1.xpose.msra.mxu0 0.0
    %1162 = vmatprep.subr.mxu0 0.0
    %1163 = vmatpush1.xpose.msra.mxu0 0.0
    %1164 = vmatprep.subr.mxu0 0.0
    %1165 = vmatpush1.xpose.msra.mxu0 0.0
    %1166 = vmatprep.subr.mxu0 0.0
    %1167 = vmatpush1.xpose.msra.mxu0 0.0
    %1168 = vmatprep.subr.mxu0 0.0
    %1169 = vmatpush1.xpose.msra.mxu0 0.0
    %1170 = vmatprep.subr.mxu0 0.0
    %1171 = vmatpush1.xpose.msra.mxu0 0.0
    %1172 = vmatprep.subr.mxu0 0.0
    %1173 = vmatpush1.xpose.msra.mxu0 0.0
    %1174 = vmatprep.subr.mxu0 0.0
    %1175 = vmatpush1.xpose.msra.mxu0 0.0
    %1176 = vmatprep.subr.mxu0 0.0
    %1177 = vmatpush1.xpose.msra.mxu0 0.0
    %1178 = vmatprep.subr.mxu0 0.0
    %1179 = vmatpush1.xpose.msra.mxu0 0.0
    %1180 = vmatprep.subr.mxu0 0.0
    %1181 = vmatpush1.xpose.msra.mxu0 0.0
    %1182 = vmatprep.subr.mxu0 0.0
    %1183 = vmatpush1.xpose.msra.mxu0 0.0
    %1184 = vmatprep.subr.mxu0 0.0
    %1185 = vmatpush1.xpose.msra.mxu0 0.0
    %1186 = vmatprep.subr.mxu0 0.0
    %1187 = vmatpush1.xpose.msra.mxu0 0.0
    %1188 = vmatprep.subr.mxu0 0.0
    %1189 = vmatpush1.xpose.msra.mxu0 0.0
    %1190 = vmatprep.mubr.f32.mxu0 0.0
    %1191 = vmatmul.mubr.f32.gmra.mrb[0].mxu0 %v1122
    %v1192 = vpop.f32.mrb[0].mxu0
    %v1193 = vadd.f32 0.0, %v1192
    %v1194 = vpop.f32.mrb[0].mxu0
    %1195 = vdwg.mxu0
    %1196 = vrot.lane.b32.xlu0 %v374, 112
    %v1197 = vpop.permute.xlu0 %1196
    %1198 = vrot.lane.b32.xlu0 %v374, 80
    %v1199 = vpop.permute.xlu0 %1198
    %v1200 = vsel %vm466, %v1197, 0
    %v1202 = vsel %vm466, %v1199, 0
    %1204 = vmatprep.subr.mxu0 0.0
    %1205 = vmatpush1.xpose.msra.mxu0 %v1202
    %1206 = vmatprep.subr.mxu0 0.0
    %1207 = vmatpush1.xpose.msra.mxu0 0.0
    %1208 = vmatprep.subr.mxu0 0.0
    %1209 = vmatpush1.xpose.msra.mxu0 0.0
    %1210 = vmatprep.subr.mxu0 0.0
    %1211 = vmatpush1.xpose.msra.mxu0 0.0
    %1212 = vmatprep.subr.mxu0 0.0
    %1213 = vmatpush1.xpose.msra.mxu0 0.0
    %1214 = vmatprep.subr.mxu0 0.0
    %1215 = vmatpush1.xpose.msra.mxu0 0.0
    %1216 = vmatprep.subr.mxu0 0.0
    %1217 = vmatpush1.xpose.msra.mxu0 0.0
    %1218 = vmatprep.subr.mxu0 0.0
    %1219 = vmatpush1.xpose.msra.mxu0 0.0
    %1220 = vmatprep.subr.mxu0 0.0
    %1221 = vmatpush1.xpose.msra.mxu0 0.0
    %1222 = vmatprep.subr.mxu0 0.0
    %1223 = vmatpush1.xpose.msra.mxu0 0.0
    %1224 = vmatprep.subr.mxu0 0.0
    %1225 = vmatpush1.xpose.msra.mxu0 0.0
    %1226 = vmatprep.subr.mxu0 0.0
    %1227 = vmatpush1.xpose.msra.mxu0 0.0
    %1228 = vmatprep.subr.mxu0 0.0
    %1229 = vmatpush1.xpose.msra.mxu0 0.0
    %1230 = vmatprep.subr.mxu0 0.0
    %1231 = vmatpush1.xpose.msra.mxu0 0.0
    %1232 = vmatprep.subr.mxu0 0.0
    %1233 = vmatpush1.xpose.msra.mxu0 0.0
    %1234 = vmatprep.subr.mxu0 0.0
    %1235 = vmatpush1.xpose.msra.mxu0 0.0
    %1236 = vmatprep.subr.mxu0 0.0
    %1237 = vmatpush1.xpose.msra.mxu0 0.0
    %1238 = vmatprep.subr.mxu0 0.0
    %1239 = vmatpush1.xpose.msra.mxu0 0.0
    %1240 = vmatprep.subr.mxu0 0.0
    %1241 = vmatpush1.xpose.msra.mxu0 0.0
    %1242 = vmatprep.subr.mxu0 0.0
    %1243 = vmatpush1.xpose.msra.mxu0 0.0
    %1244 = vmatprep.subr.mxu0 0.0
    %1245 = vmatpush1.xpose.msra.mxu0 0.0
    %1246 = vmatprep.subr.mxu0 0.0
    %1247 = vmatpush1.xpose.msra.mxu0 0.0
    %1248 = vmatprep.subr.mxu0 0.0
    %1249 = vmatpush1.xpose.msra.mxu0 0.0
    %1250 = vmatprep.subr.mxu0 0.0
    %1251 = vmatpush1.xpose.msra.mxu0 0.0
    %1252 = vmatprep.subr.mxu0 0.0
    %1253 = vmatpush1.xpose.msra.mxu0 0.0
    %1254 = vmatprep.subr.mxu0 0.0
    %1255 = vmatpush1.xpose.msra.mxu0 0.0
    %1256 = vmatprep.subr.mxu0 0.0
    %1257 = vmatpush1.xpose.msra.mxu0 0.0
    %1258 = vmatprep.subr.mxu0 0.0
    %1259 = vmatpush1.xpose.msra.mxu0 0.0
    %1260 = vmatprep.subr.mxu0 0.0
    %1261 = vmatpush1.xpose.msra.mxu0 0.0
    %1262 = vmatprep.subr.mxu0 0.0
    %1263 = vmatpush1.xpose.msra.mxu0 0.0
    %1264 = vmatprep.subr.mxu0 0.0
    %1265 = vmatpush1.xpose.msra.mxu0 0.0
    %1266 = vmatprep.subr.mxu0 0.0
    %1267 = vmatpush1.xpose.msra.mxu0 0.0
    %1268 = vmatprep.mubr.f32.mxu0 0.0
    %1269 = vmatmul.mubr.f32.gmra.mrb[0].mxu0 %v1200
    %v1270 = vpop.f32.mrb[0].mxu0
    %v1271 = vadd.f32 0.0, %v1270
    %v1272 = vpop.f32.mrb[0].mxu0
    %1273 = vdwg.mxu0
    %v1274 = vsel %vm466, %v1193, -inf
    %1275 = vmax.xlane.f32.xlu0 %v1274
    %v1276 = vpop.xlane.xlu0 %1275
    %v1277 = vsel %vm466, %v1271, -inf
    %1278 = vmax.xlane.f32.xlu0 %v1277
    %v1279 = vpop.xlane.xlu0 %1278
    %v1280 = vsub.f32 %v1193, %v1276
    %v1281 = vsub.f32 %v1271, %v1279
    %v1282 = vmul.f32 %v1280, 1.442695
    %v1283 = vpow.pop %v1282
    %v1284 = vmul.f32 %v1281, 1.442695
    %v1285 = vpow.pop %v1284
    %v1286 = vsel %vm466, %v1283, 0.0
    %1287 = vadd.xlane.f32.xlu0 %v1286
    %v1288 = vpop.xlane.xlu0 %1287
    %v1289 = vsel %vm466, %v1285, 0.0
    %1290 = vadd.xlane.f32.xlu0 %v1289
    %v1291 = vpop.xlane.xlu0 %1290
    %v1292 = vrcp.pop %v1288
    %v1293 = vrcp.pop %v1291
    %v1294 = vmul.f32 %v1283, %v1292
    %v1295 = vmul.f32 %v1285, %v1293
    %1296 = vrot.lane.b32.xlu0 %v455, 64
    %v1297 = vpop.permute.xlu0 %1296
    %v1300 = vsel %vm466, %v1294, 0
    %1302 = vmatprep.subr.mxu0 0.0
    %1303 = vmatpush1.msra.mxu0 %v1297
    %1304 = vmatprep.subr.mxu0 0.0
    %1305 = vmatpush1.msra.mxu0 0.0
    %1306 = vmatprep.subr.mxu0 0.0
    %1307 = vmatpush1.msra.mxu0 0.0
    %1308 = vmatprep.subr.mxu0 0.0
    %1309 = vmatpush1.msra.mxu0 0.0
    %1310 = vmatprep.subr.mxu0 0.0
    %1311 = vmatpush1.msra.mxu0 0.0
    %1312 = vmatprep.subr.mxu0 0.0
    %1313 = vmatpush1.msra.mxu0 0.0
    %1314 = vmatprep.subr.mxu0 0.0
    %1315 = vmatpush1.msra.mxu0 0.0
    %1316 = vmatprep.subr.mxu0 0.0
    %1317 = vmatpush1.msra.mxu0 0.0
    %1318 = vmatprep.subr.mxu0 0.0
    %1319 = vmatpush1.msra.mxu0 0.0
    %1320 = vmatprep.subr.mxu0 0.0
    %1321 = vmatpush1.msra.mxu0 0.0
    %1322 = vmatprep.subr.mxu0 0.0
    %1323 = vmatpush1.msra.mxu0 0.0
    %1324 = vmatprep.subr.mxu0 0.0
    %1325 = vmatpush1.msra.mxu0 0.0
    %1326 = vmatprep.subr.mxu0 0.0
    %1327 = vmatpush1.msra.mxu0 0.0
    %1328 = vmatprep.subr.mxu0 0.0
    %1329 = vmatpush1.msra.mxu0 0.0
    %1330 = vmatprep.subr.mxu0 0.0
    %1331 = vmatpush1.msra.mxu0 0.0
    %1332 = vmatprep.subr.mxu0 0.0
    %1333 = vmatpush1.msra.mxu0 0.0
    %1334 = vmatprep.subr.mxu0 0.0
    %1335 = vmatpush1.msra.mxu0 0.0
    %1336 = vmatprep.subr.mxu0 0.0
    %1337 = vmatpush1.msra.mxu0 0.0
    %1338 = vmatprep.subr.mxu0 0.0
    %1339 = vmatpush1.msra.mxu0 0.0
    %1340 = vmatprep.subr.mxu0 0.0
    %1341 = vmatpush1.msra.mxu0 0.0
    %1342 = vmatprep.subr.mxu0 0.0
    %1343 = vmatpush1.msra.mxu0 0.0
    %1344 = vmatprep.subr.mxu0 0.0
    %1345 = vmatpush1.msra.mxu0 0.0
    %1346 = vmatprep.subr.mxu0 0.0
    %1347 = vmatpush1.msra.mxu0 0.0
    %1348 = vmatprep.subr.mxu0 0.0
    %1349 = vmatpush1.msra.mxu0 0.0
    %1350 = vmatprep.subr.mxu0 0.0
    %1351 = vmatpush1.msra.mxu0 0.0
    %1352 = vmatprep.subr.mxu0 0.0
    %1353 = vmatpush1.msra.mxu0 0.0
    %1354 = vmatprep.subr.mxu0 0.0
    %1355 = vmatpush1.msra.mxu0 0.0
    %1356 = vmatprep.subr.mxu0 0.0
    %1357 = vmatpush1.msra.mxu0 0.0
    %1358 = vmatprep.subr.mxu0 0.0
    %1359 = vmatpush1.msra.mxu0 0.0
    %1360 = vmatprep.subr.mxu0 0.0
    %1361 = vmatpush1.msra.mxu0 0.0
    %1362 = vmatprep.subr.mxu0 0.0
    %1363 = vmatpush1.msra.mxu0 0.0
    %1364 = vmatprep.subr.mxu0 0.0
    %1365 = vmatpush1.msra.mxu0 0.0
    %1366 = vmatprep.mubr.f32.mxu0 0.0
    %1367 = vmatmul.mubr.f32.gmra.mrb[0].mxu0 %v1300
    %v1368 = vpop.f32.mrb[0].mxu0
    %v1369 = vadd.f32 0.0, %v1368
    %v1370 = vpop.f32.mrb[0].mxu0
    %1371 = vdwg.mxu0
    %1372 = vrot.lane.b32.xlu0 %v460, 64
    %v1373 = vpop.permute.xlu0 %1372
    %v1376 = vsel %vm466, %v1295, 0
    %1378 = vmatprep.subr.mxu0 0.0
    %1379 = vmatpush1.msra.mxu0 %v1373
    %1380 = vmatprep.subr.mxu0 0.0
    %1381 = vmatpush1.msra.mxu0 0.0
    %1382 = vmatprep.subr.mxu0 0.0
    %1383 = vmatpush1.msra.mxu0 0.0
    %1384 = vmatprep.subr.mxu0 0.0
    %1385 = vmatpush1.msra.mxu0 0.0
    %1386 = vmatprep.subr.mxu0 0.0
    %1387 = vmatpush1.msra.mxu0 0.0
    %1388 = vmatprep.subr.mxu0 0.0
    %1389 = vmatpush1.msra.mxu0 0.0
    %1390 = vmatprep.subr.mxu0 0.0
    %1391 = vmatpush1.msra.mxu0 0.0
    %1392 = vmatprep.subr.mxu0 0.0
    %1393 = vmatpush1.msra.mxu0 0.0
    %1394 = vmatprep.subr.mxu0 0.0
    %1395 = vmatpush1.msra.mxu0 0.0
    %1396 = vmatprep.subr.mxu0 0.0
    %1397 = vmatpush1.msra.mxu0 0.0
    %1398 = vmatprep.subr.mxu0 0.0
    %1399 = vmatpush1.msra.mxu0 0.0
    %1400 = vmatprep.subr.mxu0 0.0
    %1401 = vmatpush1.msra.mxu0 0.0
    %1402 = vmatprep.subr.mxu0 0.0
    %1403 = vmatpush1.msra.mxu0 0.0
    %1404 = vmatprep.subr.mxu0 0.0
    %1405 = vmatpush1.msra.mxu0 0.0
    %1406 = vmatprep.subr.mxu0 0.0
    %1407 = vmatpush1.msra.mxu0 0.0
    %1408 = vmatprep.subr.mxu0 0.0
    %1409 = vmatpush1.msra.mxu0 0.0
    %1410 = vmatprep.subr.mxu0 0.0
    %1411 = vmatpush1.msra.mxu0 0.0
    %1412 = vmatprep.subr.mxu0 0.0
    %1413 = vmatpush1.msra.mxu0 0.0
    %1414 = vmatprep.subr.mxu0 0.0
    %1415 = vmatpush1.msra.mxu0 0.0
    %1416 = vmatprep.subr.mxu0 0.0
    %1417 = vmatpush1.msra.mxu0 0.0
    %1418 = vmatprep.subr.mxu0 0.0
    %1419 = vmatpush1.msra.mxu0 0.0
    %1420 = vmatprep.subr.mxu0 0.0
    %1421 = vmatpush1.msra.mxu0 0.0
    %1422 = vmatprep.subr.mxu0 0.0
    %1423 = vmatpush1.msra.mxu0 0.0
    %1424 = vmatprep.subr.mxu0 0.0
    %1425 = vmatpush1.msra.mxu0 0.0
    %1426 = vmatprep.subr.mxu0 0.0
    %1427 = vmatpush1.msra.mxu0 0.0
    %1428 = vmatprep.subr.mxu0 0.0
    %1429 = vmatpush1.msra.mxu0 0.0
    %1430 = vmatprep.subr.mxu0 0.0
    %1431 = vmatpush1.msra.mxu0 0.0
    %1432 = vmatprep.subr.mxu0 0.0
    %1433 = vmatpush1.msra.mxu0 0.0
    %1434 = vmatprep.subr.mxu0 0.0
    %1435 = vmatpush1.msra.mxu0 0.0
    %1436 = vmatprep.subr.mxu0 0.0
    %1437 = vmatpush1.msra.mxu0 0.0
    %1438 = vmatprep.subr.mxu0 0.0
    %1439 = vmatpush1.msra.mxu0 0.0
    %1440 = vmatprep.subr.mxu0 0.0
    %1441 = vmatpush1.msra.mxu0 0.0
    %1442 = vmatprep.mubr.f32.mxu0 0.0
    %1443 = vmatmul.mubr.f32.gmra.mrb[0].mxu0 %v1376
    %v1444 = vpop.f32.mrb[0].mxu0
    %v1445 = vadd.f32 0.0, %v1444
    %v1446 = vpop.f32.mrb[0].mxu0
    %1447 = vdwg.mxu0
    %v1448 = vadd.f32 %v1042, %v1369
    %v1449 = vadd.f32 %v1115, %v1445
    %1450 = vrot.lane.b32.xlu0 %v369, 104
    %v1451 = vpop.permute.xlu0 %1450
    %1452 = vrot.lane.b32.xlu0 %v369, 72
    %v1453 = vpop.permute.xlu0 %1452
    %v1454 = vsel %vm466, %v1451, 0
    %v1456 = vsel %vm466, %v1453, 0
    %1458 = vmatprep.subr.mxu0 0.0
    %1459 = vmatpush1.xpose.msra.mxu0 %v1456
    %1460 = vmatprep.subr.mxu0 0.0
    %1461 = vmatpush1.xpose.msra.mxu0 0.0
    %1462 = vmatprep.subr.mxu0 0.0
    %1463 = vmatpush1.xpose.msra.mxu0 0.0
    %1464 = vmatprep.subr.mxu0 0.0
    %1465 = vmatpush1.xpose.msra.mxu0 0.0
    %1466 = vmatprep.subr.mxu0 0.0
    %1467 = vmatpush1.xpose.msra.mxu0 0.0
    %1468 = vmatprep.subr.mxu0 0.0
    %1469 = vmatpush1.xpose.msra.mxu0 0.0
    %1470 = vmatprep.subr.mxu0 0.0
    %1471 = vmatpush1.xpose.msra.mxu0 0.0
    %1472 = vmatprep.subr.mxu0 0.0
    %1473 = vmatpush1.xpose.msra.mxu0 0.0
    %1474 = vmatprep.subr.mxu0 0.0
    %1475 = vmatpush1.xpose.msra.mxu0 0.0
    %1476 = vmatprep.subr.mxu0 0.0
    %1477 = vmatpush1.xpose.msra.mxu0 0.0
    %1478 = vmatprep.subr.mxu0 0.0
    %1479 = vmatpush1.xpose.msra.mxu0 0.0
    %1480 = vmatprep.subr.mxu0 0.0
    %1481 = vmatpush1.xpose.msra.mxu0 0.0
    %1482 = vmatprep.subr.mxu0 0.0
    %1483 = vmatpush1.xpose.msra.mxu0 0.0
    %1484 = vmatprep.subr.mxu0 0.0
    %1485 = vmatpush1.xpose.msra.mxu0 0.0
    %1486 = vmatprep.subr.mxu0 0.0
    %1487 = vmatpush1.xpose.msra.mxu0 0.0
    %1488 = vmatprep.subr.mxu0 0.0
    %1489 = vmatpush1.xpose.msra.mxu0 0.0
    %1490 = vmatprep.subr.mxu0 0.0
    %1491 = vmatpush1.xpose.msra.mxu0 0.0
    %1492 = vmatprep.subr.mxu0 0.0
    %1493 = vmatpush1.xpose.msra.mxu0 0.0
    %1494 = vmatprep.subr.mxu0 0.0
    %1495 = vmatpush1.xpose.msra.mxu0 0.0
    %1496 = vmatprep.subr.mxu0 0.0
    %1497 = vmatpush1.xpose.msra.mxu0 0.0
    %1498 = vmatprep.subr.mxu0 0.0
    %1499 = vmatpush1.xpose.msra.mxu0 0.0
    %1500 = vmatprep.subr.mxu0 0.0
    %1501 = vmatpush1.xpose.msra.mxu0 0.0
    %1502 = vmatprep.subr.mxu0 0.0
    %1503 = vmatpush1.xpose.msra.mxu0 0.0
    %1504 = vmatprep.subr.mxu0 0.0
    %1505 = vmatpush1.xpose.msra.mxu0 0.0
    %1506 = vmatprep.subr.mxu0 0.0
    %1507 = vmatpush1.xpose.msra.mxu0 0.0
    %1508 = vmatprep.subr.mxu0 0.0
    %1509 = vmatpush1.xpose.msra.mxu0 0.0
    %1510 = vmatprep.subr.mxu0 0.0
    %1511 = vmatpush1.xpose.msra.mxu0 0.0
    %1512 = vmatprep.subr.mxu0 0.0
    %1513 = vmatpush1.xpose.msra.mxu0 0.0
    %1514 = vmatprep.subr.mxu0 0.0
    %1515 = vmatpush1.xpose.msra.mxu0 0.0
    %1516 = vmatprep.subr.mxu0 0.0
    %1517 = vmatpush1.xpose.msra.mxu0 0.0
    %1518 = vmatprep.subr.mxu0 0.0
    %1519 = vmatpush1.xpose.msra.mxu0 0.0
    %1520 = vmatprep.subr.mxu0 0.0
    %1521 = vmatpush1.xpose.msra.mxu0 0.0
    %1522 = vmatprep.mubr.f32.mxu0 0.0
    %1523 = vmatmul.mubr.f32.gmra.mrb[0].mxu0 %v1454
    %v1524 = vpop.f32.mrb[0].mxu0
    %v1525 = vadd.f32 0.0, %v1524
    %v1526 = vpop.f32.mrb[0].mxu0
    %1527 = vdwg.mxu0
    %1528 = vrot.lane.b32.xlu0 %v374, 104
    %v1529 = vpop.permute.xlu0 %1528
    %1530 = vrot.lane.b32.xlu0 %v374, 72
    %v1531 = vpop.permute.xlu0 %1530
    %v1532 = vsel %vm466, %v1529, 0
    %v1534 = vsel %vm466, %v1531, 0
    %1536 = vmatprep.subr.mxu0 0.0
    %1537 = vmatpush1.xpose.msra.mxu0 %v1534
    %1538 = vmatprep.subr.mxu0 0.0
    %1539 = vmatpush1.xpose.msra.mxu0 0.0
    %1540 = vmatprep.subr.mxu0 0.0
    %1541 = vmatpush1.xpose.msra.mxu0 0.0
    %1542 = vmatprep.subr.mxu0 0.0
    %1543 = vmatpush1.xpose.msra.mxu0 0.0
    %1544 = vmatprep.subr.mxu0 0.0
    %1545 = vmatpush1.xpose.msra.mxu0 0.0
    %1546 = vmatprep.subr.mxu0 0.0
    %1547 = vmatpush1.xpose.msra.mxu0 0.0
    %1548 = vmatprep.subr.mxu0 0.0
    %1549 = vmatpush1.xpose.msra.mxu0 0.0
    %1550 = vmatprep.subr.mxu0 0.0
    %1551 = vmatpush1.xpose.msra.mxu0 0.0
    %1552 = vmatprep.subr.mxu0 0.0
    %1553 = vmatpush1.xpose.msra.mxu0 0.0
    %1554 = vmatprep.subr.mxu0 0.0
    %1555 = vmatpush1.xpose.msra.mxu0 0.0
    %1556 = vmatprep.subr.mxu0 0.0
    %1557 = vmatpush1.xpose.msra.mxu0 0.0
    %1558 = vmatprep.subr.mxu0 0.0
    %1559 = vmatpush1.xpose.msra.mxu0 0.0
    %1560 = vmatprep.subr.mxu0 0.0
    %1561 = vmatpush1.xpose.msra.mxu0 0.0
    %1562 = vmatprep.subr.mxu0 0.0
    %1563 = vmatpush1.xpose.msra.mxu0 0.0
    %1564 = vmatprep.subr.mxu0 0.0
    %1565 = vmatpush1.xpose.msra.mxu0 0.0
    %1566 = vmatprep.subr.mxu0 0.0
    %1567 = vmatpush1.xpose.msra.mxu0 0.0
    %1568 = vmatprep.subr.mxu0 0.0
    %1569 = vmatpush1.xpose.msra.mxu0 0.0
    %1570 = vmatprep.subr.mxu0 0.0
    %1571 = vmatpush1.xpose.msra.mxu0 0.0
    %1572 = vmatprep.subr.mxu0 0.0
    %1573 = vmatpush1.xpose.msra.mxu0 0.0
    %1574 = vmatprep.subr.mxu0 0.0
    %1575 = vmatpush1.xpose.msra.mxu0 0.0
    %1576 = vmatprep.subr.mxu0 0.0
    %1577 = vmatpush1.xpose.msra.mxu0 0.0
    %1578 = vmatprep.subr.mxu0 0.0
    %1579 = vmatpush1.xpose.msra.mxu0 0.0
    %1580 = vmatprep.subr.mxu0 0.0
    %1581 = vmatpush1.xpose.msra.mxu0 0.0
    %1582 = vmatprep.subr.mxu0 0.0
    %1583 = vmatpush1.xpose.msra.mxu0 0.0
    %1584 = vmatprep.subr.mxu0 0.0
    %1585 = vmatpush1.xpose.msra.mxu0 0.0
    %1586 = vmatprep.subr.mxu0 0.0
    %1587 = vmatpush1.xpose.msra.mxu0 0.0
    %1588 = vmatprep.subr.mxu0 0.0
    %1589 = vmatpush1.xpose.msra.mxu0 0.0
    %1590 = vmatprep.subr.mxu0 0.0
    %1591 = vmatpush1.xpose.msra.mxu0 0.0
    %1592 = vmatprep.subr.mxu0 0.0
    %1593 = vmatpush1.xpose.msra.mxu0 0.0
    %1594 = vmatprep.subr.mxu0 0.0
    %1595 = vmatpush1.xpose.msra.mxu0 0.0
    %1596 = vmatprep.subr.mxu0 0.0
    %1597 = vmatpush1.xpose.msra.mxu0 0.0
    %1598 = vmatprep.subr.mxu0 0.0
    %1599 = vmatpush1.xpose.msra.mxu0 0.0
    %1600 = vmatprep.mubr.f32.mxu0 0.0
    %1601 = vmatmul.mubr.f32.gmra.mrb[0].mxu0 %v1532
    %v1602 = vpop.f32.mrb[0].mxu0
    %v1603 = vadd.f32 0.0, %v1602
    %v1604 = vpop.f32.mrb[0].mxu0
    %1605 = vdwg.mxu0
    %v1606 = vsel %vm466, %v1525, -inf
    %1607 = vmax.xlane.f32.xlu0 %v1606
    %v1608 = vpop.xlane.xlu0 %1607
    %v1609 = vsel %vm466, %v1603, -inf
    %1610 = vmax.xlane.f32.xlu0 %v1609
    %v1611 = vpop.xlane.xlu0 %1610
    %v1612 = vsub.f32 %v1525, %v1608
    %v1613 = vsub.f32 %v1603, %v1611
    %v1614 = vmul.f32 %v1612, 1.442695
    %v1615 = vpow.pop %v1614
    %v1616 = vmul.f32 %v1613, 1.442695
    %v1617 = vpow.pop %v1616
    %v1618 = vsel %vm466, %v1615, 0.0
    %1619 = vadd.xlane.f32.xlu0 %v1618
    %v1620 = vpop.xlane.xlu0 %1619
    %v1621 = vsel %vm466, %v1617, 0.0
    %1622 = vadd.xlane.f32.xlu0 %v1621
    %v1623 = vpop.xlane.xlu0 %1622
    %v1624 = vrcp.pop %v1620
    %v1625 = vrcp.pop %v1623
    %v1626 = vmul.f32 %v1615, %v1624
    %v1627 = vmul.f32 %v1617, %v1625
    %1628 = vrot.lane.b32.xlu0 %v455, 32
    %v1629 = vpop.permute.xlu0 %1628
    %v1632 = vsel %vm466, %v1626, 0
    %1634 = vmatprep.subr.mxu0 0.0
    %1635 = vmatpush1.msra.mxu0 %v1629
    %1636 = vmatprep.subr.mxu0 0.0
    %1637 = vmatpush1.msra.mxu0 0.0
    %1638 = vmatprep.subr.mxu0 0.0
    %1639 = vmatpush1.msra.mxu0 0.0
    %1640 = vmatprep.subr.mxu0 0.0
    %1641 = vmatpush1.msra.mxu0 0.0
    %1642 = vmatprep.subr.mxu0 0.0
    %1643 = vmatpush1.msra.mxu0 0.0
    %1644 = vmatprep.subr.mxu0 0.0
    %1645 = vmatpush1.msra.mxu0 0.0
    %1646 = vmatprep.subr.mxu0 0.0
    %1647 = vmatpush1.msra.mxu0 0.0
    %1648 = vmatprep.subr.mxu0 0.0
    %1649 = vmatpush1.msra.mxu0 0.0
    %1650 = vmatprep.subr.mxu0 0.0
    %1651 = vmatpush1.msra.mxu0 0.0
    %1652 = vmatprep.subr.mxu0 0.0
    %1653 = vmatpush1.msra.mxu0 0.0
    %1654 = vmatprep.subr.mxu0 0.0
    %1655 = vmatpush1.msra.mxu0 0.0
    %1656 = vmatprep.subr.mxu0 0.0
    %1657 = vmatpush1.msra.mxu0 0.0
    %1658 = vmatprep.subr.mxu0 0.0
    %1659 = vmatpush1.msra.mxu0 0.0
    %1660 = vmatprep.subr.mxu0 0.0
    %1661 = vmatpush1.msra.mxu0 0.0
    %1662 = vmatprep.subr.mxu0 0.0
    %1663 = vmatpush1.msra.mxu0 0.0
    %1664 = vmatprep.subr.mxu0 0.0
    %1665 = vmatpush1.msra.mxu0 0.0
    %1666 = vmatprep.subr.mxu0 0.0
    %1667 = vmatpush1.msra.mxu0 0.0
    %1668 = vmatprep.subr.mxu0 0.0
    %1669 = vmatpush1.msra.mxu0 0.0
    %1670 = vmatprep.subr.mxu0 0.0
    %1671 = vmatpush1.msra.mxu0 0.0
    %1672 = vmatprep.subr.mxu0 0.0
    %1673 = vmatpush1.msra.mxu0 0.0
    %1674 = vmatprep.subr.mxu0 0.0
    %1675 = vmatpush1.msra.mxu0 0.0
    %1676 = vmatprep.subr.mxu0 0.0
    %1677 = vmatpush1.msra.mxu0 0.0
    %1678 = vmatprep.subr.mxu0 0.0
    %1679 = vmatpush1.msra.mxu0 0.0
    %1680 = vmatprep.subr.mxu0 0.0
    %1681 = vmatpush1.msra.mxu0 0.0
    %1682 = vmatprep.subr.mxu0 0.0
    %1683 = vmatpush1.msra.mxu0 0.0
    %1684 = vmatprep.subr.mxu0 0.0
    %1685 = vmatpush1.msra.mxu0 0.0
    %1686 = vmatprep.subr.mxu0 0.0
    %1687 = vmatpush1.msra.mxu0 0.0
    %1688 = vmatprep.subr.mxu0 0.0
    %1689 = vmatpush1.msra.mxu0 0.0
    %1690 = vmatprep.subr.mxu0 0.0
    %1691 = vmatpush1.msra.mxu0 0.0
    %1692 = vmatprep.subr.mxu0 0.0
    %1693 = vmatpush1.msra.mxu0 0.0
    %1694 = vmatprep.subr.mxu0 0.0
    %1695 = vmatpush1.msra.mxu0 0.0
    %1696 = vmatprep.subr.mxu0 0.0
    %1697 = vmatpush1.msra.mxu0 0.0
    %1698 = vmatprep.mubr.f32.mxu0 0.0
    %1699 = vmatmul.mubr.f32.gmra.mrb[0].mxu0 %v1632
    %v1700 = vpop.f32.mrb[0].mxu0
    %v1701 = vadd.f32 0.0, %v1700
    %v1702 = vpop.f32.mrb[0].mxu0
    %1703 = vdwg.mxu0
    %1704 = vrot.lane.b32.xlu0 %v460, 32
    %v1705 = vpop.permute.xlu0 %1704
    %v1708 = vsel %vm466, %v1627, 0
    %1710 = vmatprep.subr.mxu0 0.0
    %1711 = vmatpush1.msra.mxu0 %v1705
    %1712 = vmatprep.subr.mxu0 0.0
    %1713 = vmatpush1.msra.mxu0 0.0
    %1714 = vmatprep.subr.mxu0 0.0
    %1715 = vmatpush1.msra.mxu0 0.0
    %1716 = vmatprep.subr.mxu0 0.0
    %1717 = vmatpush1.msra.mxu0 0.0
    %1718 = vmatprep.subr.mxu0 0.0
    %1719 = vmatpush1.msra.mxu0 0.0
    %1720 = vmatprep.subr.mxu0 0.0
    %1721 = vmatpush1.msra.mxu0 0.0
    %1722 = vmatprep.subr.mxu0 0.0
    %1723 = vmatpush1.msra.mxu0 0.0
    %1724 = vmatprep.subr.mxu0 0.0
    %1725 = vmatpush1.msra.mxu0 0.0
    %1726 = vmatprep.subr.mxu0 0.0
    %1727 = vmatpush1.msra.mxu0 0.0
    %1728 = vmatprep.subr.mxu0 0.0
    %1729 = vmatpush1.msra.mxu0 0.0
    %1730 = vmatprep.subr.mxu0 0.0
    %1731 = vmatpush1.msra.mxu0 0.0
    %1732 = vmatprep.subr.mxu0 0.0
    %1733 = vmatpush1.msra.mxu0 0.0
    %1734 = vmatprep.subr.mxu0 0.0
    %1735 = vmatpush1.msra.mxu0 0.0
    %1736 = vmatprep.subr.mxu0 0.0
    %1737 = vmatpush1.msra.mxu0 0.0
    %1738 = vmatprep.subr.mxu0 0.0
    %1739 = vmatpush1.msra.mxu0 0.0
    %1740 = vmatprep.subr.mxu0 0.0
    %1741 = vmatpush1.msra.mxu0 0.0
    %1742 = vmatprep.subr.mxu0 0.0
    %1743 = vmatpush1.msra.mxu0 0.0
    %1744 = vmatprep.subr.mxu0 0.0
    %1745 = vmatpush1.msra.mxu0 0.0
    %1746 = vmatprep.subr.mxu0 0.0
    %1747 = vmatpush1.msra.mxu0 0.0
    %1748 = vmatprep.subr.mxu0 0.0
    %1749 = vmatpush1.msra.mxu0 0.0
    %1750 = vmatprep.subr.mxu0 0.0
    %1751 = vmatpush1.msra.mxu0 0.0
    %1752 = vmatprep.subr.mxu0 0.0
    %1753 = vmatpush1.msra.mxu0 0.0
    %1754 = vmatprep.subr.mxu0 0.0
    %1755 = vmatpush1.msra.mxu0 0.0
    %1756 = vmatprep.subr.mxu0 0.0
    %1757 = vmatpush1.msra.mxu0 0.0
    %1758 = vmatprep.subr.mxu0 0.0
    %1759 = vmatpush1.msra.mxu0 0.0
    %1760 = vmatprep.subr.mxu0 0.0
    %1761 = vmatpush1.msra.mxu0 0.0
    %1762 = vmatprep.subr.mxu0 0.0
    %1763 = vmatpush1.msra.mxu0 0.0
    %1764 = vmatprep.subr.mxu0 0.0
    %1765 = vmatpush1.msra.mxu0 0.0
    %1766 = vmatprep.subr.mxu0 0.0
    %1767 = vmatpush1.msra.mxu0 0.0
    %1768 = vmatprep.subr.mxu0 0.0
    %1769 = vmatpush1.msra.mxu0 0.0
    %1770 = vmatprep.subr.mxu0 0.0
    %1771 = vmatpush1.msra.mxu0 0.0
    %1772 = vmatprep.subr.mxu0 0.0
    %1773 = vmatpush1.msra.mxu0 0.0
    %1774 = vmatprep.mubr.f32.mxu0 0.0
    %1775 = vmatmul.mubr.f32.gmra.mrb[0].mxu0 %v1708
    %v1776 = vpop.f32.mrb[0].mxu0
    %v1777 = vadd.f32 0.0, %v1776
    %v1778 = vpop.f32.mrb[0].mxu0
    %1779 = vdwg.mxu0
    %v1780 = vadd.f32 %v1448, %v1701
    %v1781 = vadd.f32 %v1449, %v1777
    %v1782 = vld [vmem:[%s8] sm:$0x1]
    %v1784 = vlaneseq
    %v1785 = vshrl.u32 %v1784, 7
    %v1786 = vsub.s32 0, %v1785
    %v1787 = vrot.slane %v1782, %v1786
    %v1789 = vadd.f32 %v1780, %v1787
    %v1790 = vadd.f32 %v1781, %v1787
    %v1791 = vadd.f32 %v127, %v1789
    %v1792 = vadd.f32 %v128, %v1790
    %v1793 = vsel %vm141, %v1791, 0.0
    %1794 = vadd.xlane.f32.xlu0 %v1793
    %v1795 = vpop.xlane.xlu0 %1794
    %v1796 = vsel %vm141, %v1792, 0.0
    %1797 = vadd.xlane.f32.xlu0 %v1796
    %v1798 = vpop.xlane.xlu0 %1797
    %v1799 = vmul.f32 %v1795, %v244
    %v1800 = vmul.f32 %v1798, %v244
    %v1801 = vsub.f32 %v1791, %v1799
    %v1802 = vsub.f32 %v1792, %v1800
    %v1803 = vmul.f32 %v1801, %v1801
    %v1804 = vmul.f32 %v1802, %v1802
    %v1805 = vsel %vm141, %v1803, 0.0
    %1806 = vadd.xlane.f32.xlu0 %v1805
    %v1807 = vpop.xlane.xlu0 %1806
    %v1808 = vsel %vm141, %v1804, 0.0
    %1809 = vadd.xlane.f32.xlu0 %v1808
    %v1810 = vpop.xlane.xlu0 %1809
    %v1811 = vmul.f32 %v1807, %v244
    %v1812 = vmul.f32 %v1810, %v244
    %v1813 = vadd.f32 %v1811, 1e-05
    %v1814 = vadd.f32 %v1812, 1e-05
    %v1815 = vrsqrt.pop %v1813
    %v1816 = vrsqrt.pop %v1814
    %v1817 = vmul.f32 %v1801, %v1815
    %v1818 = vmul.f32 %v1802, %v1816
    %1819 = vrot.lane.b32.xlu0 %v268, 64
    %v1820 = vpop.permute.xlu0 %1819
    %1821 = vrot.lane.b32.xlu0 %v272, 64
    %v1822 = vpop.permute.xlu0 %1821
    %v1825 = vmul.f32 %v1817, %v1820
    %v1826 = vmul.f32 %v1818, %v1822
    %1827 = vrot.lane.b32.xlu0 %v268, 32
    %v1828 = vpop.permute.xlu0 %1827
    %1829 = vrot.lane.b32.xlu0 %v272, 32
    %v1830 = vpop.permute.xlu0 %1829
    %v1833 = vadd.f32 %v1825, %v1828
    %v1834 = vadd.f32 %v1826, %v1830
    %v1835 = vcombine.high %v1833, 0.0
    %v1837 = vunpack.c.l.s4 1983009808
    %v1838 = vunpack.c.0.s8 %v1837
    %v1839 = vlaneseq
    %v1840 = vshrl.u32 %v1839, 7
    %v1841 = vsub.s32 %v1838, %v1840
    %v1842 = vrot.slane %v1833, %v1841
    %v1844 = vunpack.c.l.s4 1983009808
    %v1845 = vunpack.c.0.s8 %v1844
    %v1846 = vlaneseq
    %v1847 = vshrl.u32 %v1846, 7
    %v1848 = vsub.s32 %v1845, %v1847
    %v1849 = vrot.slane %v1835, %v1848
    %v1850 = vcombine.high %v1834, 0.0
    %v1852 = vunpack.c.l.s4 1983009808
    %v1853 = vunpack.c.0.s8 %v1852
    %v1854 = vlaneseq
    %v1855 = vshrl.u32 %v1854, 7
    %v1856 = vsub.s32 %v1853, %v1855
    %v1857 = vrot.slane %v1834, %v1856
    %v1859 = vunpack.c.l.s4 1983009808
    %v1860 = vunpack.c.0.s8 %v1859
    %v1861 = vlaneseq
    %v1862 = vshrl.u32 %v1861, 7
    %v1863 = vsub.s32 %v1860, %v1862
    %v1864 = vrot.slane %v1850, %v1863
    %v1865 = vcombine.low %v1842, %v1857
    %v1866 = vcombine.high %v1842, %v1857
    %v1868 = vunpack.c.l.s4 1934713408
    %v1869 = vunpack.c.0.s8 %v1868
    %v1870 = vlaneseq
    %v1871 = vshrl.u32 %v1870, 7
    %v1872 = vsub.s32 %v1869, %v1871
    %v1873 = vrot.slane %v1865, %v1872
    %v1875 = vunpack.c.l.s4 1934713408
    %v1876 = vunpack.c.0.s8 %v1875
    %v1877 = vlaneseq
    %v1878 = vshrl.u32 %v1877, 7
    %v1879 = vsub.s32 %v1876, %v1878
    %v1880 = vrot.slane %v1866, %v1879
    %v1881 = vcombine.low %v1849, %v1864
    %v1882 = vcombine.high %v1849, %v1864
    %v1884 = vunpack.c.l.s4 1934713408
    %v1885 = vunpack.c.0.s8 %v1884
    %v1886 = vlaneseq
    %v1887 = vshrl.u32 %v1886, 7
    %v1888 = vsub.s32 %v1885, %v1887
    %v1889 = vrot.slane %v1881, %v1888
    %v1891 = vunpack.c.l.s4 1934713408
    %v1892 = vunpack.c.0.s8 %v1891
    %v1893 = vlaneseq
    %v1894 = vshrl.u32 %v1893, 7
    %v1895 = vsub.s32 %v1892, %v1894
    %v1896 = vrot.slane %v1882, %v1895
    %v1897 = vcombine.high %v1873, 0.0
    %v1898 = vcombine.high %v1880, 0.0
    %v1899 = vcombine.high %v1889, 0.0
    %v1900 = vcombine.high %v1896, 0.0
    %1902 = vrot.lane.b32.xlu0 %v1897, 32
    %v1903 = vpop.permute.xlu0 %1902
    %1906 = vrot.lane.b32.xlu0 %v1880, 64
    %v1907 = vpop.permute.xlu0 %1906
    %1910 = vrot.lane.b32.xlu0 %v1898, 96
    %v1911 = vpop.permute.xlu0 %1910
    %1914 = vrot.lane.b32.xlu0 %v1899, 32
    %v1915 = vpop.permute.xlu0 %1914
    %1918 = vrot.lane.b32.xlu0 %v1896, 64
    %v1919 = vpop.permute.xlu0 %1918
    %1922 = vrot.lane.b32.xlu0 %v1900, 96
    %v1923 = vpop.permute.xlu0 %1922
    %v1925 = vsel %vm141, %v1873, %v1903
    %vm1926 = vcmask 523264
    %v1927 = vsel %vm1926, %v1925, %v1907
    %vm1928 = vcmask 785408
    %v1929 = vsel %vm1928, %v1927, %v1911
    %v1930 = vsel %vm141, %v1889, %v1915
    %v1931 = vsel %vm1926, %v1930, %v1919
    %v1932 = vsel %vm1928, %v1931, %v1923
    %v1933 = vld [vmem:[#allocation10] sm:$0xff]
    %v1934 = vld [vmem:[#allocation10 + $0x8] sm:$0xff]
    %v1935 = vld [vmem:[#allocation10 + $0x10] sm:$0xff]
    %v1936 = vld [vmem:[#allocation10 + $0x18] sm:$0xff]
    %v1937 = vld [vmem:[#allocation10 + $0x20] sm:$0xff]
    %v1938 = vld [vmem:[#allocation10 + $0x28] sm:$0xff]
    %v1939 = vld [vmem:[#allocation10 + $0x30] sm:$0xff]
    %v1940 = vld [vmem:[#allocation10 + $0x38] sm:$0xff]
    %v1941 = vld [vmem:[#allocation10 + $0x40] sm:$0xff]
    %v1942 = vld [vmem:[#allocation10 + $0x48] sm:$0xff]
    %v1943 = vld [vmem:[#allocation10 + $0x50] sm:$0xff]
    %v1944 = vld [vmem:[#allocation10 + $0x58] sm:$0xff]
    %v1945 = vld [vmem:[#allocation10 + $0x60] sm:$0xff]
    %v1946 = vld [vmem:[#allocation10 + $0x68] sm:$0xff]
    %v1947 = vld [vmem:[#allocation10 + $0x70] sm:$0xff]
    %v1948 = vld [vmem:[#allocation10 + $0x78] sm:$0xff]
    %v1949 = vld [vmem:[#allocation10 + $0x80] sm:$0xff]
    %v1950 = vld [vmem:[#allocation10 + $0x88] sm:$0xff]
    %v1951 = vld [vmem:[#allocation10 + $0x90] sm:$0xff]
    %v1952 = vld [vmem:[#allocation10 + $0x98] sm:$0xff]
    %v1953 = vld [vmem:[#allocation10 + $0xa0] sm:$0xff]
    %v1954 = vld [vmem:[#allocation10 + $0xa8] sm:$0xff]
    %v1955 = vld [vmem:[#allocation10 + $0xb0] sm:$0xff]
    %v1956 = vld [vmem:[#allocation10 + $0xb8] sm:$0xff]
    %v1957 = vld [vmem:[#allocation10 + $0xc0] sm:$0xff]
    %v1958 = vld [vmem:[#allocation10 + $0xc8] sm:$0xff]
    %v1959 = vld [vmem:[#allocation10 + $0xd0] sm:$0xff]
    %v1960 = vld [vmem:[#allocation10 + $0xd8] sm:$0xff]
    %v1961 = vld [vmem:[#allocation10 + $0xe0] sm:$0xff]
    %v1962 = vld [vmem:[#allocation10 + $0xe8] sm:$0xff]
    %v1963 = vld [vmem:[#allocation10 + $0xf0] sm:$0xff]
    %v1964 = vld [vmem:[#allocation10 + $0xf8] sm:$0xff]
    %v1965 = vld [vmem:[#allocation10 + $0x100] sm:$0xff]
    %v1966 = vld [vmem:[#allocation10 + $0x108] sm:$0xff]
    %v1967 = vld [vmem:[#allocation10 + $0x110] sm:$0xff]
    %v1968 = vld [vmem:[#allocation10 + $0x118] sm:$0xff]
    %v1969 = vld [vmem:[#allocation10 + $0x120] sm:$0xff]
    %v1970 = vld [vmem:[#allocation10 + $0x128] sm:$0xff]
    %v1971 = vld [vmem:[#allocation10 + $0x130] sm:$0xff]
    %v1972 = vld [vmem:[#allocation10 + $0x138] sm:$0xff]
    %v1973 = vld [vmem:[#allocation10 + $0x140] sm:$0xff]
    %v1974 = vld [vmem:[#allocation10 + $0x148] sm:$0xff]
    %v1975 = vld [vmem:[#allocation10 + $0x150] sm:$0xff]
    %v1976 = vld [vmem:[#allocation10 + $0x158] sm:$0xff]
    %v1977 = vld [vmem:[#allocation10 + $0x160] sm:$0xff]
    %v1978 = vld [vmem:[#allocation10 + $0x168] sm:$0xff]
    %v1979 = vld [vmem:[#allocation10 + $0x170] sm:$0xff]
    %v1980 = vld [vmem:[#allocation10 + $0x178] sm:$0xff]
    %v1981 = vld [vmem:[#allocation10 + $0x180] sm:$0xff]
    %v1982 = vld [vmem:[#allocation10 + $0x188] sm:$0xff]
    %v1983 = vld [vmem:[#allocation10 + $0x190] sm:$0xff]
    %v1984 = vld [vmem:[#allocation10 + $0x198] sm:$0xff]
    %v1985 = vld [vmem:[#allocation10 + $0x1a0] sm:$0xff]
    %v1986 = vld [vmem:[#allocation10 + $0x1a8] sm:$0xff]
    %v1987 = vld [vmem:[#allocation10 + $0x1b0] sm:$0xff]
    %v1988 = vld [vmem:[#allocation10 + $0x1b8] sm:$0xff]
    %v1989 = vld [vmem:[#allocation10 + $0x1c0] sm:$0xff]
    %v1990 = vld [vmem:[#allocation10 + $0x1c8] sm:$0xff]
    %v1991 = vld [vmem:[#allocation10 + $0x1d0] sm:$0xff]
    %v1992 = vld [vmem:[#allocation10 + $0x1d8] sm:$0xff]
    %v1993 = vld [vmem:[#allocation10 + $0x1e0] sm:$0xff]
    %v1994 = vld [vmem:[#allocation10 + $0x1e8] sm:$0xff]
    %v1995 = vld [vmem:[#allocation10 + $0x1f0] sm:$0xff]
    %v1996 = vld [vmem:[#allocation10 + $0x1f8] sm:$0xff]
    %v1997 = vld [vmem:[#allocation10 + $0x200] sm:$0xff]
    %v1998 = vld [vmem:[#allocation10 + $0x208] sm:$0xff]
    %v1999 = vld [vmem:[#allocation10 + $0x210] sm:$0xff]
    %v2000 = vld [vmem:[#allocation10 + $0x218] sm:$0xff]
    %v2001 = vld [vmem:[#allocation10 + $0x220] sm:$0xff]
    %v2002 = vld [vmem:[#allocation10 + $0x228] sm:$0xff]
    %v2003 = vld [vmem:[#allocation10 + $0x230] sm:$0xff]
    %v2004 = vld [vmem:[#allocation10 + $0x238] sm:$0xff]
    %v2005 = vld [vmem:[#allocation10 + $0x240] sm:$0xff]
    %v2006 = vld [vmem:[#allocation10 + $0x248] sm:$0xff]
    %v2007 = vld [vmem:[#allocation10 + $0x250] sm:$0xff]
    %v2008 = vld [vmem:[#allocation10 + $0x258] sm:$0xff]
    %v2009 = vld [vmem:[#allocation10 + $0x260] sm:$0xff]
    %v2010 = vld [vmem:[#allocation10 + $0x268] sm:$0xff]
    %v2011 = vld [vmem:[#allocation10 + $0x270] sm:$0xff]
    %v2012 = vld [vmem:[#allocation10 + $0x278] sm:$0xff]
    %v2013 = vld [vmem:[#allocation10 + $0x280] sm:$0xff]
    %v2014 = vld [vmem:[#allocation10 + $0x288] sm:$0xff]
    %v2015 = vld [vmem:[#allocation10 + $0x290] sm:$0xff]
    %v2016 = vld [vmem:[#allocation10 + $0x298] sm:$0xff]
    %v2017 = vld [vmem:[#allocation10 + $0x2a0] sm:$0xff]
    %v2018 = vld [vmem:[#allocation10 + $0x2a8] sm:$0xff]
    %v2019 = vld [vmem:[#allocation10 + $0x2b0] sm:$0xff]
    %v2020 = vld [vmem:[#allocation10 + $0x2b8] sm:$0xff]
    %v2021 = vld [vmem:[#allocation10 + $0x2c0] sm:$0xff]
    %v2022 = vld [vmem:[#allocation10 + $0x2c8] sm:$0xff]
    %v2023 = vld [vmem:[#allocation10 + $0x2d0] sm:$0xff]
    %v2024 = vld [vmem:[#allocation10 + $0x2d8] sm:$0xff]
    %v2025 = vld [vmem:[#allocation10 + $0x2e0] sm:$0xff]
    %v2026 = vld [vmem:[#allocation10 + $0x2e8] sm:$0xff]
    %v2027 = vld [vmem:[#allocation10 + $0x2f0] sm:$0xff]
    %v2028 = vld [vmem:[#allocation10 + $0x2f8] sm:$0xff]
    %v2029 = vld [vmem:[#allocation10 + $0x300] sm:$0xff]
    %v2030 = vld [vmem:[#allocation10 + $0x308] sm:$0xff]
    %v2031 = vld [vmem:[#allocation10 + $0x310] sm:$0xff]
    %v2032 = vld [vmem:[#allocation10 + $0x318] sm:$0xff]
    %v2033 = vld [vmem:[#allocation10 + $0x320] sm:$0xff]
    %v2034 = vld [vmem:[#allocation10 + $0x328] sm:$0xff]
    %v2035 = vld [vmem:[#allocation10 + $0x330] sm:$0xff]
    %v2036 = vld [vmem:[#allocation10 + $0x338] sm:$0xff]
    %v2037 = vld [vmem:[#allocation10 + $0x340] sm:$0xff]
    %v2038 = vld [vmem:[#allocation10 + $0x348] sm:$0xff]
    %v2039 = vld [vmem:[#allocation10 + $0x350] sm:$0xff]
    %v2040 = vld [vmem:[#allocation10 + $0x358] sm:$0xff]
    %v2041 = vld [vmem:[#allocation10 + $0x360] sm:$0xff]
    %v2042 = vld [vmem:[#allocation10 + $0x368] sm:$0xff]
    %v2043 = vld [vmem:[#allocation10 + $0x370] sm:$0xff]
    %v2044 = vld [vmem:[#allocation10 + $0x378] sm:$0xff]
    %v2045 = vld [vmem:[#allocation10 + $0x380] sm:$0xff]
    %v2046 = vld [vmem:[#allocation10 + $0x388] sm:$0xff]
    %v2047 = vld [vmem:[#allocation10 + $0x390] sm:$0xff]
    %v2048 = vld [vmem:[#allocation10 + $0x398] sm:$0xff]
    %v2049 = vld [vmem:[#allocation10 + $0x3a0] sm:$0xff]
    %v2050 = vld [vmem:[#allocation10 + $0x3a8] sm:$0xff]
    %v2051 = vld [vmem:[#allocation10 + $0x3b0] sm:$0xff]
    %v2052 = vld [vmem:[#allocation10 + $0x3b8] sm:$0xff]
    %v2053 = vld [vmem:[#allocation10 + $0x3c0] sm:$0xff]
    %v2054 = vld [vmem:[#allocation10 + $0x3c8] sm:$0xff]
    %v2055 = vld [vmem:[#allocation10 + $0x3d0] sm:$0xff]
    %v2056 = vld [vmem:[#allocation10 + $0x3d8] sm:$0xff]
    %v2057 = vld [vmem:[#allocation10 + $0x3e0] sm:$0xff]
    %v2058 = vld [vmem:[#allocation10 + $0x3e8] sm:$0xff]
    %v2059 = vld [vmem:[#allocation10 + $0x3f0] sm:$0xff]
    %v2060 = vld [vmem:[#allocation10 + $0x3f8] sm:$0xff]
    %v2061 = vld [vmem:[%s10] sm:$0xf]
    %v2063 = vlaneseq
    %v2064 = vshrl.u32 %v2063, 7
    %v2065 = vsub.s32 0, %v2064
    %v2066 = vrot.slane %v2061, %v2065
    %v2067 = vlaneseq
    %v2068 = vshrl.u32 %v2067, 7
    %v2069 = vsub.s32 1, %v2068
    %v2070 = vrot.slane %v2061, %v2069
    %v2071 = vlaneseq
    %v2072 = vshrl.u32 %v2071, 7
    %v2073 = vsub.s32 2, %v2072
    %v2074 = vrot.slane %v2061, %v2073
    %v2075 = vlaneseq
    %v2076 = vshrl.u32 %v2075, 7
    %v2077 = vsub.s32 3, %v2076
    %v2078 = vrot.slane %v2061, %v2077
    %2083 = vmatprep.subr.mxu0 %v1934
    %2084 = vmatpush1.msra.mxu0 %v1933
    %2085 = vmatprep.subr.mxu0 %v1938
    %2086 = vmatpush1.msra.mxu0 %v1937
    %2087 = vmatprep.subr.mxu0 %v1942
    %2088 = vmatpush1.msra.mxu0 %v1941
    %2089 = vmatprep.subr.mxu0 %v1946
    %2090 = vmatpush1.msra.mxu0 %v1945
    %2091 = vmatprep.subr.mxu0 %v1950
    %2092 = vmatpush1.msra.mxu0 %v1949
    %2093 = vmatprep.subr.mxu0 %v1954
    %2094 = vmatpush1.msra.mxu0 %v1953
    %2095 = vmatprep.subr.mxu0 %v1958
    %2096 = vmatpush1.msra.mxu0 %v1957
    %2097 = vmatprep.subr.mxu0 %v1962
    %2098 = vmatpush1.msra.mxu0 %v1961
    %2099 = vmatprep.subr.mxu0 %v1966
    %2100 = vmatpush1.msra.mxu0 %v1965
    %2101 = vmatprep.subr.mxu0 %v1970
    %2102 = vmatpush1.msra.mxu0 %v1969
    %2103 = vmatprep.subr.mxu0 %v1974
    %2104 = vmatpush1.msra.mxu0 %v1973
    %2105 = vmatprep.subr.mxu0 %v1978
    %2106 = vmatpush1.msra.mxu0 %v1977
    %2107 = vmatprep.subr.mxu0 %v1982
    %2108 = vmatpush1.msra.mxu0 %v1981
    %2109 = vmatprep.subr.mxu0 %v1986
    %2110 = vmatpush1.msra.mxu0 %v1985
    %2111 = vmatprep.subr.mxu0 %v1990
    %2112 = vmatpush1.msra.mxu0 %v1989
    %2113 = vmatprep.subr.mxu0 %v1994
    %2114 = vmatpush1.msra.mxu0 %v1993
    %2115 = vmatprep.subr.mxu0 %v1998
    %2116 = vmatpush1.msra.mxu0 %v1997
    %2117 = vmatprep.subr.mxu0 %v2002
    %2118 = vmatpush1.msra.mxu0 %v2001
    %2119 = vmatprep.subr.mxu0 %v2006
    %2120 = vmatpush1.msra.mxu0 %v2005
    %2121 = vmatprep.subr.mxu0 %v2010
    %2122 = vmatpush1.msra.mxu0 %v2009
    %2123 = vmatprep.subr.mxu0 %v2014
    %2124 = vmatpush1.msra.mxu0 %v2013
    %2125 = vmatprep.subr.mxu0 %v2018
    %2126 = vmatpush1.msra.mxu0 %v2017
    %2127 = vmatprep.subr.mxu0 %v2022
    %2128 = vmatpush1.msra.mxu0 %v2021
    %2129 = vmatprep.subr.mxu0 %v2026
    %2130 = vmatpush1.msra.mxu0 %v2025
    %2131 = vmatprep.subr.mxu0 %v2030
    %2132 = vmatpush1.msra.mxu0 %v2029
    %2133 = vmatprep.subr.mxu0 %v2034
    %2134 = vmatpush1.msra.mxu0 %v2033
    %2135 = vmatprep.subr.mxu0 %v2038
    %2136 = vmatpush1.msra.mxu0 %v2037
    %2137 = vmatprep.subr.mxu0 %v2042
    %2138 = vmatpush1.msra.mxu0 %v2041
    %2139 = vmatprep.subr.mxu0 %v2046
    %2140 = vmatpush1.msra.mxu0 %v2045
    %2141 = vmatprep.subr.mxu0 %v2050
    %2142 = vmatpush1.msra.mxu0 %v2049
    %2143 = vmatprep.subr.mxu0 %v2054
    %2144 = vmatpush1.msra.mxu0 %v2053
    %2145 = vmatprep.subr.mxu0 %v2058
    %2146 = vmatpush1.msra.mxu0 %v2057
    %2147 = vmatprep.mubr.f32.mxu0 %v1932
    %2148 = vmatmul.mubr.f32.gmra.mrb[0].mxu0 %v1929
    %v2149 = vpop.f32.mrb[0].mxu0
    %v2150 = vadd.f32 %v2066, %v2149
    %v2151 = vpop.f32.mrb[0].mxu0
    %v2152 = vadd.f32 %v2070, %v2151
    %2153 = vdwg.mxu0
    %2154 = vmatprep.subr.mxu0 %v1936
    %2155 = vmatpush1.msra.mxu0 %v1935
    %2156 = vmatprep.subr.mxu0 %v1940
    %2157 = vmatpush1.msra.mxu0 %v1939
    %2158 = vmatprep.subr.mxu0 %v1944
    %2159 = vmatpush1.msra.mxu0 %v1943
    %2160 = vmatprep.subr.mxu0 %v1948
    %2161 = vmatpush1.msra.mxu0 %v1947
    %2162 = vmatprep.subr.mxu0 %v1952
    %2163 = vmatpush1.msra.mxu0 %v1951
    %2164 = vmatprep.subr.mxu0 %v1956
    %2165 = vmatpush1.msra.mxu0 %v1955
    %2166 = vmatprep.subr.mxu0 %v1960
    %2167 = vmatpush1.msra.mxu0 %v1959
    %2168 = vmatprep.subr.mxu0 %v1964
    %2169 = vmatpush1.msra.mxu0 %v1963
    %2170 = vmatprep.subr.mxu0 %v1968
    %2171 = vmatpush1.msra.mxu0 %v1967
    %2172 = vmatprep.subr.mxu0 %v1972
    %2173 = vmatpush1.msra.mxu0 %v1971
    %2174 = vmatprep.subr.mxu0 %v1976
    %2175 = vmatpush1.msra.mxu0 %v1975
    %2176 = vmatprep.subr.mxu0 %v1980
    %2177 = vmatpush1.msra.mxu0 %v1979
    %2178 = vmatprep.subr.mxu0 %v1984
    %2179 = vmatpush1.msra.mxu0 %v1983
    %2180 = vmatprep.subr.mxu0 %v1988
    %2181 = vmatpush1.msra.mxu0 %v1987
    %2182 = vmatprep.subr.mxu0 %v1992
    %2183 = vmatpush1.msra.mxu0 %v1991
    %2184 = vmatprep.subr.mxu0 %v1996
    %2185 = vmatpush1.msra.mxu0 %v1995
    %2186 = vmatprep.subr.mxu0 %v2000
    %2187 = vmatpush1.msra.mxu0 %v1999
    %2188 = vmatprep.subr.mxu0 %v2004
    %2189 = vmatpush1.msra.mxu0 %v2003
    %2190 = vmatprep.subr.mxu0 %v2008
    %2191 = vmatpush1.msra.mxu0 %v2007
    %2192 = vmatprep.subr.mxu0 %v2012
    %2193 = vmatpush1.msra.mxu0 %v2011
    %2194 = vmatprep.subr.mxu0 %v2016
    %2195 = vmatpush1.msra.mxu0 %v2015
    %2196 = vmatprep.subr.mxu0 %v2020
    %2197 = vmatpush1.msra.mxu0 %v2019
    %2198 = vmatprep.subr.mxu0 %v2024
    %2199 = vmatpush1.msra.mxu0 %v2023
    %2200 = vmatprep.subr.mxu0 %v2028
    %2201 = vmatpush1.msra.mxu0 %v2027
    %2202 = vmatprep.subr.mxu0 %v2032
    %2203 = vmatpush1.msra.mxu0 %v2031
    %2204 = vmatprep.subr.mxu0 %v2036
    %2205 = vmatpush1.msra.mxu0 %v2035
    %2206 = vmatprep.subr.mxu0 %v2040
    %2207 = vmatpush1.msra.mxu0 %v2039
    %2208 = vmatprep.subr.mxu0 %v2044
    %2209 = vmatpush1.msra.mxu0 %v2043
    %2210 = vmatprep.subr.mxu0 %v2048
    %2211 = vmatpush1.msra.mxu0 %v2047
    %2212 = vmatprep.subr.mxu0 %v2052
    %2213 = vmatpush1.msra.mxu0 %v2051
    %2214 = vmatprep.subr.mxu0 %v2056
    %2215 = vmatpush1.msra.mxu0 %v2055
    %2216 = vmatprep.subr.mxu0 %v2060
    %2217 = vmatpush1.msra.mxu0 %v2059
    %2218 = vmatprep.mubr.f32.mxu0 %v1932
    %2219 = vmatmul.mubr.f32.gmra.mrb[0].mxu0 %v1929
    %v2220 = vpop.f32.mrb[0].mxu0
    %v2221 = vadd.f32 %v2074, %v2220
    %v2222 = vpop.f32.mrb[0].mxu0
    %v2223 = vadd.f32 %v2078, %v2222
    %2224 = vdwg.mxu0
    %v2225 = vmax.f32 %v2150, 0.0
    %v2226 = vmax.f32 %v2152, 0.0
    %v2227 = vmax.f32 %v2221, 0.0
    %v2228 = vmax.f32 %v2223, 0.0
    %v2229 = vld [vmem:[#allocation11] sm:$0xff]
    %v2230 = vld [vmem:[#allocation11 + $0x8] sm:$0xff]
    %v2231 = vld [vmem:[#allocation11 + $0x10] sm:$0xff]
    %v2232 = vld [vmem:[#allocation11 + $0x18] sm:$0xff]
    %v2233 = vld [vmem:[#allocation11 + $0x20] sm:$0xff]
    %v2234 = vld [vmem:[#allocation11 + $0x28] sm:$0xff]
    %v2235 = vld [vmem:[#allocation11 + $0x30] sm:$0xff]
    %v2236 = vld [vmem:[#allocation11 + $0x38] sm:$0xff]
    %v2237 = vld [vmem:[#allocation11 + $0x40] sm:$0xff]
    %v2238 = vld [vmem:[#allocation11 + $0x48] sm:$0xff]
    %v2239 = vld [vmem:[#allocation11 + $0x50] sm:$0xff]
    %v2240 = vld [vmem:[#allocation11 + $0x58] sm:$0xff]
    %v2241 = vld [vmem:[#allocation11 + $0x60] sm:$0xff]
    %v2242 = vld [vmem:[#allocation11 + $0x68] sm:$0xff]
    %v2243 = vld [vmem:[#allocation11 + $0x70] sm:$0xff]
    %v2244 = vld [vmem:[#allocation11 + $0x78] sm:$0xff]
    %v2245 = vld [vmem:[#allocation11 + $0x80] sm:$0xff]
    %v2246 = vld [vmem:[#allocation11 + $0x88] sm:$0xff]
    %v2247 = vld [vmem:[#allocation11 + $0x90] sm:$0xff]
    %v2248 = vld [vmem:[#allocation11 + $0x98] sm:$0xff]
    %v2249 = vld [vmem:[#allocation11 + $0xa0] sm:$0xff]
    %v2250 = vld [vmem:[#allocation11 + $0xa8] sm:$0xff]
    %v2251 = vld [vmem:[#allocation11 + $0xb0] sm:$0xff]
    %v2252 = vld [vmem:[#allocation11 + $0xb8] sm:$0xff]
    %v2253 = vld [vmem:[#allocation11 + $0xc0] sm:$0xff]
    %v2254 = vld [vmem:[#allocation11 + $0xc8] sm:$0xff]
    %v2255 = vld [vmem:[#allocation11 + $0xd0] sm:$0xff]
    %v2256 = vld [vmem:[#allocation11 + $0xd8] sm:$0xff]
    %v2257 = vld [vmem:[#allocation11 + $0xe0] sm:$0xff]
    %v2258 = vld [vmem:[#allocation11 + $0xe8] sm:$0xff]
    %v2259 = vld [vmem:[#allocation11 + $0xf0] sm:$0xff]
    %v2260 = vld [vmem:[#allocation11 + $0xf8] sm:$0xff]
    %v2261 = vld [vmem:[#allocation11 + $0x100] sm:$0xff]
    %v2262 = vld [vmem:[#allocation11 + $0x108] sm:$0xff]
    %v2263 = vld [vmem:[#allocation11 + $0x110] sm:$0xff]
    %v2264 = vld [vmem:[#allocation11 + $0x118] sm:$0xff]
    %v2265 = vld [vmem:[#allocation11 + $0x120] sm:$0xff]
    %v2266 = vld [vmem:[#allocation11 + $0x128] sm:$0xff]
    %v2267 = vld [vmem:[#allocation11 + $0x130] sm:$0xff]
    %v2268 = vld [vmem:[#allocation11 + $0x138] sm:$0xff]
    %v2269 = vld [vmem:[#allocation11 + $0x140] sm:$0xff]
    %v2270 = vld [vmem:[#allocation11 + $0x148] sm:$0xff]
    %v2271 = vld [vmem:[#allocation11 + $0x150] sm:$0xff]
    %v2272 = vld [vmem:[#allocation11 + $0x158] sm:$0xff]
    %v2273 = vld [vmem:[#allocation11 + $0x160] sm:$0xff]
    %v2274 = vld [vmem:[#allocation11 + $0x168] sm:$0xff]
    %v2275 = vld [vmem:[#allocation11 + $0x170] sm:$0xff]
    %v2276 = vld [vmem:[#allocation11 + $0x178] sm:$0xff]
    %v2277 = vld [vmem:[#allocation11 + $0x180] sm:$0xff]
    %v2278 = vld [vmem:[#allocation11 + $0x188] sm:$0xff]
    %v2279 = vld [vmem:[#allocation11 + $0x190] sm:$0xff]
    %v2280 = vld [vmem:[#allocation11 + $0x198] sm:$0xff]
    %v2281 = vld [vmem:[#allocation11 + $0x1a0] sm:$0xff]
    %v2282 = vld [vmem:[#allocation11 + $0x1a8] sm:$0xff]
    %v2283 = vld [vmem:[#allocation11 + $0x1b0] sm:$0xff]
    %v2284 = vld [vmem:[#allocation11 + $0x1b8] sm:$0xff]
    %v2285 = vld [vmem:[#allocation11 + $0x1c0] sm:$0xff]
    %v2286 = vld [vmem:[#allocation11 + $0x1c8] sm:$0xff]
    %v2287 = vld [vmem:[#allocation11 + $0x1d0] sm:$0xff]
    %v2288 = vld [vmem:[#allocation11 + $0x1d8] sm:$0xff]
    %v2289 = vld [vmem:[#allocation11 + $0x1e0] sm:$0xff]
    %v2290 = vld [vmem:[#allocation11 + $0x1e8] sm:$0xff]
    %v2291 = vld [vmem:[#allocation11 + $0x1f0] sm:$0xff]
    %v2292 = vld [vmem:[#allocation11 + $0x1f8] sm:$0xff]
    %v2293 = vld [vmem:[#allocation11 + $0x200] sm:$0xff]
    %v2294 = vld [vmem:[#allocation11 + $0x208] sm:$0xff]
    %v2295 = vld [vmem:[#allocation11 + $0x210] sm:$0xff]
    %v2296 = vld [vmem:[#allocation11 + $0x218] sm:$0xff]
    %v2297 = vld [vmem:[#allocation11 + $0x220] sm:$0xff]
    %v2298 = vld [vmem:[#allocation11 + $0x228] sm:$0xff]
    %v2299 = vld [vmem:[#allocation11 + $0x230] sm:$0xff]
    %v2300 = vld [vmem:[#allocation11 + $0x238] sm:$0xff]
    %v2301 = vld [vmem:[#allocation11 + $0x240] sm:$0xff]
    %v2302 = vld [vmem:[#allocation11 + $0x248] sm:$0xff]
    %v2303 = vld [vmem:[#allocation11 + $0x250] sm:$0xff]
    %v2304 = vld [vmem:[#allocation11 + $0x258] sm:$0xff]
    %v2305 = vld [vmem:[#allocation11 + $0x260] sm:$0xff]
    %v2306 = vld [vmem:[#allocation11 + $0x268] sm:$0xff]
    %v2307 = vld [vmem:[#allocation11 + $0x270] sm:$0xff]
    %v2308 = vld [vmem:[#allocation11 + $0x278] sm:$0xff]
    %v2309 = vld [vmem:[#allocation11 + $0x280] sm:$0xff]
    %v2310 = vld [vmem:[#allocation11 + $0x288] sm:$0xff]
    %v2311 = vld [vmem:[#allocation11 + $0x290] sm:$0xff]
    %v2312 = vld [vmem:[#allocation11 + $0x298] sm:$0xff]
    %v2313 = vld [vmem:[#allocation11 + $0x2a0] sm:$0xff]
    %v2314 = vld [vmem:[#allocation11 + $0x2a8] sm:$0xff]
    %v2315 = vld [vmem:[#allocation11 + $0x2b0] sm:$0xff]
    %v2316 = vld [vmem:[#allocation11 + $0x2b8] sm:$0xff]
    %v2317 = vld [vmem:[#allocation11 + $0x2c0] sm:$0xff]
    %v2318 = vld [vmem:[#allocation11 + $0x2c8] sm:$0xff]
    %v2319 = vld [vmem:[#allocation11 + $0x2d0] sm:$0xff]
    %v2320 = vld [vmem:[#allocation11 + $0x2d8] sm:$0xff]
    %v2321 = vld [vmem:[#allocation11 + $0x2e0] sm:$0xff]
    %v2322 = vld [vmem:[#allocation11 + $0x2e8] sm:$0xff]
    %v2323 = vld [vmem:[#allocation11 + $0x2f0] sm:$0xff]
    %v2324 = vld [vmem:[#allocation11 + $0x2f8] sm:$0xff]
    %v2325 = vld [vmem:[#allocation11 + $0x300] sm:$0xff]
    %v2326 = vld [vmem:[#allocation11 + $0x308] sm:$0xff]
    %v2327 = vld [vmem:[#allocation11 + $0x310] sm:$0xff]
    %v2328 = vld [vmem:[#allocation11 + $0x318] sm:$0xff]
    %v2329 = vld [vmem:[#allocation11 + $0x320] sm:$0xff]
    %v2330 = vld [vmem:[#allocation11 + $0x328] sm:$0xff]
    %v2331 = vld [vmem:[#allocation11 + $0x330] sm:$0xff]
    %v2332 = vld [vmem:[#allocation11 + $0x338] sm:$0xff]
    %v2333 = vld [vmem:[#allocation11 + $0x340] sm:$0xff]
    %v2334 = vld [vmem:[#allocation11 + $0x348] sm:$0xff]
    %v2335 = vld [vmem:[#allocation11 + $0x350] sm:$0xff]
    %v2336 = vld [vmem:[#allocation11 + $0x358] sm:$0xff]
    %v2337 = vld [vmem:[#allocation11 + $0x360] sm:$0xff]
    %v2338 = vld [vmem:[#allocation11 + $0x368] sm:$0xff]
    %v2339 = vld [vmem:[#allocation11 + $0x370] sm:$0xff]
    %v2340 = vld [vmem:[#allocation11 + $0x378] sm:$0xff]
    %v2341 = vld [vmem:[#allocation11 + $0x380] sm:$0xff]
    %v2342 = vld [vmem:[#allocation11 + $0x388] sm:$0xff]
    %v2343 = vld [vmem:[#allocation11 + $0x390] sm:$0xff]
    %v2344 = vld [vmem:[#allocation11 + $0x398] sm:$0xff]
    %v2345 = vld [vmem:[#allocation11 + $0x3a0] sm:$0xff]
    %v2346 = vld [vmem:[#allocation11 + $0x3a8] sm:$0xff]
    %v2347 = vld [vmem:[#allocation11 + $0x3b0] sm:$0xff]
    %v2348 = vld [vmem:[#allocation11 + $0x3b8] sm:$0xff]
    %v2349 = vld [vmem:[#allocation11 + $0x3c0] sm:$0xff]
    %v2350 = vld [vmem:[#allocation11 + $0x3c8] sm:$0xff]
    %v2351 = vld [vmem:[#allocation11 + $0x3d0] sm:$0xff]
    %v2352 = vld [vmem:[#allocation11 + $0x3d8] sm:$0xff]
    %v2353 = vld [vmem:[#allocation11 + $0x3e0] sm:$0xff]
    %v2354 = vld [vmem:[#allocation11 + $0x3e8] sm:$0xff]
    %v2355 = vld [vmem:[#allocation11 + $0x3f0] sm:$0xff]
    %v2356 = vld [vmem:[#allocation11 + $0x3f8] sm:$0xff]
    %v2357 = vld [vmem:[%s12] sm:$0x3]
    %v2359 = vlaneseq
    %v2360 = vshrl.u32 %v2359, 7
    %v2361 = vsub.s32 0, %v2360
    %v2362 = vrot.slane %v2357, %v2361
    %v2363 = vlaneseq
    %v2364 = vshrl.u32 %v2363, 7
    %v2365 = vsub.s32 1, %v2364
    %v2366 = vrot.slane %v2357, %v2365
    %2369 = vmatprep.subr.mxu0 %v2230
    %2370 = vmatpush1.msra.mxu0 %v2229
    %2371 = vmatprep.subr.mxu0 %v2232
    %2372 = vmatpush1.msra.mxu0 %v2231
    %2373 = vmatprep.subr.mxu0 %v2234
    %2374 = vmatpush1.msra.mxu0 %v2233
    %2375 = vmatprep.subr.mxu0 %v2236
    %2376 = vmatpush1.msra.mxu0 %v2235
    %2377 = vmatprep.subr.mxu0 %v2238
    %2378 = vmatpush1.msra.mxu0 %v2237
    %2379 = vmatprep.subr.mxu0 %v2240
    %2380 = vmatpush1.msra.mxu0 %v2239
    %2381 = vmatprep.subr.mxu0 %v2242
    %2382 = vmatpush1.msra.mxu0 %v2241
    %2383 = vmatprep.subr.mxu0 %v2244
    %2384 = vmatpush1.msra.mxu0 %v2243
    %2385 = vmatprep.subr.mxu0 %v2246
    %2386 = vmatpush1.msra.mxu0 %v2245
    %2387 = vmatprep.subr.mxu0 %v2248
    %2388 = vmatpush1.msra.mxu0 %v2247
    %2389 = vmatprep.subr.mxu0 %v2250
    %2390 = vmatpush1.msra.mxu0 %v2249
    %2391 = vmatprep.subr.mxu0 %v2252
    %2392 = vmatpush1.msra.mxu0 %v2251
    %2393 = vmatprep.subr.mxu0 %v2254
    %2394 = vmatpush1.msra.mxu0 %v2253
    %2395 = vmatprep.subr.mxu0 %v2256
    %2396 = vmatpush1.msra.mxu0 %v2255
    %2397 = vmatprep.subr.mxu0 %v2258
    %2398 = vmatpush1.msra.mxu0 %v2257
    %2399 = vmatprep.subr.mxu0 %v2260
    %2400 = vmatpush1.msra.mxu0 %v2259
    %2401 = vmatprep.subr.mxu0 %v2262
    %2402 = vmatpush1.msra.mxu0 %v2261
    %2403 = vmatprep.subr.mxu0 %v2264
    %2404 = vmatpush1.msra.mxu0 %v2263
    %2405 = vmatprep.subr.mxu0 %v2266
    %2406 = vmatpush1.msra.mxu0 %v2265
    %2407 = vmatprep.subr.mxu0 %v2268
    %2408 = vmatpush1.msra.mxu0 %v2267
    %2409 = vmatprep.subr.mxu0 %v2270
    %2410 = vmatpush1.msra.mxu0 %v2269
    %2411 = vmatprep.subr.mxu0 %v2272
    %2412 = vmatpush1.msra.mxu0 %v2271
    %2413 = vmatprep.subr.mxu0 %v2274
    %2414 = vmatpush1.msra.mxu0 %v2273
    %2415 = vmatprep.subr.mxu0 %v2276
    %2416 = vmatpush1.msra.mxu0 %v2275
    %2417 = vmatprep.subr.mxu0 %v2278
    %2418 = vmatpush1.msra.mxu0 %v2277
    %2419 = vmatprep.subr.mxu0 %v2280
    %2420 = vmatpush1.msra.mxu0 %v2279
    %2421 = vmatprep.subr.mxu0 %v2282
    %2422 = vmatpush1.msra.mxu0 %v2281
    %2423 = vmatprep.subr.mxu0 %v2284
    %2424 = vmatpush1.msra.mxu0 %v2283
    %2425 = vmatprep.subr.mxu0 %v2286
    %2426 = vmatpush1.msra.mxu0 %v2285
    %2427 = vmatprep.subr.mxu0 %v2288
    %2428 = vmatpush1.msra.mxu0 %v2287
    %2429 = vmatprep.subr.mxu0 %v2290
    %2430 = vmatpush1.msra.mxu0 %v2289
    %2431 = vmatprep.subr.mxu0 %v2292
    %2432 = vmatpush1.msra.mxu0 %v2291
    %2433 = vmatprep.mubr.f32.mxu0 %v2226
    %2434 = vmatmul.mubr.f32.gmra.mrb[0].mxu0 %v2225
    %v2435 = vpop.f32.mrb[0].mxu0
    %v2436 = vadd.f32 %v2362, %v2435
    %v2437 = vpop.f32.mrb[0].mxu0
    %v2438 = vadd.f32 %v2366, %v2437
    %2439 = vdwg.mxu0
    %2440 = vmatprep.subr.mxu0 %v2294
    %2441 = vmatpush1.msra.mxu0 %v2293
    %2442 = vmatprep.subr.mxu0 %v2296
    %2443 = vmatpush1.msra.mxu0 %v2295
    %2444 = vmatprep.subr.mxu0 %v2298
    %2445 = vmatpush1.msra.mxu0 %v2297
    %2446 = vmatprep.subr.mxu0 %v2300
    %2447 = vmatpush1.msra.mxu0 %v2299
    %2448 = vmatprep.subr.mxu0 %v2302
    %2449 = vmatpush1.msra.mxu0 %v2301
    %2450 = vmatprep.subr.mxu0 %v2304
    %2451 = vmatpush1.msra.mxu0 %v2303
    %2452 = vmatprep.subr.mxu0 %v2306
    %2453 = vmatpush1.msra.mxu0 %v2305
    %2454 = vmatprep.subr.mxu0 %v2308
    %2455 = vmatpush1.msra.mxu0 %v2307
    %2456 = vmatprep.subr.mxu0 %v2310
    %2457 = vmatpush1.msra.mxu0 %v2309
    %2458 = vmatprep.subr.mxu0 %v2312
    %2459 = vmatpush1.msra.mxu0 %v2311
    %2460 = vmatprep.subr.mxu0 %v2314
    %2461 = vmatpush1.msra.mxu0 %v2313
    %2462 = vmatprep.subr.mxu0 %v2316
    %2463 = vmatpush1.msra.mxu0 %v2315
    %2464 = vmatprep.subr.mxu0 %v2318
    %2465 = vmatpush1.msra.mxu0 %v2317
    %2466 = vmatprep.subr.mxu0 %v2320
    %2467 = vmatpush1.msra.mxu0 %v2319
    %2468 = vmatprep.subr.mxu0 %v2322
    %2469 = vmatpush1.msra.mxu0 %v2321
    %2470 = vmatprep.subr.mxu0 %v2324
    %2471 = vmatpush1.msra.mxu0 %v2323
    %2472 = vmatprep.subr.mxu0 %v2326
    %2473 = vmatpush1.msra.mxu0 %v2325
    %2474 = vmatprep.subr.mxu0 %v2328
    %2475 = vmatpush1.msra.mxu0 %v2327
    %2476 = vmatprep.subr.mxu0 %v2330
    %2477 = vmatpush1.msra.mxu0 %v2329
    %2478 = vmatprep.subr.mxu0 %v2332
    %2479 = vmatpush1.msra.mxu0 %v2331
    %2480 = vmatprep.subr.mxu0 %v2334
    %2481 = vmatpush1.msra.mxu0 %v2333
    %2482 = vmatprep.subr.mxu0 %v2336
    %2483 = vmatpush1.msra.mxu0 %v2335
    %2484 = vmatprep.subr.mxu0 %v2338
    %2485 = vmatpush1.msra.mxu0 %v2337
    %2486 = vmatprep.subr.mxu0 %v2340
    %2487 = vmatpush1.msra.mxu0 %v2339
    %2488 = vmatprep.subr.mxu0 %v2342
    %2489 = vmatpush1.msra.mxu0 %v2341
    %2490 = vmatprep.subr.mxu0 %v2344
    %2491 = vmatpush1.msra.mxu0 %v2343
    %2492 = vmatprep.subr.mxu0 %v2346
    %2493 = vmatpush1.msra.mxu0 %v2345
    %2494 = vmatprep.subr.mxu0 %v2348
    %2495 = vmatpush1.msra.mxu0 %v2347
    %2496 = vmatprep.subr.mxu0 %v2350
    %2497 = vmatpush1.msra.mxu0 %v2349
    %2498 = vmatprep.subr.mxu0 %v2352
    %2499 = vmatpush1.msra.mxu0 %v2351
    %2500 = vmatprep.subr.mxu0 %v2354
    %2501 = vmatpush1.msra.mxu0 %v2353
    %2502 = vmatprep.subr.mxu0 %v2356
    %2503 = vmatpush1.msra.mxu0 %v2355
    %2504 = vmatprep.mubr.f32.mxu0 %v2228
    %2505 = vmatmul.mubr.f32.gmra.mrb[0].mxu0 %v2227
    %v2506 = vpop.f32.mrb[0].mxu0
    %v2507 = vadd.f32 %v2436, %v2506
    %v2508 = vpop.f32.mrb[0].mxu0
    %v2509 = vadd.f32 %v2438, %v2508
    %2510 = vdwg.mxu0
    %v2511 = vcombine.high %v1791, 0.0
    %v2513 = vunpack.c.l.s4 1983009808
    %v2514 = vunpack.c.0.s8 %v2513
    %v2515 = vlaneseq
    %v2516 = vshrl.u32 %v2515, 7
    %v2517 = vsub.s32 %v2514, %v2516
    %v2518 = vrot.slane %v1791, %v2517
    %v2520 = vunpack.c.l.s4 1983009808
    %v2521 = vunpack.c.0.s8 %v2520
    %v2522 = vlaneseq
    %v2523 = vshrl.u32 %v2522, 7
    %v2524 = vsub.s32 %v2521, %v2523
    %v2525 = vrot.slane %v2511, %v2524
    %v2526 = vcombine.high %v1792, 0.0
    %v2528 = vunpack.c.l.s4 1983009808
    %v2529 = vunpack.c.0.s8 %v2528
    %v2530 = vlaneseq
    %v2531 = vshrl.u32 %v2530, 7
    %v2532 = vsub.s32 %v2529, %v2531
    %v2533 = vrot.slane %v1792, %v2532
    %v2535 = vunpack.c.l.s4 1983009808
    %v2536 = vunpack.c.0.s8 %v2535
    %v2537 = vlaneseq
    %v2538 = vshrl.u32 %v2537, 7
    %v2539 = vsub.s32 %v2536, %v2538
    %v2540 = vrot.slane %v2526, %v2539
    %v2541 = vcombine.low %v2518, %v2533
    %v2542 = vcombine.high %v2518, %v2533
    %v2544 = vunpack.c.l.s4 1934713408
    %v2545 = vunpack.c.0.s8 %v2544
    %v2546 = vlaneseq
    %v2547 = vshrl.u32 %v2546, 7
    %v2548 = vsub.s32 %v2545, %v2547
    %v2549 = vrot.slane %v2541, %v2548
    %v2551 = vunpack.c.l.s4 1934713408
    %v2552 = vunpack.c.0.s8 %v2551
    %v2553 = vlaneseq
    %v2554 = vshrl.u32 %v2553, 7
    %v2555 = vsub.s32 %v2552, %v2554
    %v2556 = vrot.slane %v2542, %v2555
    %v2557 = vcombine.low %v2525, %v2540
    %v2558 = vcombine.high %v2525, %v2540
    %v2560 = vunpack.c.l.s4 1934713408
    %v2561 = vunpack.c.0.s8 %v2560
    %v2562 = vlaneseq
    %v2563 = vshrl.u32 %v2562, 7
    %v2564 = vsub.s32 %v2561, %v2563
    %v2565 = vrot.slane %v2557, %v2564
    %v2567 = vunpack.c.l.s4 1934713408
    %v2568 = vunpack.c.0.s8 %v2567
    %v2569 = vlaneseq
    %v2570 = vshrl.u32 %v2569, 7
    %v2571 = vsub.s32 %v2568, %v2570
    %v2572 = vrot.slane %v2558, %v2571
    %v2573 = vcombine.high %v2549, 0.0
    %v2574 = vcombine.high %v2556, 0.0
    %v2575 = vcombine.high %v2565, 0.0
    %v2576 = vcombine.high %v2572, 0.0
    %2578 = vrot.lane.b32.xlu0 %v2573, 32
    %v2579 = vpop.permute.xlu0 %2578
    %2582 = vrot.lane.b32.xlu0 %v2556, 64
    %v2583 = vpop.permute.xlu0 %2582
    %2586 = vrot.lane.b32.xlu0 %v2574, 96
    %v2587 = vpop.permute.xlu0 %2586
    %2590 = vrot.lane.b32.xlu0 %v2575, 32
    %v2591 = vpop.permute.xlu0 %2590
    %2594 = vrot.lane.b32.xlu0 %v2572, 64
    %v2595 = vpop.permute.xlu0 %2594
    %2598 = vrot.lane.b32.xlu0 %v2576, 96
    %v2599 = vpop.permute.xlu0 %2598
    %v2601 = vsel %vm141, %v2549, %v2579
    %v2602 = vsel %vm1926, %v2601, %v2583
    %v2603 = vsel %vm1928, %v2602, %v2587
    %v2604 = vsel %vm141, %v2565, %v2591
    %v2605 = vsel %vm1926, %v2604, %v2595
    %v2606 = vsel %vm1928, %v2605, %v2599
    %v2607 = vadd.f32 %v2507, %v2603
    %v2608 = vadd.f32 %v2509, %v2606
    %v2611 = vcombine.low %v2607, %v2608
    %v2613 = vunpack.c.l.s4 1983009808
    %v2614 = vunpack.c.0.s8 %v2613
    %v2615 = vlaneseq
    %v2616 = vshrl.u32 %v2615, 7
    %v2617 = vsub.s32 %v2614, %v2616
    %v2618 = vrot.slane %v2611, %v2617
    %2620 = vst [vmem:[#allocation13] sm:$0xf] %v2618
    // Predicated region
    $region78: #{tpu_custom_call.1} parent=1 // pred_check
      _
    $region79: #{tpu_custom_call.1} parent=1 // pred_check_branch
      %2622 = sbr.rel (0) target = $region81
    $region80: #{tpu_custom_call.1} parent=1 // pred_region
      %s2624 = ssub.s32 64, 64
      %2625 = vsyncadd [#allocation4], %s2624
      %s2627 = sshll.u32 [#allocation13], 4
      %s2628 = int_to_ptr.vmem [resolvable:$true] %s2627
      %2630 = dma.vmem_to_hbm [thread:$0]  %s2628, 64, %s13, [#allocation4]
    $region81: #{tpu_custom_call.1} parent=1 // pred_fallthru
      _
    // Predicated region
    $region82: #{tpu_custom_call.1} parent=1 // pred_check
      _
    $region83: #{tpu_custom_call.1} parent=1 // pred_check_branch
      %2632 = sbr.rel (0) target = $region85
    $region84: #{tpu_custom_call.1} parent=1 // pred_region
      %2633 = dma.done [#allocation4], 64
    $region85: #{tpu_custom_call.1} parent=1 // pred_fallthru
      _
    %2634 = vsyncpa [#allocation3], 1
    %2635 = vsyncpa [#allocation6], 1
    %2636 = vsyncpa [#allocation9], 1
    %2637 = vsyncpa [#allocation12], 1
    %2638 = vsyncpa [#allocation4], 1

// kernel: tpu_custom_call.1
$region0: #{tpu_custom_call.1}
  #allocation0 [shape = 'u32[]', space=smem, size = 0x4, offset = 0x4, fixed_abs, tag = 'smem constant byte address 0x4 - core index']
  #allocation1 [shape = 'u32[144,128]{1,0:T(1,128)}', space=vmem, size = 0x12000, scoped, tag = 'internal scratch']
  %s0 = inlined_call_operand.hbm [shape: f32[2,8,32], index: 0, kind: input, shape index: {}]
  %s1 = inlined_call_operand.vmem [shape: f32[2,32], index: 1, kind: input, shape index: {}]
  %s2 = inlined_call_operand.hbm [shape: f32[32,128], index: 2, kind: input, shape index: {}]
  %s3 = inlined_call_operand.vmem [shape: f32[1,128], index: 3, kind: input, shape index: {}]
  %s4 = inlined_call_operand.hbm [shape: f32[32,64], index: 4, kind: input, shape index: {}]
  %s5 = inlined_call_operand.vmem [shape: f32[1,64], index: 5, kind: input, shape index: {}]
  %s6 = inlined_call_operand.hbm [shape: f32[32,128], index: 6, kind: input, shape index: {}]
  %s7 = inlined_call_operand.vmem [shape: f32[1,128], index: 7, kind: input, shape index: {}]
  %s8 = inlined_call_operand.vmem [shape: f32[1,32], index: 8, kind: input, shape index: {}]
  %s9 = inlined_call_operand.hbm [shape: f32[256,512], index: 9, kind: input, shape index: {}]
  %s10 = inlined_call_operand.vmem [shape: f32[1,512], index: 10, kind: input, shape index: {}]
  %s11 = inlined_call_operand.hbm [shape: f32[512,256], index: 11, kind: input, shape index: {}]
  %s12 = inlined_call_operand.vmem [shape: f32[1,256], index: 12, kind: input, shape index: {}]
  %s13 = inlined_call_operand.hbm [shape: f32[2,256], index: 13, kind: output, shape index: {}]
  %s14 = sld [smem:[#allocation0]]
  $region86: #{tpu_custom_call.1} parent=0
    _
  %s16 = ssub.s32 1, %s14
  %s17 = scalar_select 0, %s16, %s14
  $region1: #{tpu_custom_call.1} parent=0
    #allocation2 [shape = 'u8[8192]{0}', space=vmem, size = 0x2000, scoped, tag = 'input window, operand 0, single buffered']
    #allocation3 [shape = 's32[1]{0}', space=sflag, size = 0x4, scoped, tag = 'scoped memory for tpu_custom_call.1']
    #allocation4 [shape = 's32[1]{0}', space=sflag, size = 0x4, scoped, tag = 'scoped memory for tpu_custom_call.1']
    #allocation5 [shape = 'u8[16384]{0}', space=vmem, size = 0x4000, scoped, tag = 'input window, operand 2, single buffered']
    #allocation6 [shape = 's32[1]{0}', space=sflag, size = 0x4, scoped, tag = 'scoped memory for tpu_custom_call.1']
    #allocation7 [shape = 'u8[16384]{0}', space=vmem, size = 0x4000, scoped, tag = 'input window, operand 4, single buffered']
    #allocation8 [shape = 'u8[16384]{0}', space=vmem, size = 0x4000, scoped, tag = 'input window, operand 6, single buffered']
    #allocation9 [shape = 's32[1]{0}', space=sflag, size = 0x4, scoped, tag = 'scoped memory for tpu_custom_call.1']
    #allocation10 [shape = 'u8[524288]{0}', space=vmem, size = 0x80000, scoped, tag = 'input window, operand 9, single buffered']
    #allocation11 [shape = 'u8[524288]{0}', space=vmem, size = 0x80000, scoped, tag = 'input window, operand 11, single buffered']
    #allocation12 [shape = 's32[1]{0}', space=sflag, size = 0x4, scoped, tag = 'scoped memory for tpu_custom_call.1']
    #allocation13 [shape = 'u8[2048]{0}', space=vmem, size = 0x800, scoped, tag = 'output window, operand 0, single buffered']
    %18 = vsyncpa [#allocation3], 0
    %19 = vsyncpa [#allocation6], 0
    %20 = vsyncpa [#allocation9], 0
    %21 = vsyncpa [#allocation12], 0
    %22 = vsyncpa [#allocation4], 0
    // Predicated region
    $region2: #{tpu_custom_call.1} parent=1 // pred_check
      _
    $region3: #{tpu_custom_call.1} parent=1 // pred_check_branch
      %24 = sbr.rel (0) target = $region5
    $region4: #{tpu_custom_call.1} parent=1 // pred_region
      %s26 = ssub.s32 256, 256
      %27 = vsyncadd [#allocation3], %s26
      %s28 = sshll.u32 [#allocation2], 4
      %s29 = int_to_ptr.vmem [resolvable:$true] %s28
      %34 = dma.hbm_to_vmem [thread:$0]  %s0, 256, %s29, [#allocation3], 128, 128, 8
    $region5: #{tpu_custom_call.1} parent=1 // pred_fallthru
      _
    // Predicated region
    $region6: #{tpu_custom_call.1} parent=1 // pred_check
      _
    $region7: #{tpu_custom_call.1} parent=1 // pred_check_branch
      %36 = sbr.rel (0) target = $region9
    $region8: #{tpu_custom_call.1} parent=1 // pred_region
      _
    $region9: #{tpu_custom_call.1} parent=1 // pred_fallthru
      _
    // Predicated region
    $region10: #{tpu_custom_call.1} parent=1 // pred_check
      _
    $region11: #{tpu_custom_call.1} parent=1 // pred_check_branch
      %38 = sbr.rel (0) target = $region13
    $region12: #{tpu_custom_call.1} parent=1 // pred_region
      %s40 = ssub.s32 512, 512
      %41 = vsyncadd [#allocation6], %s40
      %s42 = sshll.u32 [#allocation5], 4
      %s43 = int_to_ptr.vmem [resolvable:$true] %s42
      %48 = dma.hbm_to_vmem [thread:$0]  %s2, 512, %s43, [#allocation6], 128, 128, 8
    $region13: #{tpu_custom_call.1} parent=1 // pred_fallthru
      _
    // Predicated region
    $region14: #{tpu_custom_call.1} parent=1 // pred_check
      _
    $region15: #{tpu_custom_call.1} parent=1 // pred_check_branch
      %50 = sbr.rel (0) target = $region17
    $region16: #{tpu_custom_call.1} parent=1 // pred_region
      _
    $region17: #{tpu_custom_call.1} parent=1 // pred_fallthru
      _
    // Predicated region
    $region18: #{tpu_custom_call.1} parent=1 // pred_check
      _
    $region19: #{tpu_custom_call.1} parent=1 // pred_check_branch
      %52 = sbr.rel (0) target = $region21
    $region20: #{tpu_custom_call.1} parent=1 // pred_region
      %s54 = ssub.s32 512, 512
      %55 = vsyncadd [#allocation6], %s54
      %s56 = sshll.u32 [#allocation7], 4
      %s57 = int_to_ptr.vmem [resolvable:$true] %s56
      %62 = dma.hbm_to_vmem [thread:$0]  %s4, 512, %s57, [#allocation6], 128, 128, 8
    $region21: #{tpu_custom_call.1} parent=1 // pred_fallthru
      _
    // Predicated region
    $region22: #{tpu_custom_call.1} parent=1 // pred_check
      _
    $region23: #{tpu_custom_call.1} parent=1 // pred_check_branch
      %64 = sbr.rel (0) target = $region25
    $region24: #{tpu_custom_call.1} parent=1 // pred_region
      _
    $region25: #{tpu_custom_call.1} parent=1 // pred_fallthru
      _
    // Predicated region
    $region26: #{tpu_custom_call.1} parent=1 // pred_check
      _
    $region27: #{tpu_custom_call.1} parent=1 // pred_check_branch
      %66 = sbr.rel (0) target = $region29
    $region28: #{tpu_custom_call.1} parent=1 // pred_region
      %s68 = ssub.s32 512, 512
      %69 = vsyncadd [#allocation9], %s68
      %s70 = sshll.u32 [#allocation8], 4
      %s71 = int_to_ptr.vmem [resolvable:$true] %s70
      %76 = dma.hbm_to_vmem [thread:$0]  %s6, 512, %s71, [#allocation9], 128, 128, 8
    $region29: #{tpu_custom_call.1} parent=1 // pred_fallthru
      _
    // Predicated region
    $region30: #{tpu_custom_call.1} parent=1 // pred_check
      _
    $region31: #{tpu_custom_call.1} parent=1 // pred_check_branch
      %78 = sbr.rel (0) target = $region33
    $region32: #{tpu_custom_call.1} parent=1 // pred_region
      _
    $region33: #{tpu_custom_call.1} parent=1 // pred_fallthru
      _
    // Predicated region
    $region34: #{tpu_custom_call.1} parent=1 // pred_check
      _
    $region35: #{tpu_custom_call.1} parent=1 // pred_check_branch
      %80 = sbr.rel (0) target = $region37
    $region36: #{tpu_custom_call.1} parent=1 // pred_region
      _
    $region37: #{tpu_custom_call.1} parent=1 // pred_fallthru
      _
    // Predicated region
    $region38: #{tpu_custom_call.1} parent=1 // pred_check
      _
    $region39: #{tpu_custom_call.1} parent=1 // pred_check_branch
      %82 = sbr.rel (0) target = $region41
    $region40: #{tpu_custom_call.1} parent=1 // pred_region
      %s84 = ssub.s32 16384, 16384
      %85 = vsyncadd [#allocation9], %s84
      %s86 = sshll.u32 [#allocation10], 4
      %s87 = int_to_ptr.vmem [resolvable:$true] %s86
      %92 = dma.hbm_to_vmem [thread:$0]  %s9, 16384, %s87, [#allocation9], 512, 512, 32
    $region41: #{tpu_custom_call.1} parent=1 // pred_fallthru
      _
    // Predicated region
    $region42: #{tpu_custom_call.1} parent=1 // pred_check
      _
    $region43: #{tpu_custom_call.1} parent=1 // pred_check_branch
      %94 = sbr.rel (0) target = $region45
    $region44: #{tpu_custom_call.1} parent=1 // pred_region
      _
    $region45: #{tpu_custom_call.1} parent=1 // pred_fallthru
      _
    // Predicated region
    $region46: #{tpu_custom_call.1} parent=1 // pred_check
      _
    $region47: #{tpu_custom_call.1} parent=1 // pred_check_branch
      %96 = sbr.rel (0) target = $region49
    $region48: #{tpu_custom_call.1} parent=1 // pred_region
      %s98 = ssub.s32 16384, 16384
      %99 = vsyncadd [#allocation12], %s98
      %s100 = sshll.u32 [#allocation11], 4
      %s101 = int_to_ptr.vmem [resolvable:$true] %s100
      %106 = dma.hbm_to_vmem [thread:$0]  %s11, 16384, %s101, [#allocation12], 256, 256, 16
    $region49: #{tpu_custom_call.1} parent=1 // pred_fallthru
      _
    // Predicated region
    $region50: #{tpu_custom_call.1} parent=1 // pred_check
      _
    $region51: #{tpu_custom_call.1} parent=1 // pred_check_branch
      %108 = sbr.rel (0) target = $region53
    $region52: #{tpu_custom_call.1} parent=1 // pred_region
      _
    $region53: #{tpu_custom_call.1} parent=1 // pred_fallthru
      _
    // Predicated region
    $region54: #{tpu_custom_call.1} parent=1 // pred_check
      _
    $region55: #{tpu_custom_call.1} parent=1 // pred_check_branch
      %110 = sbr.rel (0) target = $region57
    $region56: #{tpu_custom_call.1} parent=1 // pred_region
      %111 = dma.done [#allocation3], 256
    $region57: #{tpu_custom_call.1} parent=1 // pred_fallthru
      _
    // Predicated region
    $region58: #{tpu_custom_call.1} parent=1 // pred_check
      _
    $region59: #{tpu_custom_call.1} parent=1 // pred_check_branch
      %113 = sbr.rel (0) target = $region61
    $region60: #{tpu_custom_call.1} parent=1 // pred_region
      %114 = dma.done [#allocation6], 512
    $region61: #{tpu_custom_call.1} parent=1 // pred_fallthru
      _
    // Predicated region
    $region62: #{tpu_custom_call.1} parent=1 // pred_check
      _
    $region63: #{tpu_custom_call.1} parent=1 // pred_check_branch
      %116 = sbr.rel (0) target = $region65
    $region64: #{tpu_custom_call.1} parent=1 // pred_region
      %117 = dma.done [#allocation6], 512
    $region65: #{tpu_custom_call.1} parent=1 // pred_fallthru
      _
    // Predicated region
    $region66: #{tpu_custom_call.1} parent=1 // pred_check
      _
    $region67: #{tpu_custom_call.1} parent=1 // pred_check_branch
      %119 = sbr.rel (0) target = $region69
    $region68: #{tpu_custom_call.1} parent=1 // pred_region
      %120 = dma.done [#allocation9], 512
    $region69: #{tpu_custom_call.1} parent=1 // pred_fallthru
      _
    // Predicated region
    $region70: #{tpu_custom_call.1} parent=1 // pred_check
      _
    $region71: #{tpu_custom_call.1} parent=1 // pred_check_branch
      %122 = sbr.rel (0) target = $region73
    $region72: #{tpu_custom_call.1} parent=1 // pred_region
      %123 = dma.done [#allocation9], 16384
    $region73: #{tpu_custom_call.1} parent=1 // pred_fallthru
      _
    // Predicated region
    $region74: #{tpu_custom_call.1} parent=1 // pred_check
      _
    $region75: #{tpu_custom_call.1} parent=1 // pred_check_branch
      %125 = sbr.rel (0) target = $region77
    $region76: #{tpu_custom_call.1} parent=1 // pred_region
      %126 = dma.done [#allocation12], 16384
    $region77: #{tpu_custom_call.1} parent=1 // pred_fallthru
      _
    %v127 = vld [vmem:[#allocation2] sm:$0xff]
    %v128 = vld [vmem:[#allocation2 + $0x8] sm:$0xff]
    %v129 = vld [vmem:[%s1] sm:$0x3]
    %v130 = vld [vmem:[#allocation5] sm:$0xff]
    %v131 = vld [vmem:[#allocation5 + $0x8] sm:$0xff]
    %v132 = vld [vmem:[#allocation5 + $0x10] sm:$0xff]
    %v133 = vld [vmem:[#allocation5 + $0x18] sm:$0xff]
    %v134 = vld [vmem:[%s3] sm:$0x1]
    %v136 = vlaneseq
    %v137 = vshrl.u32 %v136, 7
    %v138 = vsub.s32 0, %v137
    %v139 = vrot.slane %v134, %v138
    %vm141 = vcmask 261120
    %v143 = vsel %vm141, %v129, 0
    %145 = vmatprep.subr.mxu0 0.0
    %146 = vmatpush1.msra.mxu0 %v130
    %147 = vmatprep.subr.mxu0 0.0
    %148 = vmatpush1.msra.mxu0 %v131
    %149 = vmatprep.subr.mxu0 0.0
    %150 = vmatpush1.msra.mxu0 %v132
    %151 = vmatprep.subr.mxu0 0.0
    %152 = vmatpush1.msra.mxu0 %v133
    %153 = vmatprep.subr.mxu0 0.0
    %154 = vmatpush1.msra.mxu0 0.0
    %155 = vmatprep.subr.mxu0 0.0
    %156 = vmatpush1.msra.mxu0 0.0
    %157 = vmatprep.subr.mxu0 0.0
    %158 = vmatpush1.msra.mxu0 0.0
    %159 = vmatprep.subr.mxu0 0.0
    %160 = vmatpush1.msra.mxu0 0.0
    %161 = vmatprep.subr.mxu0 0.0
    %162 = vmatpush1.msra.mxu0 0.0
    %163 = vmatprep.subr.mxu0 0.0
    %164 = vmatpush1.msra.mxu0 0.0
    %165 = vmatprep.subr.mxu0 0.0
    %166 = vmatpush1.msra.mxu0 0.0
    %167 = vmatprep.subr.mxu0 0.0
    %168 = vmatpush1.msra.mxu0 0.0
    %169 = vmatprep.subr.mxu0 0.0
    %170 = vmatpush1.msra.mxu0 0.0
    %171 = vmatprep.subr.mxu0 0.0
    %172 = vmatpush1.msra.mxu0 0.0
    %173 = vmatprep.subr.mxu0 0.0
    %174 = vmatpush1.msra.mxu0 0.0
    %175 = vmatprep.subr.mxu0 0.0
    %176 = vmatpush1.msra.mxu0 0.0
    %177 = vmatprep.subr.mxu0 0.0
    %178 = vmatpush1.msra.mxu0 0.0
    %179 = vmatprep.subr.mxu0 0.0
    %180 = vmatpush1.msra.mxu0 0.0
    %181 = vmatprep.subr.mxu0 0.0
    %182 = vmatpush1.msra.mxu0 0.0
    %183 = vmatprep.subr.mxu0 0.0
    %184 = vmatpush1.msra.mxu0 0.0
    %185 = vmatprep.subr.mxu0 0.0
    %186 = vmatpush1.msra.mxu0 0.0
    %187 = vmatprep.subr.mxu0 0.0
    %188 = vmatpush1.msra.mxu0 0.0
    %189 = vmatprep.subr.mxu0 0.0
    %190 = vmatpush1.msra.mxu0 0.0
    %191 = vmatprep.subr.mxu0 0.0
    %192 = vmatpush1.msra.mxu0 0.0
    %193 = vmatprep.subr.mxu0 0.0
    %194 = vmatpush1.msra.mxu0 0.0
    %195 = vmatprep.subr.mxu0 0.0
    %196 = vmatpush1.msra.mxu0 0.0
    %197 = vmatprep.subr.mxu0 0.0
    %198 = vmatpush1.msra.mxu0 0.0
    %199 = vmatprep.subr.mxu0 0.0
    %200 = vmatpush1.msra.mxu0 0.0
    %201 = vmatprep.subr.mxu0 0.0
    %202 = vmatpush1.msra.mxu0 0.0
    %203 = vmatprep.subr.mxu0 0.0
    %204 = vmatpush1.msra.mxu0 0.0
    %205 = vmatprep.subr.mxu0 0.0
    %206 = vmatpush1.msra.mxu0 0.0
    %207 = vmatprep.subr.mxu0 0.0
    %208 = vmatpush1.msra.mxu0 0.0
    %209 = vmatprep.mubr.f32.mxu0 0.0
    %210 = vmatmul.mubr.f32.gmra.mrb[0].mxu0 %v143
    %v211 = vpop.f32.mrb[0].mxu0
    %v212 = vadd.f32 %v139, %v211
    %v213 = vpop.f32.mrb[0].mxu0
    %214 = vdwg.mxu0
    %v217 = vunpack.c.l.s4 1966171168
    %v218 = vunpack.c.0.s8 %v217
    %v219 = vlaneseq
    %v220 = vshrl.u32 %v219, 7
    %v221 = vsub.s32 %v218, %v220
    %v222 = vrot.slane %v212, %v221
    %v223 = vcombine.high %v222, %v222
    %v225 = vunpack.c.l.s4 1966171168
    %v226 = vunpack.c.0.s8 %v225
    %v227 = vlaneseq
    %v228 = vshrl.u32 %v227, 7
    %v229 = vsub.s32 %v226, %v228
    %v230 = vrot.slane %v222, %v229
    %v232 = vunpack.c.l.s4 1966171168
    %v233 = vunpack.c.0.s8 %v232
    %v234 = vlaneseq
    %v235 = vshrl.u32 %v234, 7
    %v236 = vsub.s32 %v233, %v235
    %v237 = vrot.slane %v223, %v236
    %v238 = vsel %vm141, %v127, 0.0
    %239 = vadd.xlane.f32.xlu0 %v238
    %v240 = vpop.xlane.xlu0 %239
    %v241 = vsel %vm141, %v128, 0.0
    %242 = vadd.xlane.f32.xlu0 %v241
    %v243 = vpop.xlane.xlu0 %242
    %v244 = vrcp.pop 32.0
    %v245 = vmul.f32 %v240, %v244
    %v246 = vmul.f32 %v243, %v244
    %v247 = vsub.f32 %v127, %v245
    %v248 = vsub.f32 %v128, %v246
    %v249 = vmul.f32 %v247, %v247
    %v250 = vmul.f32 %v248, %v248
    %v251 = vsel %vm141, %v249, 0.0
    %252 = vadd.xlane.f32.xlu0 %v251
    %v253 = vpop.xlane.xlu0 %252
    %v254 = vsel %vm141, %v250, 0.0
    %255 = vadd.xlane.f32.xlu0 %v254
    %v256 = vpop.xlane.xlu0 %255
    %v257 = vmul.f32 %v253, %v244
    %v258 = vmul.f32 %v256, %v244
    %v259 = vadd.f32 %v257, 1e-05
    %v260 = vadd.f32 %v258, 1e-05
    %v261 = vrsqrt.pop %v259
    %v262 = vrsqrt.pop %v260
    %v263 = vmul.f32 %v247, %v261
    %v264 = vmul.f32 %v248, %v262
    %v265 = vlaneseq
    %v266 = vshrl.u32 %v265, 7
    %v267 = vsub.s32 0, %v266
    %v268 = vrot.slane %v230, %v267
    %v269 = vlaneseq
    %v270 = vshrl.u32 %v269, 7
    %v271 = vsub.s32 0, %v270
    %v272 = vrot.slane %v237, %v271
    %v275 = vmul.f32 %v263, %v268
    %v276 = vmul.f32 %v264, %v272
    %277 = vrot.lane.b32.xlu0 %v268, 96
    %v278 = vpop.permute.xlu0 %277
    %279 = vrot.lane.b32.xlu0 %v272, 96
    %v280 = vpop.permute.xlu0 %279
    %v283 = vadd.f32 %v275, %v278
    %v284 = vadd.f32 %v276, %v280
    %v285 = vld [vmem:[#allocation7] sm:$0xff]
    %v286 = vld [vmem:[#allocation7 + $0x8] sm:$0xff]
    %v287 = vld [vmem:[#allocation7 + $0x10] sm:$0xff]
    %v288 = vld [vmem:[#allocation7 + $0x18] sm:$0xff]
    %v289 = vld [vmem:[%s5] sm:$0x1]
    %v291 = vlaneseq
    %v292 = vshrl.u32 %v291, 7
    %v293 = vsub.s32 0, %v292
    %v294 = vrot.slane %v289, %v293
    %v297 = vsel %vm141, %v283, 0
    %v300 = vsel %vm141, %v284, 0
    %302 = vmatprep.subr.mxu0 0.0
    %303 = vmatpush1.msra.mxu0 %v285
    %304 = vmatprep.subr.mxu0 0.0
    %305 = vmatpush1.msra.mxu0 %v286
    %306 = vmatprep.subr.mxu0 0.0
    %307 = vmatpush1.msra.mxu0 %v287
    %308 = vmatprep.subr.mxu0 0.0
    %309 = vmatpush1.msra.mxu0 %v288
    %310 = vmatprep.subr.mxu0 0.0
    %311 = vmatpush1.msra.mxu0 0.0
    %312 = vmatprep.subr.mxu0 0.0
    %313 = vmatpush1.msra.mxu0 0.0
    %314 = vmatprep.subr.mxu0 0.0
    %315 = vmatpush1.msra.mxu0 0.0
    %316 = vmatprep.subr.mxu0 0.0
    %317 = vmatpush1.msra.mxu0 0.0
    %318 = vmatprep.subr.mxu0 0.0
    %319 = vmatpush1.msra.mxu0 0.0
    %320 = vmatprep.subr.mxu0 0.0
    %321 = vmatpush1.msra.mxu0 0.0
    %322 = vmatprep.subr.mxu0 0.0
    %323 = vmatpush1.msra.mxu0 0.0
    %324 = vmatprep.subr.mxu0 0.0
    %325 = vmatpush1.msra.mxu0 0.0
    %326 = vmatprep.subr.mxu0 0.0
    %327 = vmatpush1.msra.mxu0 0.0
    %328 = vmatprep.subr.mxu0 0.0
    %329 = vmatpush1.msra.mxu0 0.0
    %330 = vmatprep.subr.mxu0 0.0
    %331 = vmatpush1.msra.mxu0 0.0
    %332 = vmatprep.subr.mxu0 0.0
    %333 = vmatpush1.msra.mxu0 0.0
    %334 = vmatprep.subr.mxu0 0.0
    %335 = vmatpush1.msra.mxu0 0.0
    %336 = vmatprep.subr.mxu0 0.0
    %337 = vmatpush1.msra.mxu0 0.0
    %338 = vmatprep.subr.mxu0 0.0
    %339 = vmatpush1.msra.mxu0 0.0
    %340 = vmatprep.subr.mxu0 0.0
    %341 = vmatpush1.msra.mxu0 0.0
    %342 = vmatprep.subr.mxu0 0.0
    %343 = vmatpush1.msra.mxu0 0.0
    %344 = vmatprep.subr.mxu0 0.0
    %345 = vmatpush1.msra.mxu0 0.0
    %346 = vmatprep.subr.mxu0 0.0
    %347 = vmatpush1.msra.mxu0 0.0
    %348 = vmatprep.subr.mxu0 0.0
    %349 = vmatpush1.msra.mxu0 0.0
    %350 = vmatprep.subr.mxu0 0.0
    %351 = vmatpush1.msra.mxu0 0.0
    %352 = vmatprep.subr.mxu0 0.0
    %353 = vmatpush1.msra.mxu0 0.0
    %354 = vmatprep.subr.mxu0 0.0
    %355 = vmatpush1.msra.mxu0 0.0
    %356 = vmatprep.subr.mxu0 0.0
    %357 = vmatpush1.msra.mxu0 0.0
    %358 = vmatprep.subr.mxu0 0.0
    %359 = vmatpush1.msra.mxu0 0.0
    %360 = vmatprep.subr.mxu0 0.0
    %361 = vmatpush1.msra.mxu0 0.0
    %362 = vmatprep.subr.mxu0 0.0
    %363 = vmatpush1.msra.mxu0 0.0
    %364 = vmatprep.subr.mxu0 0.0
    %365 = vmatpush1.msra.mxu0 0.0
    %366 = vmatprep.mubr.f32.mxu0 0.0
    %367 = vmatmul.mubr.f32.gmra.mrb[0].mxu0 %v297
    %v368 = vpop.f32.mrb[0].mxu0
    %v369 = vadd.f32 %v294, %v368
    %v370 = vpop.f32.mrb[0].mxu0
    %371 = vmatprep.mubr.f32.mxu0 0.0
    %372 = vmatmul.mubr.f32.gmra.mrb[0].mxu0 %v300
    %v373 = vpop.f32.mrb[0].mxu0
    %v374 = vadd.f32 %v294, %v373
    %v375 = vpop.f32.mrb[0].mxu0
    %376 = vdwg.mxu0
    %v377 = vld [vmem:[#allocation8] sm:$0xff]
    %v378 = vld [vmem:[#allocation8 + $0x8] sm:$0xff]
    %v379 = vld [vmem:[#allocation8 + $0x10] sm:$0xff]
    %v380 = vld [vmem:[#allocation8 + $0x18] sm:$0xff]
    %v381 = vld [vmem:[%s7] sm:$0x1]
    %v383 = vlaneseq
    %v384 = vshrl.u32 %v383, 7
    %v385 = vsub.s32 0, %v384
    %v386 = vrot.slane %v381, %v385
    %388 = vmatprep.subr.mxu0 0.0
    %389 = vmatpush1.msra.mxu0 %v377
    %390 = vmatprep.subr.mxu0 0.0
    %391 = vmatpush1.msra.mxu0 %v378
    %392 = vmatprep.subr.mxu0 0.0
    %393 = vmatpush1.msra.mxu0 %v379
    %394 = vmatprep.subr.mxu0 0.0
    %395 = vmatpush1.msra.mxu0 %v380
    %396 = vmatprep.subr.mxu0 0.0
    %397 = vmatpush1.msra.mxu0 0.0
    %398 = vmatprep.subr.mxu0 0.0
    %399 = vmatpush1.msra.mxu0 0.0
    %400 = vmatprep.subr.mxu0 0.0
    %401 = vmatpush1.msra.mxu0 0.0
    %402 = vmatprep.subr.mxu0 0.0
    %403 = vmatpush1.msra.mxu0 0.0
    %404 = vmatprep.subr.mxu0 0.0
    %405 = vmatpush1.msra.mxu0 0.0
    %406 = vmatprep.subr.mxu0 0.0
    %407 = vmatpush1.msra.mxu0 0.0
    %408 = vmatprep.subr.mxu0 0.0
    %409 = vmatpush1.msra.mxu0 0.0
    %410 = vmatprep.subr.mxu0 0.0
    %411 = vmatpush1.msra.mxu0 0.0
    %412 = vmatprep.subr.mxu0 0.0
    %413 = vmatpush1.msra.mxu0 0.0
    %414 = vmatprep.subr.mxu0 0.0
    %415 = vmatpush1.msra.mxu0 0.0
    %416 = vmatprep.subr.mxu0 0.0
    %417 = vmatpush1.msra.mxu0 0.0
    %418 = vmatprep.subr.mxu0 0.0
    %419 = vmatpush1.msra.mxu0 0.0
    %420 = vmatprep.subr.mxu0 0.0
    %421 = vmatpush1.msra.mxu0 0.0
    %422 = vmatprep.subr.mxu0 0.0
    %423 = vmatpush1.msra.mxu0 0.0
    %424 = vmatprep.subr.mxu0 0.0
    %425 = vmatpush1.msra.mxu0 0.0
    %426 = vmatprep.subr.mxu0 0.0
    %427 = vmatpush1.msra.mxu0 0.0
    %428 = vmatprep.subr.mxu0 0.0
    %429 = vmatpush1.msra.mxu0 0.0
    %430 = vmatprep.subr.mxu0 0.0
    %431 = vmatpush1.msra.mxu0 0.0
    %432 = vmatprep.subr.mxu0 0.0
    %433 = vmatpush1.msra.mxu0 0.0
    %434 = vmatprep.subr.mxu0 0.0
    %435 = vmatpush1.msra.mxu0 0.0
    %436 = vmatprep.subr.mxu0 0.0
    %437 = vmatpush1.msra.mxu0 0.0
    %438 = vmatprep.subr.mxu0 0.0
    %439 = vmatpush1.msra.mxu0 0.0
    %440 = vmatprep.subr.mxu0 0.0
    %441 = vmatpush1.msra.mxu0 0.0
    %442 = vmatprep.subr.mxu0 0.0
    %443 = vmatpush1.msra.mxu0 0.0
    %444 = vmatprep.subr.mxu0 0.0
    %445 = vmatpush1.msra.mxu0 0.0
    %446 = vmatprep.subr.mxu0 0.0
    %447 = vmatpush1.msra.mxu0 0.0
    %448 = vmatprep.subr.mxu0 0.0
    %449 = vmatpush1.msra.mxu0 0.0
    %450 = vmatprep.subr.mxu0 0.0
    %451 = vmatpush1.msra.mxu0 0.0
    %452 = vmatprep.mubr.f32.mxu0 0.0
    %453 = vmatmul.mubr.f32.gmra.mrb[0].mxu0 %v297
    %v454 = vpop.f32.mrb[0].mxu0
    %v455 = vadd.f32 %v386, %v454
    %v456 = vpop.f32.mrb[0].mxu0
    %457 = vmatprep.mubr.f32.mxu0 0.0
    %458 = vmatmul.mubr.f32.gmra.mrb[0].mxu0 %v300
    %v459 = vpop.f32.mrb[0].mxu0
    %v460 = vadd.f32 %v386, %v459
    %v461 = vpop.f32.mrb[0].mxu0
    %462 = vdwg.mxu0
    %464 = vrot.lane.b32.xlu0 %v369, 96
    %v465 = vpop.permute.xlu0 %464
    %vm466 = vcmask 64512
    %v467 = vsel %vm466, %v369, 0
    %v469 = vsel %vm466, %v465, 0
    %471 = vmatprep.subr.mxu0 0.0
    %472 = vmatpush1.xpose.msra.mxu0 %v469
    %473 = vmatprep.subr.mxu0 0.0
    %474 = vmatpush1.xpose.msra.mxu0 0.0
    %475 = vmatprep.subr.mxu0 0.0
    %476 = vmatpush1.xpose.msra.mxu0 0.0
    %477 = vmatprep.subr.mxu0 0.0
    %478 = vmatpush1.xpose.msra.mxu0 0.0
    %479 = vmatprep.subr.mxu0 0.0
    %480 = vmatpush1.xpose.msra.mxu0 0.0
    %481 = vmatprep.subr.mxu0 0.0
    %482 = vmatpush1.xpose.msra.mxu0 0.0
    %483 = vmatprep.subr.mxu0 0.0
    %484 = vmatpush1.xpose.msra.mxu0 0.0
    %485 = vmatprep.subr.mxu0 0.0
    %486 = vmatpush1.xpose.msra.mxu0 0.0
    %487 = vmatprep.subr.mxu0 0.0
    %488 = vmatpush1.xpose.msra.mxu0 0.0
    %489 = vmatprep.subr.mxu0 0.0
    %490 = vmatpush1.xpose.msra.mxu0 0.0
    %491 = vmatprep.subr.mxu0 0.0
    %492 = vmatpush1.xpose.msra.mxu0 0.0
    %493 = vmatprep.subr.mxu0 0.0
    %494 = vmatpush1.xpose.msra.mxu0 0.0
    %495 = vmatprep.subr.mxu0 0.0
    %496 = vmatpush1.xpose.msra.mxu0 0.0
    %497 = vmatprep.subr.mxu0 0.0
    %498 = vmatpush1.xpose.msra.mxu0 0.0
    %499 = vmatprep.subr.mxu0 0.0
    %500 = vmatpush1.xpose.msra.mxu0 0.0
    %501 = vmatprep.subr.mxu0 0.0
    %502 = vmatpush1.xpose.msra.mxu0 0.0
    %503 = vmatprep.subr.mxu0 0.0
    %504 = vmatpush1.xpose.msra.mxu0 0.0
    %505 = vmatprep.subr.mxu0 0.0
    %506 = vmatpush1.xpose.msra.mxu0 0.0
    %507 = vmatprep.subr.mxu0 0.0
    %508 = vmatpush1.xpose.msra.mxu0 0.0
    %509 = vmatprep.subr.mxu0 0.0
    %510 = vmatpush1.xpose.msra.mxu0 0.0
    %511 = vmatprep.subr.mxu0 0.0
    %512 = vmatpush1.xpose.msra.mxu0 0.0
    %513 = vmatprep.subr.mxu0 0.0
    %514 = vmatpush1.xpose.msra.mxu0 0.0
    %515 = vmatprep.subr.mxu0 0.0
    %516 = vmatpush1.xpose.msra.mxu0 0.0
    %517 = vmatprep.subr.mxu0 0.0
    %518 = vmatpush1.xpose.msra.mxu0 0.0
    %519 = vmatprep.subr.mxu0 0.0
    %520 = vmatpush1.xpose.msra.mxu0 0.0
    %521 = vmatprep.subr.mxu0 0.0
    %522 = vmatpush1.xpose.msra.mxu0 0.0
    %523 = vmatprep.subr.mxu0 0.0
    %524 = vmatpush1.xpose.msra.mxu0 0.0
    %525 = vmatprep.subr.mxu0 0.0
    %526 = vmatpush1.xpose.msra.mxu0 0.0
    %527 = vmatprep.subr.mxu0 0.0
    %528 = vmatpush1.xpose.msra.mxu0 0.0
    %529 = vmatprep.subr.mxu0 0.0
    %530 = vmatpush1.xpose.msra.mxu0 0.0
    %531 = vmatprep.subr.mxu0 0.0
    %532 = vmatpush1.xpose.msra.mxu0 0.0
    %533 = vmatprep.subr.mxu0 0.0
    %534 = vmatpush1.xpose.msra.mxu0 0.0
    %535 = vmatprep.mubr.f32.mxu0 0.0
    %536 = vmatmul.mubr.f32.gmra.mrb[0].mxu0 %v467
    %v537 = vpop.f32.mrb[0].mxu0
    %v538 = vadd.f32 0.0, %v537
    %v539 = vpop.f32.mrb[0].mxu0
    %540 = vdwg.mxu0
    %542 = vrot.lane.b32.xlu0 %v374, 96
    %v543 = vpop.permute.xlu0 %542
    %v544 = vsel %vm466, %v374, 0
    %v546 = vsel %vm466, %v543, 0
    %548 = vmatprep.subr.mxu0 0.0
    %549 = vmatpush1.xpose.msra.mxu0 %v546
    %550 = vmatprep.subr.mxu0 0.0
    %551 = vmatpush1.xpose.msra.mxu0 0.0
    %552 = vmatprep.subr.mxu0 0.0
    %553 = vmatpush1.xpose.msra.mxu0 0.0
    %554 = vmatprep.subr.mxu0 0.0
    %555 = vmatpush1.xpose.msra.mxu0 0.0
    %556 = vmatprep.subr.mxu0 0.0
    %557 = vmatpush1.xpose.msra.mxu0 0.0
    %558 = vmatprep.subr.mxu0 0.0
    %559 = vmatpush1.xpose.msra.mxu0 0.0
    %560 = vmatprep.subr.mxu0 0.0
    %561 = vmatpush1.xpose.msra.mxu0 0.0
    %562 = vmatprep.subr.mxu0 0.0
    %563 = vmatpush1.xpose.msra.mxu0 0.0
    %564 = vmatprep.subr.mxu0 0.0
    %565 = vmatpush1.xpose.msra.mxu0 0.0
    %566 = vmatprep.subr.mxu0 0.0
    %567 = vmatpush1.xpose.msra.mxu0 0.0
    %568 = vmatprep.subr.mxu0 0.0
    %569 = vmatpush1.xpose.msra.mxu0 0.0
    %570 = vmatprep.subr.mxu0 0.0
    %571 = vmatpush1.xpose.msra.mxu0 0.0
    %572 = vmatprep.subr.mxu0 0.0
    %573 = vmatpush1.xpose.msra.mxu0 0.0
    %574 = vmatprep.subr.mxu0 0.0
    %575 = vmatpush1.xpose.msra.mxu0 0.0
    %576 = vmatprep.subr.mxu0 0.0
    %577 = vmatpush1.xpose.msra.mxu0 0.0
    %578 = vmatprep.subr.mxu0 0.0
    %579 = vmatpush1.xpose.msra.mxu0 0.0
    %580 = vmatprep.subr.mxu0 0.0
    %581 = vmatpush1.xpose.msra.mxu0 0.0
    %582 = vmatprep.subr.mxu0 0.0
    %583 = vmatpush1.xpose.msra.mxu0 0.0
    %584 = vmatprep.subr.mxu0 0.0
    %585 = vmatpush1.xpose.msra.mxu0 0.0
    %586 = vmatprep.subr.mxu0 0.0
    %587 = vmatpush1.xpose.msra.mxu0 0.0
    %588 = vmatprep.subr.mxu0 0.0
    %589 = vmatpush1.xpose.msra.mxu0 0.0
    %590 = vmatprep.subr.mxu0 0.0
    %591 = vmatpush1.xpose.msra.mxu0 0.0
    %592 = vmatprep.subr.mxu0 0.0
    %593 = vmatpush1.xpose.msra.mxu0 0.0
    %594 = vmatprep.subr.mxu0 0.0
    %595 = vmatpush1.xpose.msra.mxu0 0.0
    %596 = vmatprep.subr.mxu0 0.0
    %597 = vmatpush1.xpose.msra.mxu0 0.0
    %598 = vmatprep.subr.mxu0 0.0
    %599 = vmatpush1.xpose.msra.mxu0 0.0
    %600 = vmatprep.subr.mxu0 0.0
    %601 = vmatpush1.xpose.msra.mxu0 0.0
    %602 = vmatprep.subr.mxu0 0.0
    %603 = vmatpush1.xpose.msra.mxu0 0.0
    %604 = vmatprep.subr.mxu0 0.0
    %605 = vmatpush1.xpose.msra.mxu0 0.0
    %606 = vmatprep.subr.mxu0 0.0
    %607 = vmatpush1.xpose.msra.mxu0 0.0
    %608 = vmatprep.subr.mxu0 0.0
    %609 = vmatpush1.xpose.msra.mxu0 0.0
    %610 = vmatprep.subr.mxu0 0.0
    %611 = vmatpush1.xpose.msra.mxu0 0.0
    %612 = vmatprep.mubr.f32.mxu0 0.0
    %613 = vmatmul.mubr.f32.gmra.mrb[0].mxu0 %v544
    %v614 = vpop.f32.mrb[0].mxu0
    %v615 = vadd.f32 0.0, %v614
    %v616 = vpop.f32.mrb[0].mxu0
    %617 = vdwg.mxu0
    %v618 = vsel %vm466, %v538, -inf
    %619 = vmax.xlane.f32.xlu0 %v618
    %v620 = vpop.xlane.xlu0 %619
    %v621 = vsel %vm466, %v615, -inf
    %622 = vmax.xlane.f32.xlu0 %v621
    %v623 = vpop.xlane.xlu0 %622
    %v624 = vsub.f32 %v538, %v620
    %v625 = vsub.f32 %v615, %v623
    %v626 = vmul.f32 %v624, 1.442695
    %v627 = vpow.pop %v626
    %v628 = vmul.f32 %v625, 1.442695
    %v629 = vpow.pop %v628
    %v630 = vsel %vm466, %v627, 0.0
    %631 = vadd.xlane.f32.xlu0 %v630
    %v632 = vpop.xlane.xlu0 %631
    %v633 = vsel %vm466, %v629, 0.0
    %634 = vadd.xlane.f32.xlu0 %v633
    %v635 = vpop.xlane.xlu0 %634
    %v636 = vrcp.pop %v632
    %v637 = vrcp.pop %v635
    %v638 = vmul.f32 %v627, %v636
    %v639 = vmul.f32 %v629, %v637
    %640 = vrot.lane.b32.xlu0 %v369, 120
    %v641 = vpop.permute.xlu0 %640
    %642 = vrot.lane.b32.xlu0 %v369, 88
    %v643 = vpop.permute.xlu0 %642
    %v644 = vsel %vm466, %v641, 0
    %v646 = vsel %vm466, %v643, 0
    %648 = vmatprep.subr.mxu0 0.0
    %649 = vmatpush1.xpose.msra.mxu0 %v646
    %650 = vmatprep.subr.mxu0 0.0
    %651 = vmatpush1.xpose.msra.mxu0 0.0
    %652 = vmatprep.subr.mxu0 0.0
    %653 = vmatpush1.xpose.msra.mxu0 0.0
    %654 = vmatprep.subr.mxu0 0.0
    %655 = vmatpush1.xpose.msra.mxu0 0.0
    %656 = vmatprep.subr.mxu0 0.0
    %657 = vmatpush1.xpose.msra.mxu0 0.0
    %658 = vmatprep.subr.mxu0 0.0
    %659 = vmatpush1.xpose.msra.mxu0 0.0
    %660 = vmatprep.subr.mxu0 0.0
    %661 = vmatpush1.xpose.msra.mxu0 0.0
    %662 = vmatprep.subr.mxu0 0.0
    %663 = vmatpush1.xpose.msra.mxu0 0.0
    %664 = vmatprep.subr.mxu0 0.0
    %665 = vmatpush1.xpose.msra.mxu0 0.0
    %666 = vmatprep.subr.mxu0 0.0
    %667 = vmatpush1.xpose.msra.mxu0 0.0
    %668 = vmatprep.subr.mxu0 0.0
    %669 = vmatpush1.xpose.msra.mxu0 0.0
    %670 = vmatprep.subr.mxu0 0.0
    %671 = vmatpush1.xpose.msra.mxu0 0.0
    %672 = vmatprep.subr.mxu0 0.0
    %673 = vmatpush1.xpose.msra.mxu0 0.0
    %674 = vmatprep.subr.mxu0 0.0
    %675 = vmatpush1.xpose.msra.mxu0 0.0
    %676 = vmatprep.subr.mxu0 0.0
    %677 = vmatpush1.xpose.msra.mxu0 0.0
    %678 = vmatprep.subr.mxu0 0.0
    %679 = vmatpush1.xpose.msra.mxu0 0.0
    %680 = vmatprep.subr.mxu0 0.0
    %681 = vmatpush1.xpose.msra.mxu0 0.0
    %682 = vmatprep.subr.mxu0 0.0
    %683 = vmatpush1.xpose.msra.mxu0 0.0
    %684 = vmatprep.subr.mxu0 0.0
    %685 = vmatpush1.xpose.msra.mxu0 0.0
    %686 = vmatprep.subr.mxu0 0.0
    %687 = vmatpush1.xpose.msra.mxu0 0.0
    %688 = vmatprep.subr.mxu0 0.0
    %689 = vmatpush1.xpose.msra.mxu0 0.0
    %690 = vmatprep.subr.mxu0 0.0
    %691 = vmatpush1.xpose.msra.mxu0 0.0
    %692 = vmatprep.subr.mxu0 0.0
    %693 = vmatpush1.xpose.msra.mxu0 0.0
    %694 = vmatprep.subr.mxu0 0.0
    %695 = vmatpush1.xpose.msra.mxu0 0.0
    %696 = vmatprep.subr.mxu0 0.0
    %697 = vmatpush1.xpose.msra.mxu0 0.0
    %698 = vmatprep.subr.mxu0 0.0
    %699 = vmatpush1.xpose.msra.mxu0 0.0
    %700 = vmatprep.subr.mxu0 0.0
    %701 = vmatpush1.xpose.msra.mxu0 0.0
    %702 = vmatprep.subr.mxu0 0.0
    %703 = vmatpush1.xpose.msra.mxu0 0.0
    %704 = vmatprep.subr.mxu0 0.0
    %705 = vmatpush1.xpose.msra.mxu0 0.0
    %706 = vmatprep.subr.mxu0 0.0
    %707 = vmatpush1.xpose.msra.mxu0 0.0
    %708 = vmatprep.subr.mxu0 0.0
    %709 = vmatpush1.xpose.msra.mxu0 0.0
    %710 = vmatprep.subr.mxu0 0.0
    %711 = vmatpush1.xpose.msra.mxu0 0.0
    %712 = vmatprep.mubr.f32.mxu0 0.0
    %713 = vmatmul.mubr.f32.gmra.mrb[0].mxu0 %v644
    %v714 = vpop.f32.mrb[0].mxu0
    %v715 = vadd.f32 0.0, %v714
    %v716 = vpop.f32.mrb[0].mxu0
    %717 = vdwg.mxu0
    %718 = vrot.lane.b32.xlu0 %v374, 120
    %v719 = vpop.permute.xlu0 %718
    %720 = vrot.lane.b32.xlu0 %v374, 88
    %v721 = vpop.permute.xlu0 %720
    %v722 = vsel %vm466, %v719, 0
    %v724 = vsel %vm466, %v721, 0
    %726 = vmatprep.subr.mxu0 0.0
    %727 = vmatpush1.xpose.msra.mxu0 %v724
    %728 = vmatprep.subr.mxu0 0.0
    %729 = vmatpush1.xpose.msra.mxu0 0.0
    %730 = vmatprep.subr.mxu0 0.0
    %731 = vmatpush1.xpose.msra.mxu0 0.0
    %732 = vmatprep.subr.mxu0 0.0
    %733 = vmatpush1.xpose.msra.mxu0 0.0
    %734 = vmatprep.subr.mxu0 0.0
    %735 = vmatpush1.xpose.msra.mxu0 0.0
    %736 = vmatprep.subr.mxu0 0.0
    %737 = vmatpush1.xpose.msra.mxu0 0.0
    %738 = vmatprep.subr.mxu0 0.0
    %739 = vmatpush1.xpose.msra.mxu0 0.0
    %740 = vmatprep.subr.mxu0 0.0
    %741 = vmatpush1.xpose.msra.mxu0 0.0
    %742 = vmatprep.subr.mxu0 0.0
    %743 = vmatpush1.xpose.msra.mxu0 0.0
    %744 = vmatprep.subr.mxu0 0.0
    %745 = vmatpush1.xpose.msra.mxu0 0.0
    %746 = vmatprep.subr.mxu0 0.0
    %747 = vmatpush1.xpose.msra.mxu0 0.0
    %748 = vmatprep.subr.mxu0 0.0
    %749 = vmatpush1.xpose.msra.mxu0 0.0
    %750 = vmatprep.subr.mxu0 0.0
    %751 = vmatpush1.xpose.msra.mxu0 0.0
    %752 = vmatprep.subr.mxu0 0.0
    %753 = vmatpush1.xpose.msra.mxu0 0.0
    %754 = vmatprep.subr.mxu0 0.0
    %755 = vmatpush1.xpose.msra.mxu0 0.0
    %756 = vmatprep.subr.mxu0 0.0
    %757 = vmatpush1.xpose.msra.mxu0 0.0
    %758 = vmatprep.subr.mxu0 0.0
    %759 = vmatpush1.xpose.msra.mxu0 0.0
    %760 = vmatprep.subr.mxu0 0.0
    %761 = vmatpush1.xpose.msra.mxu0 0.0
    %762 = vmatprep.subr.mxu0 0.0
    %763 = vmatpush1.xpose.msra.mxu0 0.0
    %764 = vmatprep.subr.mxu0 0.0
    %765 = vmatpush1.xpose.msra.mxu0 0.0
    %766 = vmatprep.subr.mxu0 0.0
    %767 = vmatpush1.xpose.msra.mxu0 0.0
    %768 = vmatprep.subr.mxu0 0.0
    %769 = vmatpush1.xpose.msra.mxu0 0.0
    %770 = vmatprep.subr.mxu0 0.0
    %771 = vmatpush1.xpose.msra.mxu0 0.0
    %772 = vmatprep.subr.mxu0 0.0
    %773 = vmatpush1.xpose.msra.mxu0 0.0
    %774 = vmatprep.subr.mxu0 0.0
    %775 = vmatpush1.xpose.msra.mxu0 0.0
    %776 = vmatprep.subr.mxu0 0.0
    %777 = vmatpush1.xpose.msra.mxu0 0.0
    %778 = vmatprep.subr.mxu0 0.0
    %779 = vmatpush1.xpose.msra.mxu0 0.0
    %780 = vmatprep.subr.mxu0 0.0
    %781 = vmatpush1.xpose.msra.mxu0 0.0
    %782 = vmatprep.subr.mxu0 0.0
    %783 = vmatpush1.xpose.msra.mxu0 0.0
    %784 = vmatprep.subr.mxu0 0.0
    %785 = vmatpush1.xpose.msra.mxu0 0.0
    %786 = vmatprep.subr.mxu0 0.0
    %787 = vmatpush1.xpose.msra.mxu0 0.0
    %788 = vmatprep.subr.mxu0 0.0
    %789 = vmatpush1.xpose.msra.mxu0 0.0
    %790 = vmatprep.mubr.f32.mxu0 0.0
    %791 = vmatmul.mubr.f32.gmra.mrb[0].mxu0 %v722
    %v792 = vpop.f32.mrb[0].mxu0
    %v793 = vadd.f32 0.0, %v792
    %v794 = vpop.f32.mrb[0].mxu0
    %795 = vdwg.mxu0
    %v796 = vsel %vm466, %v715, -inf
    %797 = vmax.xlane.f32.xlu0 %v796
    %v798 = vpop.xlane.xlu0 %797
    %v799 = vsel %vm466, %v793, -inf
    %800 = vmax.xlane.f32.xlu0 %v799
    %v801 = vpop.xlane.xlu0 %800
    %v802 = vsub.f32 %v715, %v798
    %v803 = vsub.f32 %v793, %v801
    %v804 = vmul.f32 %v802, 1.442695
    %v805 = vpow.pop %v804
    %v806 = vmul.f32 %v803, 1.442695
    %v807 = vpow.pop %v806
    %v808 = vsel %vm466, %v805, 0.0
    %809 = vadd.xlane.f32.xlu0 %v808
    %v810 = vpop.xlane.xlu0 %809
    %v811 = vsel %vm466, %v807, 0.0
    %812 = vadd.xlane.f32.xlu0 %v811
    %v813 = vpop.xlane.xlu0 %812
    %v814 = vrcp.pop %v810
    %v815 = vrcp.pop %v813
    %v816 = vmul.f32 %v805, %v814
    %v817 = vmul.f32 %v807, %v815
    %819 = vrot.lane.b32.xlu0 %v455, 96
    %v820 = vpop.permute.xlu0 %819
    %v823 = vsel %vm466, %v816, 0
    %825 = vmatprep.subr.mxu0 0.0
    %826 = vmatpush1.msra.mxu0 %v820
    %827 = vmatprep.subr.mxu0 0.0
    %828 = vmatpush1.msra.mxu0 0.0
    %829 = vmatprep.subr.mxu0 0.0
    %830 = vmatpush1.msra.mxu0 0.0
    %831 = vmatprep.subr.mxu0 0.0
    %832 = vmatpush1.msra.mxu0 0.0
    %833 = vmatprep.subr.mxu0 0.0
    %834 = vmatpush1.msra.mxu0 0.0
    %835 = vmatprep.subr.mxu0 0.0
    %836 = vmatpush1.msra.mxu0 0.0
    %837 = vmatprep.subr.mxu0 0.0
    %838 = vmatpush1.msra.mxu0 0.0
    %839 = vmatprep.subr.mxu0 0.0
    %840 = vmatpush1.msra.mxu0 0.0
    %841 = vmatprep.subr.mxu0 0.0
    %842 = vmatpush1.msra.mxu0 0.0
    %843 = vmatprep.subr.mxu0 0.0
    %844 = vmatpush1.msra.mxu0 0.0
    %845 = vmatprep.subr.mxu0 0.0
    %846 = vmatpush1.msra.mxu0 0.0
    %847 = vmatprep.subr.mxu0 0.0
    %848 = vmatpush1.msra.mxu0 0.0
    %849 = vmatprep.subr.mxu0 0.0
    %850 = vmatpush1.msra.mxu0 0.0
    %851 = vmatprep.subr.mxu0 0.0
    %852 = vmatpush1.msra.mxu0 0.0
    %853 = vmatprep.subr.mxu0 0.0
    %854 = vmatpush1.msra.mxu0 0.0
    %855 = vmatprep.subr.mxu0 0.0
    %856 = vmatpush1.msra.mxu0 0.0
    %857 = vmatprep.subr.mxu0 0.0
    %858 = vmatpush1.msra.mxu0 0.0
    %859 = vmatprep.subr.mxu0 0.0
    %860 = vmatpush1.msra.mxu0 0.0
    %861 = vmatprep.subr.mxu0 0.0
    %862 = vmatpush1.msra.mxu0 0.0
    %863 = vmatprep.subr.mxu0 0.0
    %864 = vmatpush1.msra.mxu0 0.0
    %865 = vmatprep.subr.mxu0 0.0
    %866 = vmatpush1.msra.mxu0 0.0
    %867 = vmatprep.subr.mxu0 0.0
    %868 = vmatpush1.msra.mxu0 0.0
    %869 = vmatprep.subr.mxu0 0.0
    %870 = vmatpush1.msra.mxu0 0.0
    %871 = vmatprep.subr.mxu0 0.0
    %872 = vmatpush1.msra.mxu0 0.0
    %873 = vmatprep.subr.mxu0 0.0
    %874 = vmatpush1.msra.mxu0 0.0
    %875 = vmatprep.subr.mxu0 0.0
    %876 = vmatpush1.msra.mxu0 0.0
    %877 = vmatprep.subr.mxu0 0.0
    %878 = vmatpush1.msra.mxu0 0.0
    %879 = vmatprep.subr.mxu0 0.0
    %880 = vmatpush1.msra.mxu0 0.0
    %881 = vmatprep.subr.mxu0 0.0
    %882 = vmatpush1.msra.mxu0 0.0
    %883 = vmatprep.subr.mxu0 0.0
    %884 = vmatpush1.msra.mxu0 0.0
    %885 = vmatprep.subr.mxu0 0.0
    %886 = vmatpush1.msra.mxu0 0.0
    %887 = vmatprep.subr.mxu0 0.0
    %888 = vmatpush1.msra.mxu0 0.0
    %889 = vmatprep.mubr.f32.mxu0 0.0
    %890 = vmatmul.mubr.f32.gmra.mrb[0].mxu0 %v823
    %v891 = vpop.f32.mrb[0].mxu0
    %v892 = vadd.f32 0.0, %v891
    %v893 = vpop.f32.mrb[0].mxu0
    %894 = vdwg.mxu0
    %896 = vrot.lane.b32.xlu0 %v460, 96
    %v897 = vpop.permute.xlu0 %896
    %v900 = vsel %vm466, %v817, 0
    %902 = vmatprep.subr.mxu0 0.0
    %903 = vmatpush1.msra.mxu0 %v897
    %904 = vmatprep.subr.mxu0 0.0
    %905 = vmatpush1.msra.mxu0 0.0
    %906 = vmatprep.subr.mxu0 0.0
    %907 = vmatpush1.msra.mxu0 0.0
    %908 = vmatprep.subr.mxu0 0.0
    %909 = vmatpush1.msra.mxu0 0.0
    %910 = vmatprep.subr.mxu0 0.0
    %911 = vmatpush1.msra.mxu0 0.0
    %912 = vmatprep.subr.mxu0 0.0
    %913 = vmatpush1.msra.mxu0 0.0
    %914 = vmatprep.subr.mxu0 0.0
    %915 = vmatpush1.msra.mxu0 0.0
    %916 = vmatprep.subr.mxu0 0.0
    %917 = vmatpush1.msra.mxu0 0.0
    %918 = vmatprep.subr.mxu0 0.0
    %919 = vmatpush1.msra.mxu0 0.0
    %920 = vmatprep.subr.mxu0 0.0
    %921 = vmatpush1.msra.mxu0 0.0
    %922 = vmatprep.subr.mxu0 0.0
    %923 = vmatpush1.msra.mxu0 0.0
    %924 = vmatprep.subr.mxu0 0.0
    %925 = vmatpush1.msra.mxu0 0.0
    %926 = vmatprep.subr.mxu0 0.0
    %927 = vmatpush1.msra.mxu0 0.0
    %928 = vmatprep.subr.mxu0 0.0
    %929 = vmatpush1.msra.mxu0 0.0
    %930 = vmatprep.subr.mxu0 0.0
    %931 = vmatpush1.msra.mxu0 0.0
    %932 = vmatprep.subr.mxu0 0.0
    %933 = vmatpush1.msra.mxu0 0.0
    %934 = vmatprep.subr.mxu0 0.0
    %935 = vmatpush1.msra.mxu0 0.0
    %936 = vmatprep.subr.mxu0 0.0
    %937 = vmatpush1.msra.mxu0 0.0
    %938 = vmatprep.subr.mxu0 0.0
    %939 = vmatpush1.msra.mxu0 0.0
    %940 = vmatprep.subr.mxu0 0.0
    %941 = vmatpush1.msra.mxu0 0.0
    %942 = vmatprep.subr.mxu0 0.0
    %943 = vmatpush1.msra.mxu0 0.0
    %944 = vmatprep.subr.mxu0 0.0
    %945 = vmatpush1.msra.mxu0 0.0
    %946 = vmatprep.subr.mxu0 0.0
    %947 = vmatpush1.msra.mxu0 0.0
    %948 = vmatprep.subr.mxu0 0.0
    %949 = vmatpush1.msra.mxu0 0.0
    %950 = vmatprep.subr.mxu0 0.0
    %951 = vmatpush1.msra.mxu0 0.0
    %952 = vmatprep.subr.mxu0 0.0
    %953 = vmatpush1.msra.mxu0 0.0
    %954 = vmatprep.subr.mxu0 0.0
    %955 = vmatpush1.msra.mxu0 0.0
    %956 = vmatprep.subr.mxu0 0.0
    %957 = vmatpush1.msra.mxu0 0.0
    %958 = vmatprep.subr.mxu0 0.0
    %959 = vmatpush1.msra.mxu0 0.0
    %960 = vmatprep.subr.mxu0 0.0
    %961 = vmatpush1.msra.mxu0 0.0
    %962 = vmatprep.subr.mxu0 0.0
    %963 = vmatpush1.msra.mxu0 0.0
    %964 = vmatprep.subr.mxu0 0.0
    %965 = vmatpush1.msra.mxu0 0.0
    %966 = vmatprep.mubr.f32.mxu0 0.0
    %967 = vmatmul.mubr.f32.gmra.mrb[0].mxu0 %v900
    %v968 = vpop.f32.mrb[0].mxu0
    %v969 = vadd.f32 0.0, %v968
    %v970 = vpop.f32.mrb[0].mxu0
    %971 = vdwg.mxu0
    %v973 = vsel %vm466, %v638, 0
    %975 = vmatprep.subr.mxu0 0.0
    %976 = vmatpush1.msra.mxu0 %v455
    %977 = vmatprep.subr.mxu0 0.0
    %978 = vmatpush1.msra.mxu0 0.0
    %979 = vmatprep.subr.mxu0 0.0
    %980 = vmatpush1.msra.mxu0 0.0
    %981 = vmatprep.subr.mxu0 0.0
    %982 = vmatpush1.msra.mxu0 0.0
    %983 = vmatprep.subr.mxu0 0.0
    %984 = vmatpush1.msra.mxu0 0.0
    %985 = vmatprep.subr.mxu0 0.0
    %986 = vmatpush1.msra.mxu0 0.0
    %987 = vmatprep.subr.mxu0 0.0
    %988 = vmatpush1.msra.mxu0 0.0
    %989 = vmatprep.subr.mxu0 0.0
    %990 = vmatpush1.msra.mxu0 0.0
    %991 = vmatprep.subr.mxu0 0.0
    %992 = vmatpush1.msra.mxu0 0.0
    %993 = vmatprep.subr.mxu0 0.0
    %994 = vmatpush1.msra.mxu0 0.0
    %995 = vmatprep.subr.mxu0 0.0
    %996 = vmatpush1.msra.mxu0 0.0
    %997 = vmatprep.subr.mxu0 0.0
    %998 = vmatpush1.msra.mxu0 0.0
    %999 = vmatprep.subr.mxu0 0.0
    %1000 = vmatpush1.msra.mxu0 0.0
    %1001 = vmatprep.subr.mxu0 0.0
    %1002 = vmatpush1.msra.mxu0 0.0
    %1003 = vmatprep.subr.mxu0 0.0
    %1004 = vmatpush1.msra.mxu0 0.0
    %1005 = vmatprep.subr.mxu0 0.0
    %1006 = vmatpush1.msra.mxu0 0.0
    %1007 = vmatprep.subr.mxu0 0.0
    %1008 = vmatpush1.msra.mxu0 0.0
    %1009 = vmatprep.subr.mxu0 0.0
    %1010 = vmatpush1.msra.mxu0 0.0
    %1011 = vmatprep.subr.mxu0 0.0
    %1012 = vmatpush1.msra.mxu0 0.0
    %1013 = vmatprep.subr.mxu0 0.0
    %1014 = vmatpush1.msra.mxu0 0.0
    %1015 = vmatprep.subr.mxu0 0.0
    %1016 = vmatpush1.msra.mxu0 0.0
    %1017 = vmatprep.subr.mxu0 0.0
    %1018 = vmatpush1.msra.mxu0 0.0
    %1019 = vmatprep.subr.mxu0 0.0
    %1020 = vmatpush1.msra.mxu0 0.0
    %1021 = vmatprep.subr.mxu0 0.0
    %1022 = vmatpush1.msra.mxu0 0.0
    %1023 = vmatprep.subr.mxu0 0.0
    %1024 = vmatpush1.msra.mxu0 0.0
    %1025 = vmatprep.subr.mxu0 0.0
    %1026 = vmatpush1.msra.mxu0 0.0
    %1027 = vmatprep.subr.mxu0 0.0
    %1028 = vmatpush1.msra.mxu0 0.0
    %1029 = vmatprep.subr.mxu0 0.0
    %1030 = vmatpush1.msra.mxu0 0.0
    %1031 = vmatprep.subr.mxu0 0.0
    %1032 = vmatpush1.msra.mxu0 0.0
    %1033 = vmatprep.subr.mxu0 0.0
    %1034 = vmatpush1.msra.mxu0 0.0
    %1035 = vmatprep.subr.mxu0 0.0
    %1036 = vmatpush1.msra.mxu0 0.0
    %1037 = vmatprep.subr.mxu0 0.0
    %1038 = vmatpush1.msra.mxu0 0.0
    %1039 = vmatprep.mubr.f32.mxu0 0.0
    %1040 = vmatmul.mubr.f32.gmra.mrb[0].mxu0 %v973
    %v1041 = vpop.f32.mrb[0].mxu0
    %v1042 = vadd.f32 %v892, %v1041
    %v1043 = vpop.f32.mrb[0].mxu0
    %1044 = vdwg.mxu0
    %v1046 = vsel %vm466, %v639, 0
    %1048 = vmatprep.subr.mxu0 0.0
    %1049 = vmatpush1.msra.mxu0 %v460
    %1050 = vmatprep.subr.mxu0 0.0
    %1051 = vmatpush1.msra.mxu0 0.0
    %1052 = vmatprep.subr.mxu0 0.0
    %1053 = vmatpush1.msra.mxu0 0.0
    %1054 = vmatprep.subr.mxu0 0.0
    %1055 = vmatpush1.msra.mxu0 0.0
    %1056 = vmatprep.subr.mxu0 0.0
    %1057 = vmatpush1.msra.mxu0 0.0
    %1058 = vmatprep.subr.mxu0 0.0
    %1059 = vmatpush1.msra.mxu0 0.0
    %1060 = vmatprep.subr.mxu0 0.0
    %1061 = vmatpush1.msra.mxu0 0.0
    %1062 = vmatprep.subr.mxu0 0.0
    %1063 = vmatpush1.msra.mxu0 0.0
    %1064 = vmatprep.subr.mxu0 0.0
    %1065 = vmatpush1.msra.mxu0 0.0
    %1066 = vmatprep.subr.mxu0 0.0
    %1067 = vmatpush1.msra.mxu0 0.0
    %1068 = vmatprep.subr.mxu0 0.0
    %1069 = vmatpush1.msra.mxu0 0.0
    %1070 = vmatprep.subr.mxu0 0.0
    %1071 = vmatpush1.msra.mxu0 0.0
    %1072 = vmatprep.subr.mxu0 0.0
    %1073 = vmatpush1.msra.mxu0 0.0
    %1074 = vmatprep.subr.mxu0 0.0
    %1075 = vmatpush1.msra.mxu0 0.0
    %1076 = vmatprep.subr.mxu0 0.0
    %1077 = vmatpush1.msra.mxu0 0.0
    %1078 = vmatprep.subr.mxu0 0.0
    %1079 = vmatpush1.msra.mxu0 0.0
    %1080 = vmatprep.subr.mxu0 0.0
    %1081 = vmatpush1.msra.mxu0 0.0
    %1082 = vmatprep.subr.mxu0 0.0
    %1083 = vmatpush1.msra.mxu0 0.0
    %1084 = vmatprep.subr.mxu0 0.0
    %1085 = vmatpush1.msra.mxu0 0.0
    %1086 = vmatprep.subr.mxu0 0.0
    %1087 = vmatpush1.msra.mxu0 0.0
    %1088 = vmatprep.subr.mxu0 0.0
    %1089 = vmatpush1.msra.mxu0 0.0
    %1090 = vmatprep.subr.mxu0 0.0
    %1091 = vmatpush1.msra.mxu0 0.0
    %1092 = vmatprep.subr.mxu0 0.0
    %1093 = vmatpush1.msra.mxu0 0.0
    %1094 = vmatprep.subr.mxu0 0.0
    %1095 = vmatpush1.msra.mxu0 0.0
    %1096 = vmatprep.subr.mxu0 0.0
    %1097 = vmatpush1.msra.mxu0 0.0
    %1098 = vmatprep.subr.mxu0 0.0
    %1099 = vmatpush1.msra.mxu0 0.0
    %1100 = vmatprep.subr.mxu0 0.0
    %1101 = vmatpush1.msra.mxu0 0.0
    %1102 = vmatprep.subr.mxu0 0.0
    %1103 = vmatpush1.msra.mxu0 0.0
    %1104 = vmatprep.subr.mxu0 0.0
    %1105 = vmatpush1.msra.mxu0 0.0
    %1106 = vmatprep.subr.mxu0 0.0
    %1107 = vmatpush1.msra.mxu0 0.0
    %1108 = vmatprep.subr.mxu0 0.0
    %1109 = vmatpush1.msra.mxu0 0.0
    %1110 = vmatprep.subr.mxu0 0.0
    %1111 = vmatpush1.msra.mxu0 0.0
    %1112 = vmatprep.mubr.f32.mxu0 0.0
    %1113 = vmatmul.mubr.f32.gmra.mrb[0].mxu0 %v1046
    %v1114 = vpop.f32.mrb[0].mxu0
    %v1115 = vadd.f32 %v969, %v1114
    %v1116 = vpop.f32.mrb[0].mxu0
    %1117 = vdwg.mxu0
    %1118 = vrot.lane.b32.xlu0 %v369, 112
    %v1119 = vpop.permute.xlu0 %1118
    %1120 = vrot.lane.b32.xlu0 %v369, 80
    %v1121 = vpop.permute.xlu0 %1120
    %v1122 = vsel %vm466, %v1119, 0
    %v1124 = vsel %vm466, %v1121, 0
    %1126 = vmatprep.subr.mxu0 0.0
    %1127 = vmatpush1.xpose.msra.mxu0 %v1124
    %1128 = vmatprep.subr.mxu0 0.0
    %1129 = vmatpush1.xpose.msra.mxu0 0.0
    %1130 = vmatprep.subr.mxu0 0.0
    %1131 = vmatpush1.xpose.msra.mxu0 0.0
    %1132 = vmatprep.subr.mxu0 0.0
    %1133 = vmatpush1.xpose.msra.mxu0 0.0
    %1134 = vmatprep.subr.mxu0 0.0
    %1135 = vmatpush1.xpose.msra.mxu0 0.0
    %1136 = vmatprep.subr.mxu0 0.0
    %1137 = vmatpush1.xpose.msra.mxu0 0.0
    %1138 = vmatprep.subr.mxu0 0.0
    %1139 = vmatpush1.xpose.msra.mxu0 0.0
    %1140 = vmatprep.subr.mxu0 0.0
    %1141 = vmatpush1.xpose.msra.mxu0 0.0
    %1142 = vmatprep.subr.mxu0 0.0
    %1143 = vmatpush1.xpose.msra.mxu0 0.0
    %1144 = vmatprep.subr.mxu0 0.0
    %1145 = vmatpush1.xpose.msra.mxu0 0.0
    %1146 = vmatprep.subr.mxu0 0.0
    %1147 = vmatpush1.xpose.msra.mxu0 0.0
    %1148 = vmatprep.subr.mxu0 0.0
    %1149 = vmatpush1.xpose.msra.mxu0 0.0
    %1150 = vmatprep.subr.mxu0 0.0
    %1151 = vmatpush1.xpose.msra.mxu0 0.0
    %1152 = vmatprep.subr.mxu0 0.0
    %1153 = vmatpush1.xpose.msra.mxu0 0.0
    %1154 = vmatprep.subr.mxu0 0.0
    %1155 = vmatpush1.xpose.msra.mxu0 0.0
    %1156 = vmatprep.subr.mxu0 0.0
    %1157 = vmatpush1.xpose.msra.mxu0 0.0
    %1158 = vmatprep.subr.mxu0 0.0
    %1159 = vmatpush1.xpose.msra.mxu0 0.0
    %1160 = vmatprep.subr.mxu0 0.0
    %1161 = vmatpush1.xpose.msra.mxu0 0.0
    %1162 = vmatprep.subr.mxu0 0.0
    %1163 = vmatpush1.xpose.msra.mxu0 0.0
    %1164 = vmatprep.subr.mxu0 0.0
    %1165 = vmatpush1.xpose.msra.mxu0 0.0
    %1166 = vmatprep.subr.mxu0 0.0
    %1167 = vmatpush1.xpose.msra.mxu0 0.0
    %1168 = vmatprep.subr.mxu0 0.0
    %1169 = vmatpush1.xpose.msra.mxu0 0.0
    %1170 = vmatprep.subr.mxu0 0.0
    %1171 = vmatpush1.xpose.msra.mxu0 0.0
    %1172 = vmatprep.subr.mxu0 0.0
    %1173 = vmatpush1.xpose.msra.mxu0 0.0
    %1174 = vmatprep.subr.mxu0 0.0
    %1175 = vmatpush1.xpose.msra.mxu0 0.0
    %1176 = vmatprep.subr.mxu0 0.0
    %1177 = vmatpush1.xpose.msra.mxu0 0.0
    %1178 = vmatprep.subr.mxu0 0.0
    %1179 = vmatpush1.xpose.msra.mxu0 0.0
    %1180 = vmatprep.subr.mxu0 0.0
    %1181 = vmatpush1.xpose.msra.mxu0 0.0
    %1182 = vmatprep.subr.mxu0 0.0
    %1183 = vmatpush1.xpose.msra.mxu0 0.0
    %1184 = vmatprep.subr.mxu0 0.0
    %1185 = vmatpush1.xpose.msra.mxu0 0.0
    %1186 = vmatprep.subr.mxu0 0.0
    %1187 = vmatpush1.xpose.msra.mxu0 0.0
    %1188 = vmatprep.subr.mxu0 0.0
    %1189 = vmatpush1.xpose.msra.mxu0 0.0
    %1190 = vmatprep.mubr.f32.mxu0 0.0
    %1191 = vmatmul.mubr.f32.gmra.mrb[0].mxu0 %v1122
    %v1192 = vpop.f32.mrb[0].mxu0
    %v1193 = vadd.f32 0.0, %v1192
    %v1194 = vpop.f32.mrb[0].mxu0
    %1195 = vdwg.mxu0
    %1196 = vrot.lane.b32.xlu0 %v374, 112
    %v1197 = vpop.permute.xlu0 %1196
    %1198 = vrot.lane.b32.xlu0 %v374, 80
    %v1199 = vpop.permute.xlu0 %1198
    %v1200 = vsel %vm466, %v1197, 0
    %v1202 = vsel %vm466, %v1199, 0
    %1204 = vmatprep.subr.mxu0 0.0
    %1205 = vmatpush1.xpose.msra.mxu0 %v1202
    %1206 = vmatprep.subr.mxu0 0.0
    %1207 = vmatpush1.xpose.msra.mxu0 0.0
    %1208 = vmatprep.subr.mxu0 0.0
    %1209 = vmatpush1.xpose.msra.mxu0 0.0
    %1210 = vmatprep.subr.mxu0 0.0
    %1211 = vmatpush1.xpose.msra.mxu0 0.0
    %1212 = vmatprep.subr.mxu0 0.0
    %1213 = vmatpush1.xpose.msra.mxu0 0.0
    %1214 = vmatprep.subr.mxu0 0.0
    %1215 = vmatpush1.xpose.msra.mxu0 0.0
    %1216 = vmatprep.subr.mxu0 0.0
    %1217 = vmatpush1.xpose.msra.mxu0 0.0
    %1218 = vmatprep.subr.mxu0 0.0
    %1219 = vmatpush1.xpose.msra.mxu0 0.0
    %1220 = vmatprep.subr.mxu0 0.0
    %1221 = vmatpush1.xpose.msra.mxu0 0.0
    %1222 = vmatprep.subr.mxu0 0.0
    %1223 = vmatpush1.xpose.msra.mxu0 0.0
    %1224 = vmatprep.subr.mxu0 0.0
    %1225 = vmatpush1.xpose.msra.mxu0 0.0
    %1226 = vmatprep.subr.mxu0 0.0
    %1227 = vmatpush1.xpose.msra.mxu0 0.0
    %1228 = vmatprep.subr.mxu0 0.0
    %1229 = vmatpush1.xpose.msra.mxu0 0.0
    %1230 = vmatprep.subr.mxu0 0.0
    %1231 = vmatpush1.xpose.msra.mxu0 0.0
    %1232 = vmatprep.subr.mxu0 0.0
    %1233 = vmatpush1.xpose.msra.mxu0 0.0
    %1234 = vmatprep.subr.mxu0 0.0
    %1235 = vmatpush1.xpose.msra.mxu0 0.0
    %1236 = vmatprep.subr.mxu0 0.0
    %1237 = vmatpush1.xpose.msra.mxu0 0.0
    %1238 = vmatprep.subr.mxu0 0.0
    %1239 = vmatpush1.xpose.msra.mxu0 0.0
    %1240 = vmatprep.subr.mxu0 0.0
    %1241 = vmatpush1.xpose.msra.mxu0 0.0
    %1242 = vmatprep.subr.mxu0 0.0
    %1243 = vmatpush1.xpose.msra.mxu0 0.0
    %1244 = vmatprep.subr.mxu0 0.0
    %1245 = vmatpush1.xpose.msra.mxu0 0.0
    %1246 = vmatprep.subr.mxu0 0.0
    %1247 = vmatpush1.xpose.msra.mxu0 0.0
    %1248 = vmatprep.subr.mxu0 0.0
    %1249 = vmatpush1.xpose.msra.mxu0 0.0
    %1250 = vmatprep.subr.mxu0 0.0
    %1251 = vmatpush1.xpose.msra.mxu0 0.0
    %1252 = vmatprep.subr.mxu0 0.0
    %1253 = vmatpush1.xpose.msra.mxu0 0.0
    %1254 = vmatprep.subr.mxu0 0.0
    %1255 = vmatpush1.xpose.msra.mxu0 0.0
    %1256 = vmatprep.subr.mxu0 0.0
    %1257 = vmatpush1.xpose.msra.mxu0 0.0
    %1258 = vmatprep.subr.mxu0 0.0
    %1259 = vmatpush1.xpose.msra.mxu0 0.0
    %1260 = vmatprep.subr.mxu0 0.0
    %1261 = vmatpush1.xpose.msra.mxu0 0.0
    %1262 = vmatprep.subr.mxu0 0.0
    %1263 = vmatpush1.xpose.msra.mxu0 0.0
    %1264 = vmatprep.subr.mxu0 0.0
    %1265 = vmatpush1.xpose.msra.mxu0 0.0
    %1266 = vmatprep.subr.mxu0 0.0
    %1267 = vmatpush1.xpose.msra.mxu0 0.0
    %1268 = vmatprep.mubr.f32.mxu0 0.0
    %1269 = vmatmul.mubr.f32.gmra.mrb[0].mxu0 %v1200
    %v1270 = vpop.f32.mrb[0].mxu0
    %v1271 = vadd.f32 0.0, %v1270
    %v1272 = vpop.f32.mrb[0].mxu0
    %1273 = vdwg.mxu0
    %v1274 = vsel %vm466, %v1193, -inf
    %1275 = vmax.xlane.f32.xlu0 %v1274
    %v1276 = vpop.xlane.xlu0 %1275
    %v1277 = vsel %vm466, %v1271, -inf
    %1278 = vmax.xlane.f32.xlu0 %v1277
    %v1279 = vpop.xlane.xlu0 %1278
    %v1280 = vsub.f32 %v1193, %v1276
    %v1281 = vsub.f32 %v1271, %v1279
    %v1282 = vmul.f32 %v1280, 1.442695
    %v1283 = vpow.pop %v1282
    %v1284 = vmul.f32 %v1281, 1.442695
    %v1285 = vpow.pop %v1284
    %v1286 = vsel %vm466, %v1283, 0.0
    %1287 = vadd.xlane.f32.xlu0 %v1286
    %v1288 = vpop.xlane.xlu0 %1287
    %v1289 = vsel %vm466, %v1285, 0.0
    %1290 = vadd.xlane.f32.xlu0 %v1289
    %v1291 = vpop.xlane.xlu0 %1290
    %v1292 = vrcp.pop %v1288
    %v1293 = vrcp.pop %v1291
    %v1294 = vmul.f32 %v1283, %v1292
    %v1295 = vmul.f32 %v1285, %v1293
    %1296 = vrot.lane.b32.xlu0 %v455, 64
    %v1297 = vpop.permute.xlu0 %1296
    %v1300 = vsel %vm466, %v1294, 0
    %1302 = vmatprep.subr.mxu0 0.0
    %1303 = vmatpush1.msra.mxu0 %v1297
    %1304 = vmatprep.subr.mxu0 0.0
    %1305 = vmatpush1.msra.mxu0 0.0
    %1306 = vmatprep.subr.mxu0 0.0
    %1307 = vmatpush1.msra.mxu0 0.0
    %1308 = vmatprep.subr.mxu0 0.0
    %1309 = vmatpush1.msra.mxu0 0.0
    %1310 = vmatprep.subr.mxu0 0.0
    %1311 = vmatpush1.msra.mxu0 0.0
    %1312 = vmatprep.subr.mxu0 0.0
    %1313 = vmatpush1.msra.mxu0 0.0
    %1314 = vmatprep.subr.mxu0 0.0
    %1315 = vmatpush1.msra.mxu0 0.0
    %1316 = vmatprep.subr.mxu0 0.0
    %1317 = vmatpush1.msra.mxu0 0.0
    %1318 = vmatprep.subr.mxu0 0.0
    %1319 = vmatpush1.msra.mxu0 0.0
    %1320 = vmatprep.subr.mxu0 0.0
    %1321 = vmatpush1.msra.mxu0 0.0
    %1322 = vmatprep.subr.mxu0 0.0
    %1323 = vmatpush1.msra.mxu0 0.0
    %1324 = vmatprep.subr.mxu0 0.0
    %1325 = vmatpush1.msra.mxu0 0.0
    %1326 = vmatprep.subr.mxu0 0.0
    %1327 = vmatpush1.msra.mxu0 0.0
    %1328 = vmatprep.subr.mxu0 0.0
    %1329 = vmatpush1.msra.mxu0 0.0
    %1330 = vmatprep.subr.mxu0 0.0
    %1331 = vmatpush1.msra.mxu0 0.0
    %1332 = vmatprep.subr.mxu0 0.0
    %1333 = vmatpush1.msra.mxu0 0.0
    %1334 = vmatprep.subr.mxu0 0.0
    %1335 = vmatpush1.msra.mxu0 0.0
    %1336 = vmatprep.subr.mxu0 0.0
    %1337 = vmatpush1.msra.mxu0 0.0
    %1338 = vmatprep.subr.mxu0 0.0
    %1339 = vmatpush1.msra.mxu0 0.0
    %1340 = vmatprep.subr.mxu0 0.0
    %1341 = vmatpush1.msra.mxu0 0.0
    %1342 = vmatprep.subr.mxu0 0.0
    %1343 = vmatpush1.msra.mxu0 0.0
    %1344 = vmatprep.subr.mxu0 0.0
    %1345 = vmatpush1.msra.mxu0 0.0
    %1346 = vmatprep.subr.mxu0 0.0
    %1347 = vmatpush1.msra.mxu0 0.0
    %1348 = vmatprep.subr.mxu0 0.0
    %1349 = vmatpush1.msra.mxu0 0.0
    %1350 = vmatprep.subr.mxu0 0.0
    %1351 = vmatpush1.msra.mxu0 0.0
    %1352 = vmatprep.subr.mxu0 0.0
    %1353 = vmatpush1.msra.mxu0 0.0
    %1354 = vmatprep.subr.mxu0 0.0
    %1355 = vmatpush1.msra.mxu0 0.0
    %1356 = vmatprep.subr.mxu0 0.0
    %1357 = vmatpush1.msra.mxu0 0.0
    %1358 = vmatprep.subr.mxu0 0.0
    %1359 = vmatpush1.msra.mxu0 0.0
    %1360 = vmatprep.subr.mxu0 0.0
    %1361 = vmatpush1.msra.mxu0 0.0
    %1362 = vmatprep.subr.mxu0 0.0
    %1363 = vmatpush1.msra.mxu0 0.0
    %1364 = vmatprep.subr.mxu0 0.0
    %1365 = vmatpush1.msra.mxu0 0.0
    %1366 = vmatprep.mubr.f32.mxu0 0.0
    %1367 = vmatmul.mubr.f32.gmra.mrb[0].mxu0 %v1300
    %v1368 = vpop.f32.mrb[0].mxu0
    %v1369 = vadd.f32 0.0, %v1368
    %v1370 = vpop.f32.mrb[0].mxu0
    %1371 = vdwg.mxu0
    %1372 = vrot.lane.b32.xlu0 %v460, 64
    %v1373 = vpop.permute.xlu0 %1372
    %v1376 = vsel %vm466, %v1295, 0
    %1378 = vmatprep.subr.mxu0 0.0
    %1379 = vmatpush1.msra.mxu0 %v1373
    %1380 = vmatprep.subr.mxu0 0.0
    %1381 = vmatpush1.msra.mxu0 0.0
    %1382 = vmatprep.subr.mxu0 0.0
    %1383 = vmatpush1.msra.mxu0 0.0
    %1384 = vmatprep.subr.mxu0 0.0
    %1385 = vmatpush1.msra.mxu0 0.0
    %1386 = vmatprep.subr.mxu0 0.0
    %1387 = vmatpush1.msra.mxu0 0.0
    %1388 = vmatprep.subr.mxu0 0.0
    %1389 = vmatpush1.msra.mxu0 0.0
    %1390 = vmatprep.subr.mxu0 0.0
    %1391 = vmatpush1.msra.mxu0 0.0
    %1392 = vmatprep.subr.mxu0 0.0
    %1393 = vmatpush1.msra.mxu0 0.0
    %1394 = vmatprep.subr.mxu0 0.0
    %1395 = vmatpush1.msra.mxu0 0.0
    %1396 = vmatprep.subr.mxu0 0.0
    %1397 = vmatpush1.msra.mxu0 0.0
    %1398 = vmatprep.subr.mxu0 0.0
    %1399 = vmatpush1.msra.mxu0 0.0
    %1400 = vmatprep.subr.mxu0 0.0
    %1401 = vmatpush1.msra.mxu0 0.0
    %1402 = vmatprep.subr.mxu0 0.0
    %1403 = vmatpush1.msra.mxu0 0.0
    %1404 = vmatprep.subr.mxu0 0.0
    %1405 = vmatpush1.msra.mxu0 0.0
    %1406 = vmatprep.subr.mxu0 0.0
    %1407 = vmatpush1.msra.mxu0 0.0
    %1408 = vmatprep.subr.mxu0 0.0
    %1409 = vmatpush1.msra.mxu0 0.0
    %1410 = vmatprep.subr.mxu0 0.0
    %1411 = vmatpush1.msra.mxu0 0.0
    %1412 = vmatprep.subr.mxu0 0.0
    %1413 = vmatpush1.msra.mxu0 0.0
    %1414 = vmatprep.subr.mxu0 0.0
    %1415 = vmatpush1.msra.mxu0 0.0
    %1416 = vmatprep.subr.mxu0 0.0
    %1417 = vmatpush1.msra.mxu0 0.0
    %1418 = vmatprep.subr.mxu0 0.0
    %1419 = vmatpush1.msra.mxu0 0.0
    %1420 = vmatprep.subr.mxu0 0.0
    %1421 = vmatpush1.msra.mxu0 0.0
    %1422 = vmatprep.subr.mxu0 0.0
    %1423 = vmatpush1.msra.mxu0 0.0
    %1424 = vmatprep.subr.mxu0 0.0
    %1425 = vmatpush1.msra.mxu0 0.0
    %1426 = vmatprep.subr.mxu0 0.0
    %1427 = vmatpush1.msra.mxu0 0.0
    %1428 = vmatprep.subr.mxu0 0.0
    %1429 = vmatpush1.msra.mxu0 0.0
    %1430 = vmatprep.subr.mxu0 0.0
    %1431 = vmatpush1.msra.mxu0 0.0
    %1432 = vmatprep.subr.mxu0 0.0
    %1433 = vmatpush1.msra.mxu0 0.0
    %1434 = vmatprep.subr.mxu0 0.0
    %1435 = vmatpush1.msra.mxu0 0.0
    %1436 = vmatprep.subr.mxu0 0.0
    %1437 = vmatpush1.msra.mxu0 0.0
    %1438 = vmatprep.subr.mxu0 0.0
    %1439 = vmatpush1.msra.mxu0 0.0
    %1440 = vmatprep.subr.mxu0 0.0
    %1441 = vmatpush1.msra.mxu0 0.0
    %1442 = vmatprep.mubr.f32.mxu0 0.0
    %1443 = vmatmul.mubr.f32.gmra.mrb[0].mxu0 %v1376
    %v1444 = vpop.f32.mrb[0].mxu0
    %v1445 = vadd.f32 0.0, %v1444
    %v1446 = vpop.f32.mrb[0].mxu0
    %1447 = vdwg.mxu0
    %v1448 = vadd.f32 %v1042, %v1369
    %v1449 = vadd.f32 %v1115, %v1445
    %1450 = vrot.lane.b32.xlu0 %v369, 104
    %v1451 = vpop.permute.xlu0 %1450
    %1452 = vrot.lane.b32.xlu0 %v369, 72
    %v1453 = vpop.permute.xlu0 %1452
    %v1454 = vsel %vm466, %v1451, 0
    %v1456 = vsel %vm466, %v1453, 0
    %1458 = vmatprep.subr.mxu0 0.0
    %1459 = vmatpush1.xpose.msra.mxu0 %v1456
    %1460 = vmatprep.subr.mxu0 0.0
    %1461 = vmatpush1.xpose.msra.mxu0 0.0
    %1462 = vmatprep.subr.mxu0 0.0
    %1463 = vmatpush1.xpose.msra.mxu0 0.0
    %1464 = vmatprep.subr.mxu0 0.0
    %1465 = vmatpush1.xpose.msra.mxu0 0.0
    %1466 = vmatprep.subr.mxu0 0.0
    %1467 = vmatpush1.xpose.msra.mxu0 0.0
    %1468 = vmatprep.subr.mxu0 0.0
    %1469 = vmatpush1.xpose.msra.mxu0 0.0
    %1470 = vmatprep.subr.mxu0 0.0
    %1471 = vmatpush1.xpose.msra.mxu0 0.0
    %1472 = vmatprep.subr.mxu0 0.0
    %1473 = vmatpush1.xpose.msra.mxu0 0.0
    %1474 = vmatprep.subr.mxu0 0.0
    %1475 = vmatpush1.xpose.msra.mxu0 0.0
    %1476 = vmatprep.subr.mxu0 0.0
    %1477 = vmatpush1.xpose.msra.mxu0 0.0
    %1478 = vmatprep.subr.mxu0 0.0
    %1479 = vmatpush1.xpose.msra.mxu0 0.0
    %1480 = vmatprep.subr.mxu0 0.0
    %1481 = vmatpush1.xpose.msra.mxu0 0.0
    %1482 = vmatprep.subr.mxu0 0.0
    %1483 = vmatpush1.xpose.msra.mxu0 0.0
    %1484 = vmatprep.subr.mxu0 0.0
    %1485 = vmatpush1.xpose.msra.mxu0 0.0
    %1486 = vmatprep.subr.mxu0 0.0
    %1487 = vmatpush1.xpose.msra.mxu0 0.0
    %1488 = vmatprep.subr.mxu0 0.0
    %1489 = vmatpush1.xpose.msra.mxu0 0.0
    %1490 = vmatprep.subr.mxu0 0.0
    %1491 = vmatpush1.xpose.msra.mxu0 0.0
    %1492 = vmatprep.subr.mxu0 0.0
    %1493 = vmatpush1.xpose.msra.mxu0 0.0
    %1494 = vmatprep.subr.mxu0 0.0
    %1495 = vmatpush1.xpose.msra.mxu0 0.0
    %1496 = vmatprep.subr.mxu0 0.0
    %1497 = vmatpush1.xpose.msra.mxu0 0.0
    %1498 = vmatprep.subr.mxu0 0.0
    %1499 = vmatpush1.xpose.msra.mxu0 0.0
    %1500 = vmatprep.subr.mxu0 0.0
    %1501 = vmatpush1.xpose.msra.mxu0 0.0
    %1502 = vmatprep.subr.mxu0 0.0
    %1503 = vmatpush1.xpose.msra.mxu0 0.0
    %1504 = vmatprep.subr.mxu0 0.0
    %1505 = vmatpush1.xpose.msra.mxu0 0.0
    %1506 = vmatprep.subr.mxu0 0.0
    %1507 = vmatpush1.xpose.msra.mxu0 0.0
    %1508 = vmatprep.subr.mxu0 0.0
    %1509 = vmatpush1.xpose.msra.mxu0 0.0
    %1510 = vmatprep.subr.mxu0 0.0
    %1511 = vmatpush1.xpose.msra.mxu0 0.0
    %1512 = vmatprep.subr.mxu0 0.0
    %1513 = vmatpush1.xpose.msra.mxu0 0.0
    %1514 = vmatprep.subr.mxu0 0.0
    %1515 = vmatpush1.xpose.msra.mxu0 0.0
    %1516 = vmatprep.subr.mxu0 0.0
    %1517 = vmatpush1.xpose.msra.mxu0 0.0
    %1518 = vmatprep.subr.mxu0 0.0
    %1519 = vmatpush1.xpose.msra.mxu0 0.0
    %1520 = vmatprep.subr.mxu0 0.0
    %1521 = vmatpush1.xpose.msra.mxu0 0.0
    %1522 = vmatprep.mubr.f32.mxu0 0.0
    %1523 = vmatmul.mubr.f32.gmra.mrb[0].mxu0 %v1454
    %v1524 = vpop.f32.mrb[0].mxu0
    %v1525 = vadd.f32 0.0, %v1524
    %v1526 = vpop.f32.mrb[0].mxu0
    %1527 = vdwg.mxu0
    %1528 = vrot.lane.b32.xlu0 %v374, 104
    %v1529 = vpop.permute.xlu0 %1528
    %1530 = vrot.lane.b32.xlu0 %v374, 72
    %v1531 = vpop.permute.xlu0 %1530
    %v1532 = vsel %vm466, %v1529, 0
    %v1534 = vsel %vm466, %v1531, 0
    %1536 = vmatprep.subr.mxu0 0.0
    %1537 = vmatpush1.xpose.msra.mxu0 %v1534
    %1538 = vmatprep.subr.mxu0 0.0
    %1539 = vmatpush1.xpose.msra.mxu0 0.0
    %1540 = vmatprep.subr.mxu0 0.0
    %1541 = vmatpush1.xpose.msra.mxu0 0.0
    %1542 = vmatprep.subr.mxu0 0.0
    %1543 = vmatpush1.xpose.msra.mxu0 0.0
    %1544 = vmatprep.subr.mxu0 0.0
    %1545 = vmatpush1.xpose.msra.mxu0 0.0
    %1546 = vmatprep.subr.mxu0 0.0
    %1547 = vmatpush1.xpose.msra.mxu0 0.0
    %1548 = vmatprep.subr.mxu0 0.0
    %1549 = vmatpush1.xpose.msra.mxu0 0.0
    %1550 = vmatprep.subr.mxu0 0.0
    %1551 = vmatpush1.xpose.msra.mxu0 0.0
    %1552 = vmatprep.subr.mxu0 0.0
    %1553 = vmatpush1.xpose.msra.mxu0 0.0
    %1554 = vmatprep.subr.mxu0 0.0
    %1555 = vmatpush1.xpose.msra.mxu0 0.0
    %1556 = vmatprep.subr.mxu0 0.0
    %1557 = vmatpush1.xpose.msra.mxu0 0.0
    %1558 = vmatprep.subr.mxu0 0.0
    %1559 = vmatpush1.xpose.msra.mxu0 0.0
    %1560 = vmatprep.subr.mxu0 0.0
    %1561 = vmatpush1.xpose.msra.mxu0 0.0
    %1562 = vmatprep.subr.mxu0 0.0
    %1563 = vmatpush1.xpose.msra.mxu0 0.0
    %1564 = vmatprep.subr.mxu0 0.0
    %1565 = vmatpush1.xpose.msra.mxu0 0.0
    %1566 = vmatprep.subr.mxu0 0.0
    %1567 = vmatpush1.xpose.msra.mxu0 0.0
    %1568 = vmatprep.subr.mxu0 0.0
    %1569 = vmatpush1.xpose.msra.mxu0 0.0
    %1570 = vmatprep.subr.mxu0 0.0
    %1571 = vmatpush1.xpose.msra.mxu0 0.0
    %1572 = vmatprep.subr.mxu0 0.0
    %1573 = vmatpush1.xpose.msra.mxu0 0.0
    %1574 = vmatprep.subr.mxu0 0.0
    %1575 = vmatpush1.xpose.msra.mxu0 0.0
    %1576 = vmatprep.subr.mxu0 0.0
    %1577 = vmatpush1.xpose.msra.mxu0 0.0
    %1578 = vmatprep.subr.mxu0 0.0
    %1579 = vmatpush1.xpose.msra.mxu0 0.0
    %1580 = vmatprep.subr.mxu0 0.0
    %1581 = vmatpush1.xpose.msra.mxu0 0.0
    %1582 = vmatprep.subr.mxu0 0.0
    %1583 = vmatpush1.xpose.msra.mxu0 0.0
    %1584 = vmatprep.subr.mxu0 0.0
    %1585 = vmatpush1.xpose.msra.mxu0 0.0
    %1586 = vmatprep.subr.mxu0 0.0
    %1587 = vmatpush1.xpose.msra.mxu0 0.0
    %1588 = vmatprep.subr.mxu0 0.0
    %1589 = vmatpush1.xpose.msra.mxu0 0.0
    %1590 = vmatprep.subr.mxu0 0.0
    %1591 = vmatpush1.xpose.msra.mxu0 0.0
    %1592 = vmatprep.subr.mxu0 0.0
    %1593 = vmatpush1.xpose.msra.mxu0 0.0
    %1594 = vmatprep.subr.mxu0 0.0
    %1595 = vmatpush1.xpose.msra.mxu0 0.0
    %1596 = vmatprep.subr.mxu0 0.0
    %1597 = vmatpush1.xpose.msra.mxu0 0.0
    %1598 = vmatprep.subr.mxu0 0.0
    %1599 = vmatpush1.xpose.msra.mxu0 0.0
    %1600 = vmatprep.mubr.f32.mxu0 0.0
    %1601 = vmatmul.mubr.f32.gmra.mrb[0].mxu0 %v1532
    %v1602 = vpop.f32.mrb[0].mxu0
    %v1603 = vadd.f32 0.0, %v1602
    %v1604 = vpop.f32.mrb[0].mxu0
    %1605 = vdwg.mxu0
    %v1606 = vsel %vm466, %v1525, -inf
    %1607 = vmax.xlane.f32.xlu0 %v1606
    %v1608 = vpop.xlane.xlu0 %1607
    %v1609 = vsel %vm466, %v1603, -inf
    %1610 = vmax.xlane.f32.xlu0 %v1609
    %v1611 = vpop.xlane.xlu0 %1610
    %v1612 = vsub.f32 %v1525, %v1608
    %v1613 = vsub.f32 %v1603, %v1611
    %v1614 = vmul.f32 %v1612, 1.442695
    %v1615 = vpow.pop %v1614
    %v1616 = vmul.f32 %v1613, 1.442695
    %v1617 = vpow.pop %v1616
    %v1618 = vsel %vm466, %v1615, 0.0
    %1619 = vadd.xlane.f32.xlu0 %v1618
    %v1620 = vpop.xlane.xlu0 %1619
    %v1621 = vsel %vm466, %v1617, 0.0
    %1622 = vadd.xlane.f32.xlu0 %v1621
    %v1623 = vpop.xlane.xlu0 %1622
    %v1624 = vrcp.pop %v1620
    %v1625 = vrcp.pop %v1623
    %v1626 = vmul.f32 %v1615, %v1624
    %v1627 = vmul.f32 %v1617, %v1625
    %1628 = vrot.lane.b32.xlu0 %v455, 32
    %v1629 = vpop.permute.xlu0 %1628
    %v1632 = vsel %vm466, %v1626, 0
    %1634 = vmatprep.subr.mxu0 0.0
    %1635 = vmatpush1.msra.mxu0 %v1629
    %1636 = vmatprep.subr.mxu0 0.0
    %1637 = vmatpush1.msra.mxu0 0.0
    %1638 = vmatprep.subr.mxu0 0.0
    %1639 = vmatpush1.msra.mxu0 0.0
    %1640 = vmatprep.subr.mxu0 0.0
    %1641 = vmatpush1.msra.mxu0 0.0
    %1642 = vmatprep.subr.mxu0 0.0
    %1643 = vmatpush1.msra.mxu0 0.0
    %1644 = vmatprep.subr.mxu0 0.0
    %1645 = vmatpush1.msra.mxu0 0.0
    %1646 = vmatprep.subr.mxu0 0.0
    %1647 = vmatpush1.msra.mxu0 0.0
    %1648 = vmatprep.subr.mxu0 0.0
    %1649 = vmatpush1.msra.mxu0 0.0
    %1650 = vmatprep.subr.mxu0 0.0
    %1651 = vmatpush1.msra.mxu0 0.0
    %1652 = vmatprep.subr.mxu0 0.0
    %1653 = vmatpush1.msra.mxu0 0.0
    %1654 = vmatprep.subr.mxu0 0.0
    %1655 = vmatpush1.msra.mxu0 0.0
    %1656 = vmatprep.subr.mxu0 0.0
    %1657 = vmatpush1.msra.mxu0 0.0
    %1658 = vmatprep.subr.mxu0 0.0
    %1659 = vmatpush1.msra.mxu0 0.0
    %1660 = vmatprep.subr.mxu0 0.0
    %1661 = vmatpush1.msra.mxu0 0.0
    %1662 = vmatprep.subr.mxu0 0.0
    %1663 = vmatpush1.msra.mxu0 0.0
    %1664 = vmatprep.subr.mxu0 0.0
    %1665 = vmatpush1.msra.mxu0 0.0
    %1666 = vmatprep.subr.mxu0 0.0
    %1667 = vmatpush1.msra.mxu0 0.0
    %1668 = vmatprep.subr.mxu0 0.0
    %1669 = vmatpush1.msra.mxu0 0.0
    %1670 = vmatprep.subr.mxu0 0.0
    %1671 = vmatpush1.msra.mxu0 0.0
    %1672 = vmatprep.subr.mxu0 0.0
    %1673 = vmatpush1.msra.mxu0 0.0
    %1674 = vmatprep.subr.mxu0 0.0
    %1675 = vmatpush1.msra.mxu0 0.0
    %1676 = vmatprep.subr.mxu0 0.0
    %1677 = vmatpush1.msra.mxu0 0.0
    %1678 = vmatprep.subr.mxu0 0.0
    %1679 = vmatpush1.msra.mxu0 0.0
    %1680 = vmatprep.subr.mxu0 0.0
    %1681 = vmatpush1.msra.mxu0 0.0
    %1682 = vmatprep.subr.mxu0 0.0
    %1683 = vmatpush1.msra.mxu0 0.0
    %1684 = vmatprep.subr.mxu0 0.0
    %1685 = vmatpush1.msra.mxu0 0.0
    %1686 = vmatprep.subr.mxu0 0.0
    %1687 = vmatpush1.msra.mxu0 0.0
    %1688 = vmatprep.subr.mxu0 0.0
    %1689 = vmatpush1.msra.mxu0 0.0
    %1690 = vmatprep.subr.mxu0 0.0
    %1691 = vmatpush1.msra.mxu0 0.0
    %1692 = vmatprep.subr.mxu0 0.0
    %1693 = vmatpush1.msra.mxu0 0.0
    %1694 = vmatprep.subr.mxu0 0.0
    %1695 = vmatpush1.msra.mxu0 0.0
    %1696 = vmatprep.subr.mxu0 0.0
    %1697 = vmatpush1.msra.mxu0 0.0
    %1698 = vmatprep.mubr.f32.mxu0 0.0
    %1699 = vmatmul.mubr.f32.gmra.mrb[0].mxu0 %v1632
    %v1700 = vpop.f32.mrb[0].mxu0
    %v1701 = vadd.f32 0.0, %v1700
    %v1702 = vpop.f32.mrb[0].mxu0
    %1703 = vdwg.mxu0
    %1704 = vrot.lane.b32.xlu0 %v460, 32
    %v1705 = vpop.permute.xlu0 %1704
    %v1708 = vsel %vm466, %v1627, 0
    %1710 = vmatprep.subr.mxu0 0.0
    %1711 = vmatpush1.msra.mxu0 %v1705
    %1712 = vmatprep.subr.mxu0 0.0
    %1713 = vmatpush1.msra.mxu0 0.0
    %1714 = vmatprep.subr.mxu0 0.0
    %1715 = vmatpush1.msra.mxu0 0.0
    %1716 = vmatprep.subr.mxu0 0.0
    %1717 = vmatpush1.msra.mxu0 0.0
    %1718 = vmatprep.subr.mxu0 0.0
    %1719 = vmatpush1.msra.mxu0 0.0
    %1720 = vmatprep.subr.mxu0 0.0
    %1721 = vmatpush1.msra.mxu0 0.0
    %1722 = vmatprep.subr.mxu0 0.0
    %1723 = vmatpush1.msra.mxu0 0.0
    %1724 = vmatprep.subr.mxu0 0.0
    %1725 = vmatpush1.msra.mxu0 0.0
    %1726 = vmatprep.subr.mxu0 0.0
    %1727 = vmatpush1.msra.mxu0 0.0
    %1728 = vmatprep.subr.mxu0 0.0
    %1729 = vmatpush1.msra.mxu0 0.0
    %1730 = vmatprep.subr.mxu0 0.0
    %1731 = vmatpush1.msra.mxu0 0.0
    %1732 = vmatprep.subr.mxu0 0.0
    %1733 = vmatpush1.msra.mxu0 0.0
    %1734 = vmatprep.subr.mxu0 0.0
    %1735 = vmatpush1.msra.mxu0 0.0
    %1736 = vmatprep.subr.mxu0 0.0
    %1737 = vmatpush1.msra.mxu0 0.0
    %1738 = vmatprep.subr.mxu0 0.0
    %1739 = vmatpush1.msra.mxu0 0.0
    %1740 = vmatprep.subr.mxu0 0.0
    %1741 = vmatpush1.msra.mxu0 0.0
    %1742 = vmatprep.subr.mxu0 0.0
    %1743 = vmatpush1.msra.mxu0 0.0
    %1744 = vmatprep.subr.mxu0 0.0
    %1745 = vmatpush1.msra.mxu0 0.0
    %1746 = vmatprep.subr.mxu0 0.0
    %1747 = vmatpush1.msra.mxu0 0.0
    %1748 = vmatprep.subr.mxu0 0.0
    %1749 = vmatpush1.msra.mxu0 0.0
    %1750 = vmatprep.subr.mxu0 0.0
    %1751 = vmatpush1.msra.mxu0 0.0
    %1752 = vmatprep.subr.mxu0 0.0
    %1753 = vmatpush1.msra.mxu0 0.0
    %1754 = vmatprep.subr.mxu0 0.0
    %1755 = vmatpush1.msra.mxu0 0.0
    %1756 = vmatprep.subr.mxu0 0.0
    %1757 = vmatpush1.msra.mxu0 0.0
    %1758 = vmatprep.subr.mxu0 0.0
    %1759 = vmatpush1.msra.mxu0 0.0
    %1760 = vmatprep.subr.mxu0 0.0
    %1761 = vmatpush1.msra.mxu0 0.0
    %1762 = vmatprep.subr.mxu0 0.0
    %1763 = vmatpush1.msra.mxu0 0.0
    %1764 = vmatprep.subr.mxu0 0.0
    %1765 = vmatpush1.msra.mxu0 0.0
    %1766 = vmatprep.subr.mxu0 0.0
    %1767 = vmatpush1.msra.mxu0 0.0
    %1768 = vmatprep.subr.mxu0 0.0
    %1769 = vmatpush1.msra.mxu0 0.0
    %1770 = vmatprep.subr.mxu0 0.0
    %1771 = vmatpush1.msra.mxu0 0.0
    %1772 = vmatprep.subr.mxu0 0.0
    %1773 = vmatpush1.msra.mxu0 0.0
    %1774 = vmatprep.mubr.f32.mxu0 0.0
    %1775 = vmatmul.mubr.f32.gmra.mrb[0].mxu0 %v1708
    %v1776 = vpop.f32.mrb[0].mxu0
    %v1777 = vadd.f32 0.0, %v1776
    %v1778 = vpop.f32.mrb[0].mxu0
    %1779 = vdwg.mxu0
    %v1780 = vadd.f32 %v1448, %v1701
    %v1781 = vadd.f32 %v1449, %v1777
    %v1782 = vld [vmem:[%s8] sm:$0x1]
    %v1784 = vlaneseq
    %v1785 = vshrl.u32 %v1784, 7
    %v1786 = vsub.s32 0, %v1785
    %v1787 = vrot.slane %v1782, %v1786
    %v1789 = vadd.f32 %v1780, %v1787
    %v1790 = vadd.f32 %v1781, %v1787
    %v1791 = vadd.f32 %v127, %v1789
    %v1792 = vadd.f32 %v128, %v1790
    %v1793 = vsel %vm141, %v1791, 0.0
    %1794 = vadd.xlane.f32.xlu0 %v1793
    %v1795 = vpop.xlane.xlu0 %1794
    %v1796 = vsel %vm141, %v1792, 0.0
    %1797 = vadd.xlane.f32.xlu0 %v1796
    %v1798 = vpop.xlane.xlu0 %1797
    %v1799 = vmul.f32 %v1795, %v244
    %v1800 = vmul.f32 %v1798, %v244
    %v1801 = vsub.f32 %v1791, %v1799
    %v1802 = vsub.f32 %v1792, %v1800
    %v1803 = vmul.f32 %v1801, %v1801
    %v1804 = vmul.f32 %v1802, %v1802
    %v1805 = vsel %vm141, %v1803, 0.0
    %1806 = vadd.xlane.f32.xlu0 %v1805
    %v1807 = vpop.xlane.xlu0 %1806
    %v1808 = vsel %vm141, %v1804, 0.0
    %1809 = vadd.xlane.f32.xlu0 %v1808
    %v1810 = vpop.xlane.xlu0 %1809
    %v1811 = vmul.f32 %v1807, %v244
    %v1812 = vmul.f32 %v1810, %v244
    %v1813 = vadd.f32 %v1811, 1e-05
    %v1814 = vadd.f32 %v1812, 1e-05
    %v1815 = vrsqrt.pop %v1813
    %v1816 = vrsqrt.pop %v1814
    %v1817 = vmul.f32 %v1801, %v1815
    %v1818 = vmul.f32 %v1802, %v1816
    %1819 = vrot.lane.b32.xlu0 %v268, 64
    %v1820 = vpop.permute.xlu0 %1819
    %1821 = vrot.lane.b32.xlu0 %v272, 64
    %v1822 = vpop.permute.xlu0 %1821
    %v1825 = vmul.f32 %v1817, %v1820
    %v1826 = vmul.f32 %v1818, %v1822
    %1827 = vrot.lane.b32.xlu0 %v268, 32
    %v1828 = vpop.permute.xlu0 %1827
    %1829 = vrot.lane.b32.xlu0 %v272, 32
    %v1830 = vpop.permute.xlu0 %1829
    %v1833 = vadd.f32 %v1825, %v1828
    %v1834 = vadd.f32 %v1826, %v1830
    %v1835 = vcombine.high %v1833, 0.0
    %v1837 = vunpack.c.l.s4 1983009808
    %v1838 = vunpack.c.0.s8 %v1837
    %v1839 = vlaneseq
    %v1840 = vshrl.u32 %v1839, 7
    %v1841 = vsub.s32 %v1838, %v1840
    %v1842 = vrot.slane %v1833, %v1841
    %v1844 = vunpack.c.l.s4 1983009808
    %v1845 = vunpack.c.0.s8 %v1844
    %v1846 = vlaneseq
    %v1847 = vshrl.u32 %v1846, 7
    %v1848 = vsub.s32 %v1845, %v1847
    %v1849 = vrot.slane %v1835, %v1848
    %v1850 = vcombine.high %v1834, 0.0
    %v1852 = vunpack.c.l.s4 1983009808
    %v1853 = vunpack.c.0.s8 %v1852
    %v1854 = vlaneseq
    %v1855 = vshrl.u32 %v1854, 7
    %v1856 = vsub.s32 %v1853, %v1855
    %v1857 = vrot.slane %v1834, %v1856
    %v1859 = vunpack.c.l.s4 1983009808
    %v1860 = vunpack.c.0.s8 %v1859
    %v1861 = vlaneseq
    %v1862 = vshrl.u32 %v1861, 7
    %v1863 = vsub.s32 %v1860, %v1862
    %v1864 = vrot.slane %v1850, %v1863
    %v1865 = vcombine.low %v1842, %v1857
    %v1866 = vcombine.high %v1842, %v1857
    %v1868 = vunpack.c.l.s4 1934713408
    %v1869 = vunpack.c.0.s8 %v1868
    %v1870 = vlaneseq
    %v1871 = vshrl.u32 %v1870, 7
    %v1872 = vsub.s32 %v1869, %v1871
    %v1873 = vrot.slane %v1865, %v1872
    %v1875 = vunpack.c.l.s4 1934713408
    %v1876 = vunpack.c.0.s8 %v1875
    %v1877 = vlaneseq
    %v1878 = vshrl.u32 %v1877, 7
    %v1879 = vsub.s32 %v1876, %v1878
    %v1880 = vrot.slane %v1866, %v1879
    %v1881 = vcombine.low %v1849, %v1864
    %v1882 = vcombine.high %v1849, %v1864
    %v1884 = vunpack.c.l.s4 1934713408
    %v1885 = vunpack.c.0.s8 %v1884
    %v1886 = vlaneseq
    %v1887 = vshrl.u32 %v1886, 7
    %v1888 = vsub.s32 %v1885, %v1887
    %v1889 = vrot.slane %v1881, %v1888
    %v1891 = vunpack.c.l.s4 1934713408
    %v1892 = vunpack.c.0.s8 %v1891
    %v1893 = vlaneseq
    %v1894 = vshrl.u32 %v1893, 7
    %v1895 = vsub.s32 %v1892, %v1894
    %v1896 = vrot.slane %v1882, %v1895
    %v1897 = vcombine.high %v1873, 0.0
    %v1898 = vcombine.high %v1880, 0.0
    %v1899 = vcombine.high %v1889, 0.0
    %v1900 = vcombine.high %v1896, 0.0
    %1902 = vrot.lane.b32.xlu0 %v1897, 32
    %v1903 = vpop.permute.xlu0 %1902
    %1906 = vrot.lane.b32.xlu0 %v1880, 64
    %v1907 = vpop.permute.xlu0 %1906
    %1910 = vrot.lane.b32.xlu0 %v1898, 96
    %v1911 = vpop.permute.xlu0 %1910
    %1914 = vrot.lane.b32.xlu0 %v1899, 32
    %v1915 = vpop.permute.xlu0 %1914
    %1918 = vrot.lane.b32.xlu0 %v1896, 64
    %v1919 = vpop.permute.xlu0 %1918
    %1922 = vrot.lane.b32.xlu0 %v1900, 96
    %v1923 = vpop.permute.xlu0 %1922
    %v1925 = vsel %vm141, %v1873, %v1903
    %vm1926 = vcmask 523264
    %v1927 = vsel %vm1926, %v1925, %v1907
    %vm1928 = vcmask 785408
    %v1929 = vsel %vm1928, %v1927, %v1911
    %v1930 = vsel %vm141, %v1889, %v1915
    %v1931 = vsel %vm1926, %v1930, %v1919
    %v1932 = vsel %vm1928, %v1931, %v1923
    %v1933 = vld [vmem:[#allocation10] sm:$0xff]
    %v1934 = vld [vmem:[#allocation10 + $0x8] sm:$0xff]
    %v1935 = vld [vmem:[#allocation10 + $0x10] sm:$0xff]
    %v1936 = vld [vmem:[#allocation10 + $0x18] sm:$0xff]
    %v1937 = vld [vmem:[#allocation10 + $0x20] sm:$0xff]
    %v1938 = vld [vmem:[#allocation10 + $0x28] sm:$0xff]
    %v1939 = vld [vmem:[#allocation10 + $0x30] sm:$0xff]
    %v1940 = vld [vmem:[#allocation10 + $0x38] sm:$0xff]
    %v1941 = vld [vmem:[#allocation10 + $0x40] sm:$0xff]
    %v1942 = vld [vmem:[#allocation10 + $0x48] sm:$0xff]
    %v1943 = vld [vmem:[#allocation10 + $0x50] sm:$0xff]
    %v1944 = vld [vmem:[#allocation10 + $0x58] sm:$0xff]
    %v1945 = vld [vmem:[#allocation10 + $0x60] sm:$0xff]
    %v1946 = vld [vmem:[#allocation10 + $0x68] sm:$0xff]
    %v1947 = vld [vmem:[#allocation10 + $0x70] sm:$0xff]
    %v1948 = vld [vmem:[#allocation10 + $0x78] sm:$0xff]
    %v1949 = vld [vmem:[#allocation10 + $0x80] sm:$0xff]
    %v1950 = vld [vmem:[#allocation10 + $0x88] sm:$0xff]
    %v1951 = vld [vmem:[#allocation10 + $0x90] sm:$0xff]
    %v1952 = vld [vmem:[#allocation10 + $0x98] sm:$0xff]
    %v1953 = vld [vmem:[#allocation10 + $0xa0] sm:$0xff]
    %v1954 = vld [vmem:[#allocation10 + $0xa8] sm:$0xff]
    %v1955 = vld [vmem:[#allocation10 + $0xb0] sm:$0xff]
    %v1956 = vld [vmem:[#allocation10 + $0xb8] sm:$0xff]
    %v1957 = vld [vmem:[#allocation10 + $0xc0] sm:$0xff]
    %v1958 = vld [vmem:[#allocation10 + $0xc8] sm:$0xff]
    %v1959 = vld [vmem:[#allocation10 + $0xd0] sm:$0xff]
    %v1960 = vld [vmem:[#allocation10 + $0xd8] sm:$0xff]
    %v1961 = vld [vmem:[#allocation10 + $0xe0] sm:$0xff]
    %v1962 = vld [vmem:[#allocation10 + $0xe8] sm:$0xff]
    %v1963 = vld [vmem:[#allocation10 + $0xf0] sm:$0xff]
    %v1964 = vld [vmem:[#allocation10 + $0xf8] sm:$0xff]
    %v1965 = vld [vmem:[#allocation10 + $0x100] sm:$0xff]
    %v1966 = vld [vmem:[#allocation10 + $0x108] sm:$0xff]
    %v1967 = vld [vmem:[#allocation10 + $0x110] sm:$0xff]
    %v1968 = vld [vmem:[#allocation10 + $0x118] sm:$0xff]
    %v1969 = vld [vmem:[#allocation10 + $0x120] sm:$0xff]
    %v1970 = vld [vmem:[#allocation10 + $0x128] sm:$0xff]
    %v1971 = vld [vmem:[#allocation10 + $0x130] sm:$0xff]
    %v1972 = vld [vmem:[#allocation10 + $0x138] sm:$0xff]
    %v1973 = vld [vmem:[#allocation10 + $0x140] sm:$0xff]
    %v1974 = vld [vmem:[#allocation10 + $0x148] sm:$0xff]
    %v1975 = vld [vmem:[#allocation10 + $0x150] sm:$0xff]
    %v1976 = vld [vmem:[#allocation10 + $0x158] sm:$0xff]
    %v1977 = vld [vmem:[#allocation10 + $0x160] sm:$0xff]
    %v1978 = vld [vmem:[#allocation10 + $0x168] sm:$0xff]
    %v1979 = vld [vmem:[#allocation10 + $0x170] sm:$0xff]
    %v1980 = vld [vmem:[#allocation10 + $0x178] sm:$0xff]
    %v1981 = vld [vmem:[#allocation10 + $0x180] sm:$0xff]
    %v1982 = vld [vmem:[#allocation10 + $0x188] sm:$0xff]
    %v1983 = vld [vmem:[#allocation10 + $0x190] sm:$0xff]
    %v1984 = vld [vmem:[#allocation10 + $0x198] sm:$0xff]
    %v1985 = vld [vmem:[#allocation10 + $0x1a0] sm:$0xff]
    %v1986 = vld [vmem:[#allocation10 + $0x1a8] sm:$0xff]
    %v1987 = vld [vmem:[#allocation10 + $0x1b0] sm:$0xff]
    %v1988 = vld [vmem:[#allocation10 + $0x1b8] sm:$0xff]
    %v1989 = vld [vmem:[#allocation10 + $0x1c0] sm:$0xff]
    %v1990 = vld [vmem:[#allocation10 + $0x1c8] sm:$0xff]
    %v1991 = vld [vmem:[#allocation10 + $0x1d0] sm:$0xff]
    %v1992 = vld [vmem:[#allocation10 + $0x1d8] sm:$0xff]
    %v1993 = vld [vmem:[#allocation10 + $0x1e0] sm:$0xff]
    %v1994 = vld [vmem:[#allocation10 + $0x1e8] sm:$0xff]
    %v1995 = vld [vmem:[#allocation10 + $0x1f0] sm:$0xff]
    %v1996 = vld [vmem:[#allocation10 + $0x1f8] sm:$0xff]
    %v1997 = vld [vmem:[#allocation10 + $0x200] sm:$0xff]
    %v1998 = vld [vmem:[#allocation10 + $0x208] sm:$0xff]
    %v1999 = vld [vmem:[#allocation10 + $0x210] sm:$0xff]
    %v2000 = vld [vmem:[#allocation10 + $0x218] sm:$0xff]
    %v2001 = vld [vmem:[#allocation10 + $0x220] sm:$0xff]
    %v2002 = vld [vmem:[#allocation10 + $0x228] sm:$0xff]
    %v2003 = vld [vmem:[#allocation10 + $0x230] sm:$0xff]
    %v2004 = vld [vmem:[#allocation10 + $0x238] sm:$0xff]
    %v2005 = vld [vmem:[#allocation10 + $0x240] sm:$0xff]
    %v2006 = vld [vmem:[#allocation10 + $0x248] sm:$0xff]
    %v2007 = vld [vmem:[#allocation10 + $0x250] sm:$0xff]
    %v2008 = vld [vmem:[#allocation10 + $0x258] sm:$0xff]
    %v2009 = vld [vmem:[#allocation10 + $0x260] sm:$0xff]
    %v2010 = vld [vmem:[#allocation10 + $0x268] sm:$0xff]
    %v2011 = vld [vmem:[#allocation10 + $0x270] sm:$0xff]
    %v2012 = vld [vmem:[#allocation10 + $0x278] sm:$0xff]
    %v2013 = vld [vmem:[#allocation10 + $0x280] sm:$0xff]
    %v2014 = vld [vmem:[#allocation10 + $0x288] sm:$0xff]
    %v2015 = vld [vmem:[#allocation10 + $0x290] sm:$0xff]
    %v2016 = vld [vmem:[#allocation10 + $0x298] sm:$0xff]
    %v2017 = vld [vmem:[#allocation10 + $0x2a0] sm:$0xff]
    %v2018 = vld [vmem:[#allocation10 + $0x2a8] sm:$0xff]
    %v2019 = vld [vmem:[#allocation10 + $0x2b0] sm:$0xff]
    %v2020 = vld [vmem:[#allocation10 + $0x2b8] sm:$0xff]
    %v2021 = vld [vmem:[#allocation10 + $0x2c0] sm:$0xff]
    %v2022 = vld [vmem:[#allocation10 + $0x2c8] sm:$0xff]
    %v2023 = vld [vmem:[#allocation10 + $0x2d0] sm:$0xff]
    %v2024 = vld [vmem:[#allocation10 + $0x2d8] sm:$0xff]
    %v2025 = vld [vmem:[#allocation10 + $0x2e0] sm:$0xff]
    %v2026 = vld [vmem:[#allocation10 + $0x2e8] sm:$0xff]
    %v2027 = vld [vmem:[#allocation10 + $0x2f0] sm:$0xff]
    %v2028 = vld [vmem:[#allocation10 + $0x2f8] sm:$0xff]
    %v2029 = vld [vmem:[#allocation10 + $0x300] sm:$0xff]
    %v2030 = vld [vmem:[#allocation10 + $0x308] sm:$0xff]
    %v2031 = vld [vmem:[#allocation10 + $0x310] sm:$0xff]
    %v2032 = vld [vmem:[#allocation10 + $0x318] sm:$0xff]
    %v2033 = vld [vmem:[#allocation10 + $0x320] sm:$0xff]
    %v2034 = vld [vmem:[#allocation10 + $0x328] sm:$0xff]
    %v2035 = vld [vmem:[#allocation10 + $0x330] sm:$0xff]
    %v2036 = vld [vmem:[#allocation10 + $0x338] sm:$0xff]
    %v2037 = vld [vmem:[#allocation10 + $0x340] sm:$0xff]
    %v2038 = vld [vmem:[#allocation10 + $0x348] sm:$0xff]
    %v2039 = vld [vmem:[#allocation10 + $0x350] sm:$0xff]
    %v2040 = vld [vmem:[#allocation10 + $0x358] sm:$0xff]
    %v2041 = vld [vmem:[#allocation10 + $0x360] sm:$0xff]
    %v2042 = vld [vmem:[#allocation10 + $0x368] sm:$0xff]
    %v2043 = vld [vmem:[#allocation10 + $0x370] sm:$0xff]
    %v2044 = vld [vmem:[#allocation10 + $0x378] sm:$0xff]
    %v2045 = vld [vmem:[#allocation10 + $0x380] sm:$0xff]
    %v2046 = vld [vmem:[#allocation10 + $0x388] sm:$0xff]
    %v2047 = vld [vmem:[#allocation10 + $0x390] sm:$0xff]
    %v2048 = vld [vmem:[#allocation10 + $0x398] sm:$0xff]
    %v2049 = vld [vmem:[#allocation10 + $0x3a0] sm:$0xff]
    %v2050 = vld [vmem:[#allocation10 + $0x3a8] sm:$0xff]
    %v2051 = vld [vmem:[#allocation10 + $0x3b0] sm:$0xff]
    %v2052 = vld [vmem:[#allocation10 + $0x3b8] sm:$0xff]
    %v2053 = vld [vmem:[#allocation10 + $0x3c0] sm:$0xff]
    %v2054 = vld [vmem:[#allocation10 + $0x3c8] sm:$0xff]
    %v2055 = vld [vmem:[#allocation10 + $0x3d0] sm:$0xff]
    %v2056 = vld [vmem:[#allocation10 + $0x3d8] sm:$0xff]
    %v2057 = vld [vmem:[#allocation10 + $0x3e0] sm:$0xff]
    %v2058 = vld [vmem:[#allocation10 + $0x3e8] sm:$0xff]
    %v2059 = vld [vmem:[#allocation10 + $0x3f0] sm:$0xff]
    %v2060 = vld [vmem:[#allocation10 + $0x3f8] sm:$0xff]
    %v2061 = vld [vmem:[%s10] sm:$0xf]
    %v2063 = vlaneseq
    %v2064 = vshrl.u32 %v2063, 7
    %v2065 = vsub.s32 0, %v2064
    %v2066 = vrot.slane %v2061, %v2065
    %v2067 = vlaneseq
    %v2068 = vshrl.u32 %v2067, 7
    %v2069 = vsub.s32 1, %v2068
    %v2070 = vrot.slane %v2061, %v2069
    %v2071 = vlaneseq
    %v2072 = vshrl.u32 %v2071, 7
    %v2073 = vsub.s32 2, %v2072
    %v2074 = vrot.slane %v2061, %v2073
    %v2075 = vlaneseq
    %v2076 = vshrl.u32 %v2075, 7
    %v2077 = vsub.s32 3, %v2076
    %v2078 = vrot.slane %v2061, %v2077
    %2083 = vmatprep.subr.mxu0 %v1934
    %2084 = vmatpush1.msra.mxu0 %v1933
    %2085 = vmatprep.subr.mxu0 %v1938
    %2086 = vmatpush1.msra.mxu0 %v1937
    %2087 = vmatprep.subr.mxu0 %v1942
    %2088 = vmatpush1.msra.mxu0 %v1941
    %2089 = vmatprep.subr.mxu0 %v1946
    %2090 = vmatpush1.msra.mxu0 %v1945
    %2091 = vmatprep.subr.mxu0 %v1950
    %2092 = vmatpush1.msra.mxu0 %v1949
    %2093 = vmatprep.subr.mxu0 %v1954
    %2094 = vmatpush1.msra.mxu0 %v1953
    %2095 = vmatprep.subr.mxu0 %v1958
    %2096 = vmatpush1.msra.mxu0 %v1957
    %2097 = vmatprep.subr.mxu0 %v1962
    %2098 = vmatpush1.msra.mxu0 %v1961
    %2099 = vmatprep.subr.mxu0 %v1966
    %2100 = vmatpush1.msra.mxu0 %v1965
    %2101 = vmatprep.subr.mxu0 %v1970
    %2102 = vmatpush1.msra.mxu0 %v1969
    %2103 = vmatprep.subr.mxu0 %v1974
    %2104 = vmatpush1.msra.mxu0 %v1973
    %2105 = vmatprep.subr.mxu0 %v1978
    %2106 = vmatpush1.msra.mxu0 %v1977
    %2107 = vmatprep.subr.mxu0 %v1982
    %2108 = vmatpush1.msra.mxu0 %v1981
    %2109 = vmatprep.subr.mxu0 %v1986
    %2110 = vmatpush1.msra.mxu0 %v1985
    %2111 = vmatprep.subr.mxu0 %v1990
    %2112 = vmatpush1.msra.mxu0 %v1989
    %2113 = vmatprep.subr.mxu0 %v1994
    %2114 = vmatpush1.msra.mxu0 %v1993
    %2115 = vmatprep.subr.mxu0 %v1998
    %2116 = vmatpush1.msra.mxu0 %v1997
    %2117 = vmatprep.subr.mxu0 %v2002
    %2118 = vmatpush1.msra.mxu0 %v2001
    %2119 = vmatprep.subr.mxu0 %v2006
    %2120 = vmatpush1.msra.mxu0 %v2005
    %2121 = vmatprep.subr.mxu0 %v2010
    %2122 = vmatpush1.msra.mxu0 %v2009
    %2123 = vmatprep.subr.mxu0 %v2014
    %2124 = vmatpush1.msra.mxu0 %v2013
    %2125 = vmatprep.subr.mxu0 %v2018
    %2126 = vmatpush1.msra.mxu0 %v2017
    %2127 = vmatprep.subr.mxu0 %v2022
    %2128 = vmatpush1.msra.mxu0 %v2021
    %2129 = vmatprep.subr.mxu0 %v2026
    %2130 = vmatpush1.msra.mxu0 %v2025
    %2131 = vmatprep.subr.mxu0 %v2030
    %2132 = vmatpush1.msra.mxu0 %v2029
    %2133 = vmatprep.subr.mxu0 %v2034
    %2134 = vmatpush1.msra.mxu0 %v2033
    %2135 = vmatprep.subr.mxu0 %v2038
    %2136 = vmatpush1.msra.mxu0 %v2037
    %2137 = vmatprep.subr.mxu0 %v2042
    %2138 = vmatpush1.msra.mxu0 %v2041
    %2139 = vmatprep.subr.mxu0 %v2046
    %2140 = vmatpush1.msra.mxu0 %v2045
    %2141 = vmatprep.subr.mxu0 %v2050
    %2142 = vmatpush1.msra.mxu0 %v2049
    %2143 = vmatprep.subr.mxu0 %v2054
    %2144 = vmatpush1.msra.mxu0 %v2053
    %2145 = vmatprep.subr.mxu0 %v2058
    %2146 = vmatpush1.msra.mxu0 %v2057
    %2147 = vmatprep.mubr.f32.mxu0 %v1932
    %2148 = vmatmul.mubr.f32.gmra.mrb[0].mxu0 %v1929
    %v2149 = vpop.f32.mrb[0].mxu0
    %v2150 = vadd.f32 %v2066, %v2149
    %v2151 = vpop.f32.mrb[0].mxu0
    %v2152 = vadd.f32 %v2070, %v2151
    %2153 = vdwg.mxu0
    %2154 = vmatprep.subr.mxu0 %v1936
    %2155 = vmatpush1.msra.mxu0 %v1935
    %2156 = vmatprep.subr.mxu0 %v1940
    %2157 = vmatpush1.msra.mxu0 %v1939
    %2158 = vmatprep.subr.mxu0 %v1944
    %2159 = vmatpush1.msra.mxu0 %v1943
    %2160 = vmatprep.subr.mxu0 %v1948
    %2161 = vmatpush1.msra.mxu0 %v1947
    %2162 = vmatprep.subr.mxu0 %v1952
    %2163 = vmatpush1.msra.mxu0 %v1951
    %2164 = vmatprep.subr.mxu0 %v1956
    %2165 = vmatpush1.msra.mxu0 %v1955
    %2166 = vmatprep.subr.mxu0 %v1960
    %2167 = vmatpush1.msra.mxu0 %v1959
    %2168 = vmatprep.subr.mxu0 %v1964
    %2169 = vmatpush1.msra.mxu0 %v1963
    %2170 = vmatprep.subr.mxu0 %v1968
    %2171 = vmatpush1.msra.mxu0 %v1967
    %2172 = vmatprep.subr.mxu0 %v1972
    %2173 = vmatpush1.msra.mxu0 %v1971
    %2174 = vmatprep.subr.mxu0 %v1976
    %2175 = vmatpush1.msra.mxu0 %v1975
    %2176 = vmatprep.subr.mxu0 %v1980
    %2177 = vmatpush1.msra.mxu0 %v1979
    %2178 = vmatprep.subr.mxu0 %v1984
    %2179 = vmatpush1.msra.mxu0 %v1983
    %2180 = vmatprep.subr.mxu0 %v1988
    %2181 = vmatpush1.msra.mxu0 %v1987
    %2182 = vmatprep.subr.mxu0 %v1992
    %2183 = vmatpush1.msra.mxu0 %v1991
    %2184 = vmatprep.subr.mxu0 %v1996
    %2185 = vmatpush1.msra.mxu0 %v1995
    %2186 = vmatprep.subr.mxu0 %v2000
    %2187 = vmatpush1.msra.mxu0 %v1999
    %2188 = vmatprep.subr.mxu0 %v2004
    %2189 = vmatpush1.msra.mxu0 %v2003
    %2190 = vmatprep.subr.mxu0 %v2008
    %2191 = vmatpush1.msra.mxu0 %v2007
    %2192 = vmatprep.subr.mxu0 %v2012
    %2193 = vmatpush1.msra.mxu0 %v2011
    %2194 = vmatprep.subr.mxu0 %v2016
    %2195 = vmatpush1.msra.mxu0 %v2015
    %2196 = vmatprep.subr.mxu0 %v2020
    %2197 = vmatpush1.msra.mxu0 %v2019
    %2198 = vmatprep.subr.mxu0 %v2024
    %2199 = vmatpush1.msra.mxu0 %v2023
    %2200 = vmatprep.subr.mxu0 %v2028
    %2201 = vmatpush1.msra.mxu0 %v2027
    %2202 = vmatprep.subr.mxu0 %v2032
    %2203 = vmatpush1.msra.mxu0 %v2031
    %2204 = vmatprep.subr.mxu0 %v2036
    %2205 = vmatpush1.msra.mxu0 %v2035
    %2206 = vmatprep.subr.mxu0 %v2040
    %2207 = vmatpush1.msra.mxu0 %v2039
    %2208 = vmatprep.subr.mxu0 %v2044
    %2209 = vmatpush1.msra.mxu0 %v2043
    %2210 = vmatprep.subr.mxu0 %v2048
    %2211 = vmatpush1.msra.mxu0 %v2047
    %2212 = vmatprep.subr.mxu0 %v2052
    %2213 = vmatpush1.msra.mxu0 %v2051
    %2214 = vmatprep.subr.mxu0 %v2056
    %2215 = vmatpush1.msra.mxu0 %v2055
    %2216 = vmatprep.subr.mxu0 %v2060
    %2217 = vmatpush1.msra.mxu0 %v2059
    %2218 = vmatprep.mubr.f32.mxu0 %v1932
    %2219 = vmatmul.mubr.f32.gmra.mrb[0].mxu0 %v1929
    %v2220 = vpop.f32.mrb[0].mxu0
    %v2221 = vadd.f32 %v2074, %v2220
    %v2222 = vpop.f32.mrb[0].mxu0
    %v2223 = vadd.f32 %v2078, %v2222
    %2224 = vdwg.mxu0
    %v2225 = vmax.f32 %v2150, 0.0
    %v2226 = vmax.f32 %v2152, 0.0
    %v2227 = vmax.f32 %v2221, 0.0
    %v2228 = vmax.f32 %v2223, 0.0
    %v2229 = vld [vmem:[#allocation11] sm:$0xff]
    %v2230 = vld [vmem:[#allocation11 + $0x8] sm:$0xff]
    %v2231 = vld [vmem:[#allocation11 + $0x10] sm:$0xff]
    %v2232 = vld [vmem:[#allocation11 + $0x18] sm:$0xff]
    %v2233 = vld [vmem:[#allocation11 + $0x20] sm:$0xff]
    %v2234 = vld [vmem:[#allocation11 + $0x28] sm:$0xff]
    %v2235 = vld [vmem:[#allocation11 + $0x30] sm:$0xff]
    %v2236 = vld [vmem:[#allocation11 + $0x38] sm:$0xff]
    %v2237 = vld [vmem:[#allocation11 + $0x40] sm:$0xff]
    %v2238 = vld [vmem:[#allocation11 + $0x48] sm:$0xff]
    %v2239 = vld [vmem:[#allocation11 + $0x50] sm:$0xff]
    %v2240 = vld [vmem:[#allocation11 + $0x58] sm:$0xff]
    %v2241 = vld [vmem:[#allocation11 + $0x60] sm:$0xff]
    %v2242 = vld [vmem:[#allocation11 + $0x68] sm:$0xff]
    %v2243 = vld [vmem:[#allocation11 + $0x70] sm:$0xff]
    %v2244 = vld [vmem:[#allocation11 + $0x78] sm:$0xff]
    %v2245 = vld [vmem:[#allocation11 + $0x80] sm:$0xff]
    %v2246 = vld [vmem:[#allocation11 + $0x88] sm:$0xff]
    %v2247 = vld [vmem:[#allocation11 + $0x90] sm:$0xff]
    %v2248 = vld [vmem:[#allocation11 + $0x98] sm:$0xff]
    %v2249 = vld [vmem:[#allocation11 + $0xa0] sm:$0xff]
    %v2250 = vld [vmem:[#allocation11 + $0xa8] sm:$0xff]
    %v2251 = vld [vmem:[#allocation11 + $0xb0] sm:$0xff]
    %v2252 = vld [vmem:[#allocation11 + $0xb8] sm:$0xff]
    %v2253 = vld [vmem:[#allocation11 + $0xc0] sm:$0xff]
    %v2254 = vld [vmem:[#allocation11 + $0xc8] sm:$0xff]
    %v2255 = vld [vmem:[#allocation11 + $0xd0] sm:$0xff]
    %v2256 = vld [vmem:[#allocation11 + $0xd8] sm:$0xff]
    %v2257 = vld [vmem:[#allocation11 + $0xe0] sm:$0xff]
    %v2258 = vld [vmem:[#allocation11 + $0xe8] sm:$0xff]
    %v2259 = vld [vmem:[#allocation11 + $0xf0] sm:$0xff]
    %v2260 = vld [vmem:[#allocation11 + $0xf8] sm:$0xff]
    %v2261 = vld [vmem:[#allocation11 + $0x100] sm:$0xff]
    %v2262 = vld [vmem:[#allocation11 + $0x108] sm:$0xff]
    %v2263 = vld [vmem:[#allocation11 + $0x110] sm:$0xff]
    %v2264 = vld [vmem:[#allocation11 + $0x118] sm:$0xff]
    %v2265 = vld [vmem:[#allocation11 + $0x120] sm:$0xff]
    %v2266 = vld [vmem:[#allocation11 + $0x128] sm:$0xff]
    %v2267 = vld [vmem:[#allocation11 + $0x130] sm:$0xff]
    %v2268 = vld [vmem:[#allocation11 + $0x138] sm:$0xff]
    %v2269 = vld [vmem:[#allocation11 + $0x140] sm:$0xff]
    %v2270 = vld [vmem:[#allocation11 + $0x148] sm:$0xff]
    %v2271 = vld [vmem:[#allocation11 + $0x150] sm:$0xff]
    %v2272 = vld [vmem:[#allocation11 + $0x158] sm:$0xff]
    %v2273 = vld [vmem:[#allocation11 + $0x160] sm:$0xff]
    %v2274 = vld [vmem:[#allocation11 + $0x168] sm:$0xff]
    %v2275 = vld [vmem:[#allocation11 + $0x170] sm:$0xff]
    %v2276 = vld [vmem:[#allocation11 + $0x178] sm:$0xff]
    %v2277 = vld [vmem:[#allocation11 + $0x180] sm:$0xff]
    %v2278 = vld [vmem:[#allocation11 + $0x188] sm:$0xff]
    %v2279 = vld [vmem:[#allocation11 + $0x190] sm:$0xff]
    %v2280 = vld [vmem:[#allocation11 + $0x198] sm:$0xff]
    %v2281 = vld [vmem:[#allocation11 + $0x1a0] sm:$0xff]
    %v2282 = vld [vmem:[#allocation11 + $0x1a8] sm:$0xff]
    %v2283 = vld [vmem:[#allocation11 + $0x1b0] sm:$0xff]
    %v2284 = vld [vmem:[#allocation11 + $0x1b8] sm:$0xff]
    %v2285 = vld [vmem:[#allocation11 + $0x1c0] sm:$0xff]
    %v2286 = vld [vmem:[#allocation11 + $0x1c8] sm:$0xff]
    %v2287 = vld [vmem:[#allocation11 + $0x1d0] sm:$0xff]
    %v2288 = vld [vmem:[#allocation11 + $0x1d8] sm:$0xff]
    %v2289 = vld [vmem:[#allocation11 + $0x1e0] sm:$0xff]
    %v2290 = vld [vmem:[#allocation11 + $0x1e8] sm:$0xff]
    %v2291 = vld [vmem:[#allocation11 + $0x1f0] sm:$0xff]
    %v2292 = vld [vmem:[#allocation11 + $0x1f8] sm:$0xff]
    %v2293 = vld [vmem:[#allocation11 + $0x200] sm:$0xff]
    %v2294 = vld [vmem:[#allocation11 + $0x208] sm:$0xff]
    %v2295 = vld [vmem:[#allocation11 + $0x210] sm:$0xff]
    %v2296 = vld [vmem:[#allocation11 + $0x218] sm:$0xff]
    %v2297 = vld [vmem:[#allocation11 + $0x220] sm:$0xff]
    %v2298 = vld [vmem:[#allocation11 + $0x228] sm:$0xff]
    %v2299 = vld [vmem:[#allocation11 + $0x230] sm:$0xff]
    %v2300 = vld [vmem:[#allocation11 + $0x238] sm:$0xff]
    %v2301 = vld [vmem:[#allocation11 + $0x240] sm:$0xff]
    %v2302 = vld [vmem:[#allocation11 + $0x248] sm:$0xff]
    %v2303 = vld [vmem:[#allocation11 + $0x250] sm:$0xff]
    %v2304 = vld [vmem:[#allocation11 + $0x258] sm:$0xff]
    %v2305 = vld [vmem:[#allocation11 + $0x260] sm:$0xff]
    %v2306 = vld [vmem:[#allocation11 + $0x268] sm:$0xff]
    %v2307 = vld [vmem:[#allocation11 + $0x270] sm:$0xff]
    %v2308 = vld [vmem:[#allocation11 + $0x278] sm:$0xff]
    %v2309 = vld [vmem:[#allocation11 + $0x280] sm:$0xff]
    %v2310 = vld [vmem:[#allocation11 + $0x288] sm:$0xff]
    %v2311 = vld [vmem:[#allocation11 + $0x290] sm:$0xff]
    %v2312 = vld [vmem:[#allocation11 + $0x298] sm:$0xff]
    %v2313 = vld [vmem:[#allocation11 + $0x2a0] sm:$0xff]
    %v2314 = vld [vmem:[#allocation11 + $0x2a8] sm:$0xff]
    %v2315 = vld [vmem:[#allocation11 + $0x2b0] sm:$0xff]
    %v2316 = vld [vmem:[#allocation11 + $0x2b8] sm:$0xff]
    %v2317 = vld [vmem:[#allocation11 + $0x2c0] sm:$0xff]
    %v2318 = vld [vmem:[#allocation11 + $0x2c8] sm:$0xff]
    %v2319 = vld [vmem:[#allocation11 + $0x2d0] sm:$0xff]
    %v2320 = vld [vmem:[#allocation11 + $0x2d8] sm:$0xff]
    %v2321 = vld [vmem:[#allocation11 + $0x2e0] sm:$0xff]
    %v2322 = vld [vmem:[#allocation11 + $0x2e8] sm:$0xff]
    %v2323 = vld [vmem:[#allocation11 + $0x2f0] sm:$0xff]
    %v2324 = vld [vmem:[#allocation11 + $0x2f8] sm:$0xff]
    %v2325 = vld [vmem:[#allocation11 + $0x300] sm:$0xff]
    %v2326 = vld [vmem:[#allocation11 + $0x308] sm:$0xff]
    %v2327 = vld [vmem:[#allocation11 + $0x310] sm:$0xff]
    %v2328 = vld [vmem:[#allocation11 + $0x318] sm:$0xff]
    %v2329 = vld [vmem:[#allocation11 + $0x320] sm:$0xff]
    %v2330 = vld [vmem:[#allocation11 + $0x328] sm:$0xff]
    %v2331 = vld [vmem:[#allocation11 + $0x330] sm:$0xff]
    %v2332 = vld [vmem:[#allocation11 + $0x338] sm:$0xff]
    %v2333 = vld [vmem:[#allocation11 + $0x340] sm:$0xff]
    %v2334 = vld [vmem:[#allocation11 + $0x348] sm:$0xff]
    %v2335 = vld [vmem:[#allocation11 + $0x350] sm:$0xff]
    %v2336 = vld [vmem:[#allocation11 + $0x358] sm:$0xff]
    %v2337 = vld [vmem:[#allocation11 + $0x360] sm:$0xff]
    %v2338 = vld [vmem:[#allocation11 + $0x368] sm:$0xff]
    %v2339 = vld [vmem:[#allocation11 + $0x370] sm:$0xff]
    %v2340 = vld [vmem:[#allocation11 + $0x378] sm:$0xff]
    %v2341 = vld [vmem:[#allocation11 + $0x380] sm:$0xff]
    %v2342 = vld [vmem:[#allocation11 + $0x388] sm:$0xff]
    %v2343 = vld [vmem:[#allocation11 + $0x390] sm:$0xff]
    %v2344 = vld [vmem:[#allocation11 + $0x398] sm:$0xff]
    %v2345 = vld [vmem:[#allocation11 + $0x3a0] sm:$0xff]
    %v2346 = vld [vmem:[#allocation11 + $0x3a8] sm:$0xff]
    %v2347 = vld [vmem:[#allocation11 + $0x3b0] sm:$0xff]
    %v2348 = vld [vmem:[#allocation11 + $0x3b8] sm:$0xff]
    %v2349 = vld [vmem:[#allocation11 + $0x3c0] sm:$0xff]
    %v2350 = vld [vmem:[#allocation11 + $0x3c8] sm:$0xff]
    %v2351 = vld [vmem:[#allocation11 + $0x3d0] sm:$0xff]
    %v2352 = vld [vmem:[#allocation11 + $0x3d8] sm:$0xff]
    %v2353 = vld [vmem:[#allocation11 + $0x3e0] sm:$0xff]
    %v2354 = vld [vmem:[#allocation11 + $0x3e8] sm:$0xff]
    %v2355 = vld [vmem:[#allocation11 + $0x3f0] sm:$0xff]
    %v2356 = vld [vmem:[#allocation11 + $0x3f8] sm:$0xff]
    %v2357 = vld [vmem:[%s12] sm:$0x3]
    %v2359 = vlaneseq
    %v2360 = vshrl.u32 %v2359, 7
    %v2361 = vsub.s32 0, %v2360
    %v2362 = vrot.slane %v2357, %v2361
    %v2363 = vlaneseq
    %v2364 = vshrl.u32 %v2363, 7
    %v2365 = vsub.s32 1, %v2364
    %v2366 = vrot.slane %v2357, %v2365
    %2369 = vmatprep.subr.mxu0 %v2230
    %2370 = vmatpush1.msra.mxu0 %v2229
    %2371 = vmatprep.subr.mxu0 %v2232
    %2372 = vmatpush1.msra.mxu0 %v2231
    %2373 = vmatprep.subr.mxu0 %v2234
    %2374 = vmatpush1.msra.mxu0 %v2233
    %2375 = vmatprep.subr.mxu0 %v2236
    %2376 = vmatpush1.msra.mxu0 %v2235
    %2377 = vmatprep.subr.mxu0 %v2238
    %2378 = vmatpush1.msra.mxu0 %v2237
    %2379 = vmatprep.subr.mxu0 %v2240
    %2380 = vmatpush1.msra.mxu0 %v2239
    %2381 = vmatprep.subr.mxu0 %v2242
    %2382 = vmatpush1.msra.mxu0 %v2241
    %2383 = vmatprep.subr.mxu0 %v2244
    %2384 = vmatpush1.msra.mxu0 %v2243
    %2385 = vmatprep.subr.mxu0 %v2246
    %2386 = vmatpush1.msra.mxu0 %v2245
    %2387 = vmatprep.subr.mxu0 %v2248
    %2388 = vmatpush1.msra.mxu0 %v2247
    %2389 = vmatprep.subr.mxu0 %v2250
    %2390 = vmatpush1.msra.mxu0 %v2249
    %2391 = vmatprep.subr.mxu0 %v2252
    %2392 = vmatpush1.msra.mxu0 %v2251
    %2393 = vmatprep.subr.mxu0 %v2254
    %2394 = vmatpush1.msra.mxu0 %v2253
    %2395 = vmatprep.subr.mxu0 %v2256
    %2396 = vmatpush1.msra.mxu0 %v2255
    %2397 = vmatprep.subr.mxu0 %v2258
    %2398 = vmatpush1.msra.mxu0 %v2257
    %2399 = vmatprep.subr.mxu0 %v2260
    %2400 = vmatpush1.msra.mxu0 %v2259
    %2401 = vmatprep.subr.mxu0 %v2262
    %2402 = vmatpush1.msra.mxu0 %v2261
    %2403 = vmatprep.subr.mxu0 %v2264
    %2404 = vmatpush1.msra.mxu0 %v2263
    %2405 = vmatprep.subr.mxu0 %v2266
    %2406 = vmatpush1.msra.mxu0 %v2265
    %2407 = vmatprep.subr.mxu0 %v2268
    %2408 = vmatpush1.msra.mxu0 %v2267
    %2409 = vmatprep.subr.mxu0 %v2270
    %2410 = vmatpush1.msra.mxu0 %v2269
    %2411 = vmatprep.subr.mxu0 %v2272
    %2412 = vmatpush1.msra.mxu0 %v2271
    %2413 = vmatprep.subr.mxu0 %v2274
    %2414 = vmatpush1.msra.mxu0 %v2273
    %2415 = vmatprep.subr.mxu0 %v2276
    %2416 = vmatpush1.msra.mxu0 %v2275
    %2417 = vmatprep.subr.mxu0 %v2278
    %2418 = vmatpush1.msra.mxu0 %v2277
    %2419 = vmatprep.subr.mxu0 %v2280
    %2420 = vmatpush1.msra.mxu0 %v2279
    %2421 = vmatprep.subr.mxu0 %v2282
    %2422 = vmatpush1.msra.mxu0 %v2281
    %2423 = vmatprep.subr.mxu0 %v2284
    %2424 = vmatpush1.msra.mxu0 %v2283
    %2425 = vmatprep.subr.mxu0 %v2286
    %2426 = vmatpush1.msra.mxu0 %v2285
    %2427 = vmatprep.subr.mxu0 %v2288
    %2428 = vmatpush1.msra.mxu0 %v2287
    %2429 = vmatprep.subr.mxu0 %v2290
    %2430 = vmatpush1.msra.mxu0 %v2289
    %2431 = vmatprep.subr.mxu0 %v2292
    %2432 = vmatpush1.msra.mxu0 %v2291
    %2433 = vmatprep.mubr.f32.mxu0 %v2226
    %2434 = vmatmul.mubr.f32.gmra.mrb[0].mxu0 %v2225
    %v2435 = vpop.f32.mrb[0].mxu0
    %v2436 = vadd.f32 %v2362, %v2435
    %v2437 = vpop.f32.mrb[0].mxu0
    %v2438 = vadd.f32 %v2366, %v2437
    %2439 = vdwg.mxu0
    %2440 = vmatprep.subr.mxu0 %v2294
    %2441 = vmatpush1.msra.mxu0 %v2293
    %2442 = vmatprep.subr.mxu0 %v2296
    %2443 = vmatpush1.msra.mxu0 %v2295
    %2444 = vmatprep.subr.mxu0 %v2298
    %2445 = vmatpush1.msra.mxu0 %v2297
    %2446 = vmatprep.subr.mxu0 %v2300
    %2447 = vmatpush1.msra.mxu0 %v2299
    %2448 = vmatprep.subr.mxu0 %v2302
    %2449 = vmatpush1.msra.mxu0 %v2301
    %2450 = vmatprep.subr.mxu0 %v2304
    %2451 = vmatpush1.msra.mxu0 %v2303
    %2452 = vmatprep.subr.mxu0 %v2306
    %2453 = vmatpush1.msra.mxu0 %v2305
    %2454 = vmatprep.subr.mxu0 %v2308
    %2455 = vmatpush1.msra.mxu0 %v2307
    %2456 = vmatprep.subr.mxu0 %v2310
    %2457 = vmatpush1.msra.mxu0 %v2309
    %2458 = vmatprep.subr.mxu0 %v2312
    %2459 = vmatpush1.msra.mxu0 %v2311
    %2460 = vmatprep.subr.mxu0 %v2314
    %2461 = vmatpush1.msra.mxu0 %v2313
    %2462 = vmatprep.subr.mxu0 %v2316
    %2463 = vmatpush1.msra.mxu0 %v2315
    %2464 = vmatprep.subr.mxu0 %v2318
    %2465 = vmatpush1.msra.mxu0 %v2317
    %2466 = vmatprep.subr.mxu0 %v2320
    %2467 = vmatpush1.msra.mxu0 %v2319
    %2468 = vmatprep.subr.mxu0 %v2322
    %2469 = vmatpush1.msra.mxu0 %v2321
    %2470 = vmatprep.subr.mxu0 %v2324
    %2471 = vmatpush1.msra.mxu0 %v2323
    %2472 = vmatprep.subr.mxu0 %v2326
    %2473 = vmatpush1.msra.mxu0 %v2325
    %2474 = vmatprep.subr.mxu0 %v2328
    %2475 = vmatpush1.msra.mxu0 %v2327
    %2476 = vmatprep.subr.mxu0 %v2330
    %2477 = vmatpush1.msra.mxu0 %v2329
    %2478 = vmatprep.subr.mxu0 %v2332
    %2479 = vmatpush1.msra.mxu0 %v2331
    %2480 = vmatprep.subr.mxu0 %v2334
    %2481 = vmatpush1.msra.mxu0 %v2333
    %2482 = vmatprep.subr.mxu0 %v2336
    %2483 = vmatpush1.msra.mxu0 %v2335
    %2484 = vmatprep.subr.mxu0 %v2338
    %2485 = vmatpush1.msra.mxu0 %v2337
    %2486 = vmatprep.subr.mxu0 %v2340
    %2487 = vmatpush1.msra.mxu0 %v2339
    %2488 = vmatprep.subr.mxu0 %v2342
    %2489 = vmatpush1.msra.mxu0 %v2341
    %2490 = vmatprep.subr.mxu0 %v2344
    %2491 = vmatpush1.msra.mxu0 %v2343
    %2492 = vmatprep.subr.mxu0 %v2346
    %2493 = vmatpush1.msra.mxu0 %v2345
    %2494 = vmatprep.subr.mxu0 %v2348
    %2495 = vmatpush1.msra.mxu0 %v2347
    %2496 = vmatprep.subr.mxu0 %v2350
    %2497 = vmatpush1.msra.mxu0 %v2349
    %2498 = vmatprep.subr.mxu0 %v2352
    %2499 = vmatpush1.msra.mxu0 %v2351
    %2500 = vmatprep.subr.mxu0 %v2354
    %2501 = vmatpush1.msra.mxu0 %v2353
    %2502 = vmatprep.subr.mxu0 %v2356
    %2503 = vmatpush1.msra.mxu0 %v2355
    %2504 = vmatprep.mubr.f32.mxu0 %v2228
    %2505 = vmatmul.mubr.f32.gmra.mrb[0].mxu0 %v2227
    %v2506 = vpop.f32.mrb[0].mxu0
    %v2507 = vadd.f32 %v2436, %v2506
    %v2508 = vpop.f32.mrb[0].mxu0
    %v2509 = vadd.f32 %v2438, %v2508
    %2510 = vdwg.mxu0
    %v2511 = vcombine.high %v1791, 0.0
    %v2513 = vunpack.c.l.s4 1983009808
    %v2514 = vunpack.c.0.s8 %v2513
    %v2515 = vlaneseq
    %v2516 = vshrl.u32 %v2515, 7
    %v2517 = vsub.s32 %v2514, %v2516
    %v2518 = vrot.slane %v1791, %v2517
    %v2520 = vunpack.c.l.s4 1983009808
    %v2521 = vunpack.c.0.s8 %v2520
    %v2522 = vlaneseq
    %v2523 = vshrl.u32 %v2522, 7
    %v2524 = vsub.s32 %v2521, %v2523
    %v2525 = vrot.slane %v2511, %v2524
    %v2526 = vcombine.high %v1792, 0.0
    %v2528 = vunpack.c.l.s4 1983009808
    %v2529 = vunpack.c.0.s8 %v2528
    %v2530 = vlaneseq
    %v2531 = vshrl.u32 %v2530, 7
    %v2532 = vsub.s32 %v2529, %v2531
    %v2533 = vrot.slane %v1792, %v2532
    %v2535 = vunpack.c.l.s4 1983009808
    %v2536 = vunpack.c.0.s8 %v2535
    %v2537 = vlaneseq
    %v2538 = vshrl.u32 %v2537, 7
    %v2539 = vsub.s32 %v2536, %v2538
    %v2540 = vrot.slane %v2526, %v2539
    %v2541 = vcombine.low %v2518, %v2533
    %v2542 = vcombine.high %v2518, %v2533
    %v2544 = vunpack.c.l.s4 1934713408
    %v2545 = vunpack.c.0.s8 %v2544
    %v2546 = vlaneseq
    %v2547 = vshrl.u32 %v2546, 7
    %v2548 = vsub.s32 %v2545, %v2547
    %v2549 = vrot.slane %v2541, %v2548
    %v2551 = vunpack.c.l.s4 1934713408
    %v2552 = vunpack.c.0.s8 %v2551
    %v2553 = vlaneseq
    %v2554 = vshrl.u32 %v2553, 7
    %v2555 = vsub.s32 %v2552, %v2554
    %v2556 = vrot.slane %v2542, %v2555
    %v2557 = vcombine.low %v2525, %v2540
    %v2558 = vcombine.high %v2525, %v2540
    %v2560 = vunpack.c.l.s4 1934713408
    %v2561 = vunpack.c.0.s8 %v2560
    %v2562 = vlaneseq
    %v2563 = vshrl.u32 %v2562, 7
    %v2564 = vsub.s32 %v2561, %v2563
    %v2565 = vrot.slane %v2557, %v2564
    %v2567 = vunpack.c.l.s4 1934713408
    %v2568 = vunpack.c.0.s8 %v2567
    %v2569 = vlaneseq
    %v2570 = vshrl.u32 %v2569, 7
    %v2571 = vsub.s32 %v2568, %v2570
    %v2572 = vrot.slane %v2558, %v2571
    %v2573 = vcombine.high %v2549, 0.0
    %v2574 = vcombine.high %v2556, 0.0
    %v2575 = vcombine.high %v2565, 0.0
    %v2576 = vcombine.high %v2572, 0.0
    %2578 = vrot.lane.b32.xlu0 %v2573, 32
    %v2579 = vpop.permute.xlu0 %2578
    %2582 = vrot.lane.b32.xlu0 %v2556, 64
    %v2583 = vpop.permute.xlu0 %2582
    %2586 = vrot.lane.b32.xlu0 %v2574, 96
    %v2587 = vpop.permute.xlu0 %2586
    %2590 = vrot.lane.b32.xlu0 %v2575, 32
    %v2591 = vpop.permute.xlu0 %2590
    %2594 = vrot.lane.b32.xlu0 %v2572, 64
    %v2595 = vpop.permute.xlu0 %2594
    %2598 = vrot.lane.b32.xlu0 %v2576, 96
    %v2599 = vpop.permute.xlu0 %2598
    %v2601 = vsel %vm141, %v2549, %v2579
    %v2602 = vsel %vm1926, %v2601, %v2583
    %v2603 = vsel %vm1928, %v2602, %v2587
    %v2604 = vsel %vm141, %v2565, %v2591
    %v2605 = vsel %vm1926, %v2604, %v2595
    %v2606 = vsel %vm1928, %v2605, %v2599
    %v2607 = vadd.f32 %v2507, %v2603
    %v2608 = vadd.f32 %v2509, %v2606
    %v2611 = vcombine.low %v2607, %v2608
    %v2613 = vunpack.c.l.s4 1983009808
    %v2614 = vunpack.c.0.s8 %v2613
    %v2615 = vlaneseq
    %v2616 = vshrl.u32 %v2615, 7
    %v2617 = vsub.s32 %v2614, %v2616
    %v2618 = vrot.slane %v2611, %v2617
    %2620 = vst [vmem:[#allocation13] sm:$0xf] %v2618
    // Predicated region
    $region78: #{tpu_custom_call.1} parent=1 // pred_check
      _
    $region79: #{tpu_custom_call.1} parent=1 // pred_check_branch
      %2622 = sbr.rel (0) target = $region81
    $region80: #{tpu_custom_call.1} parent=1 // pred_region
      %s2624 = ssub.s32 64, 64
      %2625 = vsyncadd [#allocation4], %s2624
      %s2627 = sshll.u32 [#allocation13], 4
      %s2628 = int_to_ptr.vmem [resolvable:$true] %s2627
      %2630 = dma.vmem_to_hbm [thread:$0]  %s2628, 64, %s13, [#allocation4]
    $region81: #{tpu_custom_call.1} parent=1 // pred_fallthru
      _
    // Predicated region
    $region82: #{tpu_custom_call.1} parent=1 // pred_check
      _
    $region83: #{tpu_custom_call.1} parent=1 // pred_check_branch
      %2632 = sbr.rel (0) target = $region85
    $region84: #{tpu_custom_call.1} parent=1 // pred_region
      %2633 = dma.done [#allocation4], 64
    $region85: #{tpu_custom_call.1} parent=1 // pred_fallthru
      _
    %2634 = vsyncpa [#allocation3], 1
    %2635 = vsyncpa [#allocation6], 1
    %2636 = vsyncpa [#allocation9], 1
    %2637 = vsyncpa [#allocation12], 1
    %2638 = vsyncpa [#allocation4], 1

</llo_original>
